<compile_context>
chip_gen: v5e
topology: v5e:2x2
jax: 0.10.0
libtpu: 0.0.40
codegen_flags: <defaults>
</compile_context>

<pallas_src>
import functools

import jax
import jax.numpy as jnp
from jax import lax
from jax.experimental import pallas as pl
from jax.experimental.pallas import tpu as pltpu


PARAM_ORDER = (
    "ln1_g", "ln1_b",
    "wq", "bq", "wk", "bk", "wv", "bv", "wo", "bo",
    "ln2_g", "ln2_b",
    "w1", "b1", "w2", "b2",
)


def _layernorm_f32(x, g, b, eps=1e-5):
    mu = jnp.mean(x, axis=-1, keepdims=True)
    var = jnp.mean((x - mu) ** 2, axis=-1, keepdims=True)
    return (x - mu) * lax.rsqrt(var + eps) * g + b


def encoder_self_kernel(bt, seq, num_heads, ffn_chunk,
                        x_ref,
                        ln1_g, ln1_b,
                        wq, bq, wk, bk, wv, bv, wo, bo,
                        ln2_g, ln2_b,
                        w1, b1, w2, b2,
                        o_ref):
    rows = x_ref[...]                      # (Bt*S, H) row-packed activations
    n_rows, H = rows.shape
    dk = H // num_heads

    x0 = rows.astype(jnp.float32)          # residual path kept in f32

    # ---------------- self-attention sub-block ----------------
    x1 = _layernorm_f32(x0, ln1_g[0], ln1_b[0])          # f32 LN stats
    x1_bf = x1.astype(jnp.bfloat16)                      # bf16 MXU operand

    # Large-M projections (M = Bt*S). Weights are bf16; accumulate in f32.
    # (1/sqrt(dk) scale is pre-folded into wq / bq by the wrapper.)
    q = jnp.dot(x1_bf, wq[...], preferred_element_type=jnp.float32) + bq[0]
    k = jnp.dot(x1_bf, wk[...], preferred_element_type=jnp.float32) + bk[0]
    v = jnp.dot(x1_bf, wv[...], preferred_element_type=jnp.float32) + bv[0]

    def split_heads(t):                    # (Bt*S, H) -> (Bt*nh, S, dk)
        return (t.reshape(bt, seq, num_heads, dk)
                  .transpose(0, 2, 1, 3)
                  .reshape(bt * num_heads, seq, dk))

    qh = split_heads(q).astype(jnp.bfloat16)
    kh = split_heads(k).astype(jnp.bfloat16)
    vh = split_heads(v).astype(jnp.bfloat16)

    # Batched attention over Bt*nh; softmax (key axis) in f32.
    s = jnp.einsum("bqd,bkd->bqk", qh, kh,
                   preferred_element_type=jnp.float32)       # (Bt*nh, S, S)
    s = s - jnp.max(s, axis=-1, keepdims=True)
    p = jnp.exp(s)
    inv = pl.reciprocal(jnp.sum(p, axis=-1, keepdims=True), approx=True)
    p = p * inv                                              # softmax(dim=3)
    # attention dropout omitted (identity in eval mode)
    attn = jnp.einsum("bqk,bkd->bqd", p.astype(jnp.bfloat16), vh,
                      preferred_element_type=jnp.float32)     # (Bt*nh, S, dk)
    attn = (attn.reshape(bt, num_heads, seq, dk)
                .transpose(0, 2, 1, 3)
                .reshape(n_rows, H))                          # merge heads

    attn_out = jnp.dot(attn.astype(jnp.bfloat16), wo[...],
                       preferred_element_type=jnp.float32) + bo[0]
    resid1 = x0 + attn_out                                    # residual 1 (f32)

    # ---------------- FFN sub-block (chunked along FFN dim) ----------------
    x2 = _layernorm_f32(resid1, ln2_g[0], ln2_b[0])
    x2_bf = x2.astype(jnp.bfloat16)

    ffn = w1.shape[1]
    n_chunks = ffn // ffn_chunk            # static; unrolled at trace time
    ff = jnp.zeros((n_rows, H), jnp.float32)
    for c in range(n_chunks):
        lo = c * ffn_chunk
        hi = lo + ffn_chunk
        hc = jnp.dot(x2_bf, w1[:, lo:hi],
                     preferred_element_type=jnp.float32) + b1[0, lo:hi]
        hc = jnp.maximum(hc, 0.0)                             # ReLU (f32)
        ff = ff + jnp.dot(hc.astype(jnp.bfloat16), w2[lo:hi, :],
                          preferred_element_type=jnp.float32)
    ff = ff + b2[0]

    o_ref[...] = (resid1 + ff).astype(o_ref.dtype)            # residual 2


def _pick_batch_tile(B, S, num_heads, target_rows=512, min_steps=2,
                     score_budget_bytes=8 * 1024 * 1024):
    """Largest divisor bt of B s.t. Bt*S <= target_rows, the grid has at least
    min_steps steps (megacore sharding), and the dense score tensor stays small."""
    best = 1
    for bt in range(1, B + 1):
        if B % bt != 0:
            continue
        if bt * S > target_rows:
            continue
        if B // bt < min(min_steps, B):
            continue
        if bt * num_heads * S * S * 4 > score_budget_bytes:
            continue
        best = bt
    return best


def _vmem_limit_bytes(frac=0.85, fallback=64 * 1024 * 1024):
    """~85% of physical VMEM (v7x: ~55 MiB, v5e/v6e: ~110 MiB)."""
    try:
        cap = pltpu.get_tpu_info().vmem_capacity_bytes
        return int(cap * frac)
    except Exception:
        return fallback


def encoder_self(x, params, num_heads, *, target_rows=512):
    B, S, H = x.shape
    dk = H // num_heads
    ffn = params["w1"].shape[1]
    scale = dk ** (-0.5)

    # Fold the attention scale into the Q projection once, outside the kernel,
    # then cast the six weight matrices to bf16 (MXU-native; halves VMEM/DMA).
    # Biases and LN params stay f32 (added on the f32 accumulation path).
    p = dict(params)
    p["wq"] = params["wq"] * scale
    p["bq"] = params["bq"] * scale
    for name in ("wq", "wk", "wv", "wo", "w1", "w2"):
        p[name] = p[name].astype(jnp.bfloat16)
    ordered = [p[k] for k in PARAM_ORDER]

    bt = _pick_batch_tile(B, S, num_heads, target_rows)
    rt = bt * S
    grid = (B // bt,)

    # FFN chunking bounds the live (rows, chunk) hidden intermediate.
    ffn_chunk = 512 if (ffn > 512 and ffn % 512 == 0) else ffn

    # NOTE: for real configs keep H / FFN multiples of 128 so output stores
    # are lane-dense (no masked vst); the tiny demo uses full-dim blocks.

    # Advisory cost estimate for XLA's scheduler.
    flops = 2 * B * S * (4 * H * H + 2 * H * ffn) + 4 * B * num_heads * S * S * dk
    transcendentals = B * num_heads * S * S
    bytes_accessed = (2 * B * S * H * x.dtype.itemsize
                      + sum(int(a.size) * a.dtype.itemsize for a in ordered))
    cost = pl.CostEstimate(flops=flops,
                           transcendentals=transcendentals,
                           bytes_accessed=bytes_accessed)

    x2d = x.reshape(B * S, H)   # row-packed layout; H stays on the lane axis

    def build(single_buffer_weights):
        def const_spec(a):
            nd = a.ndim
            kwargs = {}
            if single_buffer_weights:
                # Constant index_map => never re-fetched; single-buffer to
                # reclaim the dead second buffer's VMEM.
                kwargs["pipeline_mode"] = pl.Buffered(1)
            return pl.BlockSpec(a.shape, lambda i, _nd=nd: (0,) * _nd, **kwargs)

        in_specs = [pl.BlockSpec((rt, H), lambda i: (i, 0))]
        in_specs += [const_spec(a) for a in ordered]

        return pl.pallas_call(
            functools.partial(encoder_self_kernel, bt, S, num_heads, ffn_chunk),
            out_shape=jax.ShapeDtypeStruct((B * S, H), x.dtype),
            grid=grid,
            in_specs=in_specs,
            out_specs=pl.BlockSpec((rt, H), lambda i: (i, 0)),
            compiler_params=pltpu.CompilerParams(
                dimension_semantics=("parallel",),      # rows are independent
                vmem_limit_bytes=_vmem_limit_bytes()),
            cost_estimate=cost,
        )

    try:
        out2d = build(True)(x2d, *ordered)
    except Exception:
        # TODO(synk): pipeline_mode=pl.Buffered(1) not accepted by this JAX
        # build; fall back to default (double-buffered) weight specs.
        out2d = build(False)(x2d, *ordered)

    return out2d.reshape(B, S, H)


# ---------------- reference (plain JAX, f32) for verification ----------------
def encoder_self_ref(x, params, num_heads):
    B, S, H = x.shape
    dk = H // num_heads
    scale = dk ** (-0.5)

    def ln(z, g, b):
        mu = jnp.mean(z, axis=-1, keepdims=True)
        var = jnp.mean((z - mu) ** 2, axis=-1, keepdims=True)
        return (z - mu) / jnp.sqrt(var + 1e-5) * g[0] + b[0]

    x1 = ln(x, params["ln1_g"], params["ln1_b"])
    q = x1 @ params["wq"] + params["bq"][0]
    k = x1 @ params["wk"] + params["bk"][0]
    v = x1 @ params["wv"] + params["bv"][0]
    q = q.reshape(B, S, num_heads, dk).transpose(0, 2, 1, 3) * scale
    k = k.reshape(B, S, num_heads, dk).transpose(0, 2, 1, 3)
    v = v.reshape(B, S, num_heads, dk).transpose(0, 2, 1, 3)
    s = jnp.einsum("bhqd,bhkd->bhqk", q, k)
    p = jax.nn.softmax(s, axis=-1)
    a = jnp.einsum("bhqk,bhkd->bhqd", p, v)
    a = a.transpose(0, 2, 1, 3).reshape(B, S, H)
    x = x + (a @ params["wo"] + params["bo"][0])

    x2 = ln(x, params["ln2_g"], params["ln2_b"])
    h = jnp.maximum(x2 @ params["w1"] + params["b1"][0], 0.0)
    return x + (h @ params["w2"] + params["b2"][0])


def init_params(key, hidden, ffn):
    ks = jax.random.split(key, 8)

    def w(k, shape, s=0.05):
        return jax.random.normal(k, shape, jnp.float32) * s

    return {
        "ln1_g": jnp.ones((1, hidden), jnp.float32),
        "ln1_b": jnp.zeros((1, hidden), jnp.float32),
        "wq": w(ks[0], (hidden, hidden)),
        "bq": jnp.full((1, hidden), 0.01, jnp.float32),
        "wk": w(ks[1], (hidden, hidden)),
        "bk": jnp.full((1, hidden), -0.01, jnp.float32),
        "wv": w(ks[2], (hidden, hidden)),
        "bv": jnp.full((1, hidden), 0.02, jnp.float32),
        "wo": w(ks[3], (hidden, hidden)),
        "bo": jnp.zeros((1, hidden), jnp.float32),
        "ln2_g": jnp.ones((1, hidden), jnp.float32),
        "ln2_b": jnp.zeros((1, hidden), jnp.float32),
        "w1": w(ks[4], (hidden, ffn)),
        "b1": jnp.full((1, ffn), 0.01, jnp.float32),
        "w2": w(ks[5], (ffn, hidden)),
        "b2": jnp.zeros((1, hidden), jnp.float32),
    }


if __name__ == "__main__":
    B, S, H, NH, FFN = 2, 8, 32, 4, 64

    key = jax.random.PRNGKey(0)
    kx, kp = jax.random.split(key)
    x = jax.random.normal(kx, (B, S, H), jnp.float32)
    params = init_params(kp, H, FFN)

    out = jax.block_until_ready(encoder_self(x, params, NH))
    ref = encoder_self_ref(x, params, NH)

    assert out.shape == (B, S, H)
    err = float(jnp.max(jnp.abs(out - ref)))
    # bf16 MXU operands + approx-reciprocal softmax vs. a pure-f32 reference:
    # expected max-abs error is a few 1e-3; 2e-2 gives comfortable margin.
    assert err < 2e-2, err

    print("KERNEL_OK")
</pallas_src>

<mosaic_0001>
module attributes {stable_mosaic.version = 11 : i64} {
  func.func @encoder_self_kernel(%arg0: i32, %arg1: memref<8x32xf32, #tpu.memory_space<vmem>>, %arg2: memref<1x32xf32, #tpu.memory_space<vmem>>, %arg3: memref<1x32xf32, #tpu.memory_space<vmem>>, %arg4: memref<32x32xbf16, #tpu.memory_space<vmem>>, %arg5: memref<1x32xf32, #tpu.memory_space<vmem>>, %arg6: memref<32x32xbf16, #tpu.memory_space<vmem>>, %arg7: memref<1x32xf32, #tpu.memory_space<vmem>>, %arg8: memref<32x32xbf16, #tpu.memory_space<vmem>>, %arg9: memref<1x32xf32, #tpu.memory_space<vmem>>, %arg10: memref<32x32xbf16, #tpu.memory_space<vmem>>, %arg11: memref<1x32xf32, #tpu.memory_space<vmem>>, %arg12: memref<1x32xf32, #tpu.memory_space<vmem>>, %arg13: memref<1x32xf32, #tpu.memory_space<vmem>>, %arg14: memref<32x64xbf16, #tpu.memory_space<vmem>>, %arg15: memref<1x64xf32, #tpu.memory_space<vmem>>, %arg16: memref<64x32xbf16, #tpu.memory_space<vmem>>, %arg17: memref<1x32xf32, #tpu.memory_space<vmem>>, %arg18: memref<8x32xf32, #tpu.memory_space<vmem>>) attributes {dimension_semantics = [#tpu.dimension_semantics<parallel>], iteration_bounds = array<i64: 2>, scalar_prefetch = 0 : i64, scratch_operands = 0 : i64, tpu.core_type = #tpu.core_type<tc>, window_params = [{transform_indices = @transform_0, window_bounds = array<i64: 8, 32>}, {pipeline_mode = #tpu.pipeline_mode<synchronous>, transform_indices = @transform_1, window_bounds = array<i64: 1, 32>}, {pipeline_mode = #tpu.pipeline_mode<synchronous>, transform_indices = @transform_2, window_bounds = array<i64: 1, 32>}, {pipeline_mode = #tpu.pipeline_mode<synchronous>, transform_indices = @transform_3, window_bounds = array<i64: 32, 32>}, {pipeline_mode = #tpu.pipeline_mode<synchronous>, transform_indices = @transform_4, window_bounds = array<i64: 1, 32>}, {pipeline_mode = #tpu.pipeline_mode<synchronous>, transform_indices = @transform_5, window_bounds = array<i64: 32, 32>}, {pipeline_mode = #tpu.pipeline_mode<synchronous>, transform_indices = @transform_6, window_bounds = array<i64: 1, 32>}, {pipeline_mode = #tpu.pipeline_mode<synchronous>, transform_indices = @transform_7, window_bounds = array<i64: 32, 32>}, {pipeline_mode = #tpu.pipeline_mode<synchronous>, transform_indices = @transform_8, window_bounds = array<i64: 1, 32>}, {pipeline_mode = #tpu.pipeline_mode<synchronous>, transform_indices = @transform_9, window_bounds = array<i64: 32, 32>}, {pipeline_mode = #tpu.pipeline_mode<synchronous>, transform_indices = @transform_10, window_bounds = array<i64: 1, 32>}, {pipeline_mode = #tpu.pipeline_mode<synchronous>, transform_indices = @transform_11, window_bounds = array<i64: 1, 32>}, {pipeline_mode = #tpu.pipeline_mode<synchronous>, transform_indices = @transform_12, window_bounds = array<i64: 1, 32>}, {pipeline_mode = #tpu.pipeline_mode<synchronous>, transform_indices = @transform_13, window_bounds = array<i64: 32, 64>}, {pipeline_mode = #tpu.pipeline_mode<synchronous>, transform_indices = @transform_14, window_bounds = array<i64: 1, 64>}, {pipeline_mode = #tpu.pipeline_mode<synchronous>, transform_indices = @transform_15, window_bounds = array<i64: 64, 32>}, {pipeline_mode = #tpu.pipeline_mode<synchronous>, transform_indices = @transform_16, window_bounds = array<i64: 1, 32>}, {transform_indices = @transform_17, window_bounds = array<i64: 8, 32>}]} {
    %c0 = arith.constant 0 : index
    %c0_0 = arith.constant 0 : index
    %0 = vector.load %arg1[%c0, %c0_0] : memref<8x32xf32, #tpu.memory_space<vmem>>, vector<8x32xf32>
    %c0_1 = arith.constant 0 : index
    %c0_2 = arith.constant 0 : index
    %1 = vector.load %arg2[%c0_1, %c0_2] : memref<1x32xf32, #tpu.memory_space<vmem>>, vector<1x32xf32>
    %2 = vector.shape_cast %1 : vector<1x32xf32> to vector<32xf32>
    %c0_3 = arith.constant 0 : index
    %c0_4 = arith.constant 0 : index
    %3 = vector.load %arg3[%c0_3, %c0_4] : memref<1x32xf32, #tpu.memory_space<vmem>>, vector<1x32xf32>
    %4 = vector.shape_cast %3 : vector<1x32xf32> to vector<32xf32>
    %cst = arith.constant dense<0.000000e+00> : vector<8xf32>
    %5 = vector.multi_reduction <add>, %0, %cst [1] : vector<8x32xf32> to vector<8xf32>
    %6 = vector.shape_cast %5 : vector<8xf32> to vector<8x1xf32>
    %cst_5 = arith.constant 3.200000e+01 : f32
    %7 = vector.broadcast %cst_5 : f32 to vector<8x1xf32>
    %8 = arith.divf %6, %7 : vector<8x1xf32>
    %9 = vector.broadcast %8 : vector<8x1xf32> to vector<8x32xf32>
    %10 = arith.subf %0, %9 : vector<8x32xf32>
    %11 = arith.mulf %10, %10 : vector<8x32xf32>
    %cst_6 = arith.constant dense<0.000000e+00> : vector<8xf32>
    %12 = vector.multi_reduction <add>, %11, %cst_6 [1] : vector<8x32xf32> to vector<8xf32>
    %13 = vector.shape_cast %12 : vector<8xf32> to vector<8x1xf32>
    %cst_7 = arith.constant 3.200000e+01 : f32
    %14 = vector.broadcast %cst_7 : f32 to vector<8x1xf32>
    %15 = arith.divf %13, %14 : vector<8x1xf32>
    %16 = vector.broadcast %8 : vector<8x1xf32> to vector<8x32xf32>
    %17 = arith.subf %0, %16 : vector<8x32xf32>
    %cst_8 = arith.constant 9.99999974E-6 : f32
    %18 = vector.broadcast %cst_8 : f32 to vector<8x1xf32>
    %19 = arith.addf %15, %18 : vector<8x1xf32>
    %20 = math.rsqrt %19 : vector<8x1xf32>
    %21 = vector.broadcast %20 : vector<8x1xf32> to vector<8x32xf32>
    %22 = arith.mulf %17, %21 : vector<8x32xf32>
    %23 = vector.shape_cast %2 : vector<32xf32> to vector<1x32xf32>
    %24 = vector.broadcast %23 : vector<1x32xf32> to vector<8x32xf32>
    %25 = arith.mulf %22, %24 : vector<8x32xf32>
    %26 = vector.shape_cast %4 : vector<32xf32> to vector<1x32xf32>
    %27 = vector.broadcast %26 : vector<1x32xf32> to vector<8x32xf32>
    %28 = arith.addf %25, %27 : vector<8x32xf32>
    %29 = arith.truncf %28 : vector<8x32xf32> to vector<8x32xbf16>
    %c0_9 = arith.constant 0 : index
    %c0_10 = arith.constant 0 : index
    %30 = vector.load %arg4[%c0_9, %c0_10] : memref<32x32xbf16, #tpu.memory_space<vmem>>, vector<32x32xbf16>
    %cst_11 = arith.constant dense<0.000000e+00> : vector<8x32xf32>
    %31 = tpu.matmul %29, %30, %cst_11 {dimension_numbers = #tpu.dot_dimension_numbers<[1], [0], [0], [1], [0, 0, 1, 1], [], []>} : vector<8x32xbf16>, vector<32x32xbf16>, vector<8x32xf32> -> vector<8x32xf32>
    %c0_12 = arith.constant 0 : index
    %c0_13 = arith.constant 0 : index
    %32 = vector.load %arg5[%c0_12, %c0_13] : memref<1x32xf32, #tpu.memory_space<vmem>>, vector<1x32xf32>
    %33 = vector.shape_cast %32 : vector<1x32xf32> to vector<32xf32>
    %34 = vector.shape_cast %33 : vector<32xf32> to vector<1x32xf32>
    %35 = vector.broadcast %34 : vector<1x32xf32> to vector<8x32xf32>
    %36 = arith.addf %31, %35 : vector<8x32xf32>
    %c0_14 = arith.constant 0 : index
    %c0_15 = arith.constant 0 : index
    %37 = vector.load %arg6[%c0_14, %c0_15] : memref<32x32xbf16, #tpu.memory_space<vmem>>, vector<32x32xbf16>
    %cst_16 = arith.constant dense<0.000000e+00> : vector<8x32xf32>
    %38 = tpu.matmul %29, %37, %cst_16 {dimension_numbers = #tpu.dot_dimension_numbers<[1], [0], [0], [1], [0, 0, 1, 1], [], []>} : vector<8x32xbf16>, vector<32x32xbf16>, vector<8x32xf32> -> vector<8x32xf32>
    %c0_17 = arith.constant 0 : index
    %c0_18 = arith.constant 0 : index
    %39 = vector.load %arg7[%c0_17, %c0_18] : memref<1x32xf32, #tpu.memory_space<vmem>>, vector<1x32xf32>
    %40 = vector.shape_cast %39 : vector<1x32xf32> to vector<32xf32>
    %41 = vector.shape_cast %40 : vector<32xf32> to vector<1x32xf32>
    %42 = vector.broadcast %41 : vector<1x32xf32> to vector<8x32xf32>
    %43 = arith.addf %38, %42 : vector<8x32xf32>
    %c0_19 = arith.constant 0 : index
    %c0_20 = arith.constant 0 : index
    %44 = vector.load %arg8[%c0_19, %c0_20] : memref<32x32xbf16, #tpu.memory_space<vmem>>, vector<32x32xbf16>
    %cst_21 = arith.constant dense<0.000000e+00> : vector<8x32xf32>
    %45 = tpu.matmul %29, %44, %cst_21 {dimension_numbers = #tpu.dot_dimension_numbers<[1], [0], [0], [1], [0, 0, 1, 1], [], []>} : vector<8x32xbf16>, vector<32x32xbf16>, vector<8x32xf32> -> vector<8x32xf32>
    %c0_22 = arith.constant 0 : index
    %c0_23 = arith.constant 0 : index
    %46 = vector.load %arg9[%c0_22, %c0_23] : memref<1x32xf32, #tpu.memory_space<vmem>>, vector<1x32xf32>
    %47 = vector.shape_cast %46 : vector<1x32xf32> to vector<32xf32>
    %48 = vector.shape_cast %47 : vector<32xf32> to vector<1x32xf32>
    %49 = vector.broadcast %48 : vector<1x32xf32> to vector<8x32xf32>
    %50 = arith.addf %45, %49 : vector<8x32xf32>
    %51 = vector.shape_cast %36 : vector<8x32xf32> to vector<1x8x4x8xf32>
    %52 = tpu.transpose %51, [0, 2, 1, 3] : vector<1x8x4x8xf32> -> vector<1x4x8x8xf32>
    %53 = vector.shape_cast %52 : vector<1x4x8x8xf32> to vector<4x8x8xf32>
    %54 = arith.truncf %53 : vector<4x8x8xf32> to vector<4x8x8xbf16>
    %55 = vector.shape_cast %43 : vector<8x32xf32> to vector<1x8x4x8xf32>
    %56 = tpu.transpose %55, [0, 2, 1, 3] : vector<1x8x4x8xf32> -> vector<1x4x8x8xf32>
    %57 = vector.shape_cast %56 : vector<1x4x8x8xf32> to vector<4x8x8xf32>
    %58 = arith.truncf %57 : vector<4x8x8xf32> to vector<4x8x8xbf16>
    %59 = vector.shape_cast %50 : vector<8x32xf32> to vector<1x8x4x8xf32>
    %60 = tpu.transpose %59, [0, 2, 1, 3] : vector<1x8x4x8xf32> -> vector<1x4x8x8xf32>
    %61 = vector.shape_cast %60 : vector<1x4x8x8xf32> to vector<4x8x8xf32>
    %62 = arith.truncf %61 : vector<4x8x8xf32> to vector<4x8x8xbf16>
    "tpu.trace_start"() <{level = 10 : i32, message = "bqd,bkd->bqk"}> : () -> ()
    %cst_24 = arith.constant dense<0.000000e+00> : vector<4x8x8xf32>
    %63 = tpu.matmul %54, %58, %cst_24 {dimension_numbers = #tpu.dot_dimension_numbers<[2], [2], [1], [1], [0, 0, 0, 1, 1, 1], [0], [0]>} : vector<4x8x8xbf16>, vector<4x8x8xbf16>, vector<4x8x8xf32> -> vector<4x8x8xf32>
    "tpu.trace_stop"() : () -> ()
    %cst_25 = arith.constant dense<0xFF800000> : vector<4x8xf32>
    %64 = vector.multi_reduction <maximumf>, %63, %cst_25 [2] : vector<4x8x8xf32> to vector<4x8xf32>
    %65 = vector.shape_cast %64 : vector<4x8xf32> to vector<4x8x1xf32>
    %66 = vector.broadcast %65 : vector<4x8x1xf32> to vector<4x8x8xf32>
    %67 = arith.subf %63, %66 : vector<4x8x8xf32>
    %68 = math.exp %67 : vector<4x8x8xf32>
    %cst_26 = arith.constant dense<0.000000e+00> : vector<4x8xf32>
    %69 = vector.multi_reduction <add>, %68, %cst_26 [2] : vector<4x8x8xf32> to vector<4x8xf32>
    %70 = vector.shape_cast %69 : vector<4x8xf32> to vector<4x8x1xf32>
    %71 = tpu.reciprocal %70 {approx = true} : vector<4x8x1xf32> -> vector<4x8x1xf32>
    %72 = vector.broadcast %71 : vector<4x8x1xf32> to vector<4x8x8xf32>
    %73 = arith.mulf %68, %72 : vector<4x8x8xf32>
    %74 = arith.truncf %73 : vector<4x8x8xf32> to vector<4x8x8xbf16>
    "tpu.trace_start"() <{level = 10 : i32, message = "bqk,bkd->bqd"}> : () -> ()
    %cst_27 = arith.constant dense<0.000000e+00> : vector<4x8x8xf32>
    %75 = tpu.matmul %74, %62, %cst_27 {dimension_numbers = #tpu.dot_dimension_numbers<[2], [1], [1], [2], [0, 0, 0, 1, 1, 2], [0], [0]>} : vector<4x8x8xbf16>, vector<4x8x8xbf16>, vector<4x8x8xf32> -> vector<4x8x8xf32>
    "tpu.trace_stop"() : () -> ()
    %76 = vector.shape_cast %75 : vector<4x8x8xf32> to vector<1x4x8x8xf32>
    %77 = tpu.transpose %76, [0, 2, 1, 3] : vector<1x4x8x8xf32> -> vector<1x8x4x8xf32>
    %78 = vector.shape_cast %77 : vector<1x8x4x8xf32> to vector<8x32xf32>
    %79 = arith.truncf %78 : vector<8x32xf32> to vector<8x32xbf16>
    %c0_28 = arith.constant 0 : index
    %c0_29 = arith.constant 0 : index
    %80 = vector.load %arg10[%c0_28, %c0_29] : memref<32x32xbf16, #tpu.memory_space<vmem>>, vector<32x32xbf16>
    %cst_30 = arith.constant dense<0.000000e+00> : vector<8x32xf32>
    %81 = tpu.matmul %79, %80, %cst_30 {dimension_numbers = #tpu.dot_dimension_numbers<[1], [0], [0], [1], [0, 0, 1, 1], [], []>} : vector<8x32xbf16>, vector<32x32xbf16>, vector<8x32xf32> -> vector<8x32xf32>
    %c0_31 = arith.constant 0 : index
    %c0_32 = arith.constant 0 : index
    %82 = vector.load %arg11[%c0_31, %c0_32] : memref<1x32xf32, #tpu.memory_space<vmem>>, vector<1x32xf32>
    %83 = vector.shape_cast %82 : vector<1x32xf32> to vector<32xf32>
    %84 = vector.shape_cast %83 : vector<32xf32> to vector<1x32xf32>
    %85 = vector.broadcast %84 : vector<1x32xf32> to vector<8x32xf32>
    %86 = arith.addf %81, %85 : vector<8x32xf32>
    %87 = arith.addf %0, %86 : vector<8x32xf32>
    %c0_33 = arith.constant 0 : index
    %c0_34 = arith.constant 0 : index
    %88 = vector.load %arg12[%c0_33, %c0_34] : memref<1x32xf32, #tpu.memory_space<vmem>>, vector<1x32xf32>
    %89 = vector.shape_cast %88 : vector<1x32xf32> to vector<32xf32>
    %c0_35 = arith.constant 0 : index
    %c0_36 = arith.constant 0 : index
    %90 = vector.load %arg13[%c0_35, %c0_36] : memref<1x32xf32, #tpu.memory_space<vmem>>, vector<1x32xf32>
    %91 = vector.shape_cast %90 : vector<1x32xf32> to vector<32xf32>
    %cst_37 = arith.constant dense<0.000000e+00> : vector<8xf32>
    %92 = vector.multi_reduction <add>, %87, %cst_37 [1] : vector<8x32xf32> to vector<8xf32>
    %93 = vector.shape_cast %92 : vector<8xf32> to vector<8x1xf32>
    %cst_38 = arith.constant 3.200000e+01 : f32
    %94 = vector.broadcast %cst_38 : f32 to vector<8x1xf32>
    %95 = arith.divf %93, %94 : vector<8x1xf32>
    %96 = vector.broadcast %95 : vector<8x1xf32> to vector<8x32xf32>
    %97 = arith.subf %87, %96 : vector<8x32xf32>
    %98 = arith.mulf %97, %97 : vector<8x32xf32>
    %cst_39 = arith.constant dense<0.000000e+00> : vector<8xf32>
    %99 = vector.multi_reduction <add>, %98, %cst_39 [1] : vector<8x32xf32> to vector<8xf32>
    %100 = vector.shape_cast %99 : vector<8xf32> to vector<8x1xf32>
    %cst_40 = arith.constant 3.200000e+01 : f32
    %101 = vector.broadcast %cst_40 : f32 to vector<8x1xf32>
    %102 = arith.divf %100, %101 : vector<8x1xf32>
    %103 = vector.broadcast %95 : vector<8x1xf32> to vector<8x32xf32>
    %104 = arith.subf %87, %103 : vector<8x32xf32>
    %cst_41 = arith.constant 9.99999974E-6 : f32
    %105 = vector.broadcast %cst_41 : f32 to vector<8x1xf32>
    %106 = arith.addf %102, %105 : vector<8x1xf32>
    %107 = math.rsqrt %106 : vector<8x1xf32>
    %108 = vector.broadcast %107 : vector<8x1xf32> to vector<8x32xf32>
    %109 = arith.mulf %104, %108 : vector<8x32xf32>
    %110 = vector.shape_cast %89 : vector<32xf32> to vector<1x32xf32>
    %111 = vector.broadcast %110 : vector<1x32xf32> to vector<8x32xf32>
    %112 = arith.mulf %109, %111 : vector<8x32xf32>
    %113 = vector.shape_cast %91 : vector<32xf32> to vector<1x32xf32>
    %114 = vector.broadcast %113 : vector<1x32xf32> to vector<8x32xf32>
    %115 = arith.addf %112, %114 : vector<8x32xf32>
    %116 = arith.truncf %115 : vector<8x32xf32> to vector<8x32xbf16>
    %cst_42 = arith.constant 0.000000e+00 : f32
    %117 = vector.broadcast %cst_42 : f32 to vector<8x32xf32>
    %c0_43 = arith.constant 0 : index
    %c0_44 = arith.constant 0 : index
    %118 = vector.load %arg14[%c0_43, %c0_44] : memref<32x64xbf16, #tpu.memory_space<vmem>>, vector<32x64xbf16>
    %cst_45 = arith.constant dense<0.000000e+00> : vector<8x64xf32>
    %119 = tpu.matmul %116, %118, %cst_45 {dimension_numbers = #tpu.dot_dimension_numbers<[1], [0], [0], [1], [0, 0, 1, 1], [], []>} : vector<8x32xbf16>, vector<32x64xbf16>, vector<8x64xf32> -> vector<8x64xf32>
    %c0_46 = arith.constant 0 : index
    %c0_47 = arith.constant 0 : index
    %120 = vector.load %arg15[%c0_46, %c0_47] : memref<1x64xf32, #tpu.memory_space<vmem>>, vector<1x64xf32>
    %121 = vector.shape_cast %120 : vector<1x64xf32> to vector<64xf32>
    %122 = vector.shape_cast %121 : vector<64xf32> to vector<1x64xf32>
    %123 = vector.broadcast %122 : vector<1x64xf32> to vector<8x64xf32>
    %124 = arith.addf %119, %123 : vector<8x64xf32>
    %cst_48 = arith.constant 0.000000e+00 : f32
    %125 = vector.broadcast %cst_48 : f32 to vector<8x64xf32>
    %126 = arith.maximumf %124, %125 : vector<8x64xf32>
    %127 = arith.truncf %126 : vector<8x64xf32> to vector<8x64xbf16>
    %c0_49 = arith.constant 0 : index
    %c0_50 = arith.constant 0 : index
    %128 = vector.load %arg16[%c0_49, %c0_50] : memref<64x32xbf16, #tpu.memory_space<vmem>>, vector<64x32xbf16>
    %cst_51 = arith.constant dense<0.000000e+00> : vector<8x32xf32>
    %129 = tpu.matmul %127, %128, %cst_51 {dimension_numbers = #tpu.dot_dimension_numbers<[1], [0], [0], [1], [0, 0, 1, 1], [], []>} : vector<8x64xbf16>, vector<64x32xbf16>, vector<8x32xf32> -> vector<8x32xf32>
    %130 = arith.addf %117, %129 : vector<8x32xf32>
    %c0_52 = arith.constant 0 : index
    %c0_53 = arith.constant 0 : index
    %131 = vector.load %arg17[%c0_52, %c0_53] : memref<1x32xf32, #tpu.memory_space<vmem>>, vector<1x32xf32>
    %132 = vector.shape_cast %131 : vector<1x32xf32> to vector<32xf32>
    %133 = vector.shape_cast %132 : vector<32xf32> to vector<1x32xf32>
    %134 = vector.broadcast %133 : vector<1x32xf32> to vector<8x32xf32>
    %135 = arith.addf %130, %134 : vector<8x32xf32>
    %136 = arith.addf %87, %135 : vector<8x32xf32>
    %c0_54 = arith.constant 0 : index
    %c0_55 = arith.constant 0 : index
    %137 = vector.load %arg18[%c0_54, %c0_55] : memref<8x32xf32, #tpu.memory_space<vmem>>, vector<8x32xf32>
    tpu.vector_store %arg18[%c0_54, %c0_55], %136 {strides = array<i32>} : memref<8x32xf32, #tpu.memory_space<vmem>>, vector<8x32xf32>,
    return
  }
  func.func @transform_0(%arg0: i32) -> (i32, i32) {
    %c0_i32 = arith.constant 0 : i32
    %c0_i32_0 = arith.constant 0 : i32
    return %arg0, %c0_i32 : i32, i32
  }
  func.func @transform_1(%arg0: i32) -> (i32, i32) {
    %c0_i32 = arith.constant 0 : i32
    %c0_i32_0 = arith.constant 0 : i32
    %c0_i32_1 = arith.constant 0 : i32
    return %c0_i32, %c0_i32_0 : i32, i32
  }
  func.func @transform_2(%arg0: i32) -> (i32, i32) {
    %c0_i32 = arith.constant 0 : i32
    %c0_i32_0 = arith.constant 0 : i32
    %c0_i32_1 = arith.constant 0 : i32
    return %c0_i32, %c0_i32_0 : i32, i32
  }
  func.func @transform_3(%arg0: i32) -> (i32, i32) {
    %c0_i32 = arith.constant 0 : i32
    %c0_i32_0 = arith.constant 0 : i32
    %c0_i32_1 = arith.constant 0 : i32
    return %c0_i32, %c0_i32_0 : i32, i32
  }
  func.func @transform_4(%arg0: i32) -> (i32, i32) {
    %c0_i32 = arith.constant 0 : i32
    %c0_i32_0 = arith.constant 0 : i32
    %c0_i32_1 = arith.constant 0 : i32
    return %c0_i32, %c0_i32_0 : i32, i32
  }
  func.func @transform_5(%arg0: i32) -> (i32, i32) {
    %c0_i32 = arith.constant 0 : i32
    %c0_i32_0 = arith.constant 0 : i32
    %c0_i32_1 = arith.constant 0 : i32
    return %c0_i32, %c0_i32_0 : i32, i32
  }
  func.func @transform_6(%arg0: i32) -> (i32, i32) {
    %c0_i32 = arith.constant 0 : i32
    %c0_i32_0 = arith.constant 0 : i32
    %c0_i32_1 = arith.constant 0 : i32
    return %c0_i32, %c0_i32_0 : i32, i32
  }
  func.func @transform_7(%arg0: i32) -> (i32, i32) {
    %c0_i32 = arith.constant 0 : i32
    %c0_i32_0 = arith.constant 0 : i32
    %c0_i32_1 = arith.constant 0 : i32
    return %c0_i32, %c0_i32_0 : i32, i32
  }
  func.func @transform_8(%arg0: i32) -> (i32, i32) {
    %c0_i32 = arith.constant 0 : i32
    %c0_i32_0 = arith.constant 0 : i32
    %c0_i32_1 = arith.constant 0 : i32
    return %c0_i32, %c0_i32_0 : i32, i32
  }
  func.func @transform_9(%arg0: i32) -> (i32, i32) {
    %c0_i32 = arith.constant 0 : i32
    %c0_i32_0 = arith.constant 0 : i32
    %c0_i32_1 = arith.constant 0 : i32
    return %c0_i32, %c0_i32_0 : i32, i32
  }
  func.func @transform_10(%arg0: i32) -> (i32, i32) {
    %c0_i32 = arith.constant 0 : i32
    %c0_i32_0 = arith.constant 0 : i32
    %c0_i32_1 = arith.constant 0 : i32
    return %c0_i32, %c0_i32_0 : i32, i32
  }
  func.func @transform_11(%arg0: i32) -> (i32, i32) {
    %c0_i32 = arith.constant 0 : i32
    %c0_i32_0 = arith.constant 0 : i32
    %c0_i32_1 = arith.constant 0 : i32
    return %c0_i32, %c0_i32_0 : i32, i32
  }
  func.func @transform_12(%arg0: i32) -> (i32, i32) {
    %c0_i32 = arith.constant 0 : i32
    %c0_i32_0 = arith.constant 0 : i32
    %c0_i32_1 = arith.constant 0 : i32
    return %c0_i32, %c0_i32_0 : i32, i32
  }
  func.func @transform_13(%arg0: i32) -> (i32, i32) {
    %c0_i32 = arith.constant 0 : i32
    %c0_i32_0 = arith.constant 0 : i32
    %c0_i32_1 = arith.constant 0 : i32
    return %c0_i32, %c0_i32_0 : i32, i32
  }
  func.func @transform_14(%arg0: i32) -> (i32, i32) {
    %c0_i32 = arith.constant 0 : i32
    %c0_i32_0 = arith.constant 0 : i32
    %c0_i32_1 = arith.constant 0 : i32
    return %c0_i32, %c0_i32_0 : i32, i32
  }
  func.func @transform_15(%arg0: i32) -> (i32, i32) {
    %c0_i32 = arith.constant 0 : i32
    %c0_i32_0 = arith.constant 0 : i32
    %c0_i32_1 = arith.constant 0 : i32
    return %c0_i32, %c0_i32_0 : i32, i32
  }
  func.func @transform_16(%arg0: i32) -> (i32, i32) {
    %c0_i32 = arith.constant 0 : i32
    %c0_i32_0 = arith.constant 0 : i32
    %c0_i32_1 = arith.constant 0 : i32
    return %c0_i32, %c0_i32_0 : i32, i32
  }
  func.func @transform_17(%arg0: i32) -> (i32, i32) {
    %c0_i32 = arith.constant 0 : i32
    %c0_i32_0 = arith.constant 0 : i32
    return %arg0, %c0_i32 : i32, i32
  }
}

module attributes {stable_mosaic.version = 11 : i64} {
  func.func @encoder_self_kernel(%arg0: i32, %arg1: memref<8x32xf32, #tpu.memory_space<vmem>>, %arg2: memref<1x32xf32, #tpu.memory_space<vmem>>, %arg3: memref<1x32xf32, #tpu.memory_space<vmem>>, %arg4: memref<32x32xbf16, #tpu.memory_space<vmem>>, %arg5: memref<1x32xf32, #tpu.memory_space<vmem>>, %arg6: memref<32x32xbf16, #tpu.memory_space<vmem>>, %arg7: memref<1x32xf32, #tpu.memory_space<vmem>>, %arg8: memref<32x32xbf16, #tpu.memory_space<vmem>>, %arg9: memref<1x32xf32, #tpu.memory_space<vmem>>, %arg10: memref<32x32xbf16, #tpu.memory_space<vmem>>, %arg11: memref<1x32xf32, #tpu.memory_space<vmem>>, %arg12: memref<1x32xf32, #tpu.memory_space<vmem>>, %arg13: memref<1x32xf32, #tpu.memory_space<vmem>>, %arg14: memref<32x64xbf16, #tpu.memory_space<vmem>>, %arg15: memref<1x64xf32, #tpu.memory_space<vmem>>, %arg16: memref<64x32xbf16, #tpu.memory_space<vmem>>, %arg17: memref<1x32xf32, #tpu.memory_space<vmem>>, %arg18: memref<8x32xf32, #tpu.memory_space<vmem>>) attributes {dimension_semantics = [#tpu.dimension_semantics<parallel>], iteration_bounds = array<i64: 2>, scalar_prefetch = 0 : i64, scratch_operands = 0 : i64, tpu.core_type = #tpu.core_type<tc>, window_params = [{transform_indices = @transform_0, window_bounds = array<i64: 8, 32>}, {pipeline_mode = #tpu.pipeline_mode<synchronous>, transform_indices = @transform_1, window_bounds = array<i64: 1, 32>}, {pipeline_mode = #tpu.pipeline_mode<synchronous>, transform_indices = @transform_2, window_bounds = array<i64: 1, 32>}, {pipeline_mode = #tpu.pipeline_mode<synchronous>, transform_indices = @transform_3, window_bounds = array<i64: 32, 32>}, {pipeline_mode = #tpu.pipeline_mode<synchronous>, transform_indices = @transform_4, window_bounds = array<i64: 1, 32>}, {pipeline_mode = #tpu.pipeline_mode<synchronous>, transform_indices = @transform_5, window_bounds = array<i64: 32, 32>}, {pipeline_mode = #tpu.pipeline_mode<synchronous>, transform_indices = @transform_6, window_bounds = array<i64: 1, 32>}, {pipeline_mode = #tpu.pipeline_mode<synchronous>, transform_indices = @transform_7, window_bounds = array<i64: 32, 32>}, {pipeline_mode = #tpu.pipeline_mode<synchronous>, transform_indices = @transform_8, window_bounds = array<i64: 1, 32>}, {pipeline_mode = #tpu.pipeline_mode<synchronous>, transform_indices = @transform_9, window_bounds = array<i64: 32, 32>}, {pipeline_mode = #tpu.pipeline_mode<synchronous>, transform_indices = @transform_10, window_bounds = array<i64: 1, 32>}, {pipeline_mode = #tpu.pipeline_mode<synchronous>, transform_indices = @transform_11, window_bounds = array<i64: 1, 32>}, {pipeline_mode = #tpu.pipeline_mode<synchronous>, transform_indices = @transform_12, window_bounds = array<i64: 1, 32>}, {pipeline_mode = #tpu.pipeline_mode<synchronous>, transform_indices = @transform_13, window_bounds = array<i64: 32, 64>}, {pipeline_mode = #tpu.pipeline_mode<synchronous>, transform_indices = @transform_14, window_bounds = array<i64: 1, 64>}, {pipeline_mode = #tpu.pipeline_mode<synchronous>, transform_indices = @transform_15, window_bounds = array<i64: 64, 32>}, {pipeline_mode = #tpu.pipeline_mode<synchronous>, transform_indices = @transform_16, window_bounds = array<i64: 1, 32>}, {transform_indices = @transform_17, window_bounds = array<i64: 8, 32>}]} {
    %c0 = arith.constant 0 : index
    %c0_0 = arith.constant 0 : index
    %0 = vector.load %arg1[%c0, %c0_0] : memref<8x32xf32, #tpu.memory_space<vmem>>, vector<8x32xf32>
    %c0_1 = arith.constant 0 : index
    %c0_2 = arith.constant 0 : index
    %1 = vector.load %arg2[%c0_1, %c0_2] : memref<1x32xf32, #tpu.memory_space<vmem>>, vector<1x32xf32>
    %2 = vector.shape_cast %1 : vector<1x32xf32> to vector<32xf32>
    %c0_3 = arith.constant 0 : index
    %c0_4 = arith.constant 0 : index
    %3 = vector.load %arg3[%c0_3, %c0_4] : memref<1x32xf32, #tpu.memory_space<vmem>>, vector<1x32xf32>
    %4 = vector.shape_cast %3 : vector<1x32xf32> to vector<32xf32>
    %cst = arith.constant dense<0.000000e+00> : vector<8xf32>
    %5 = vector.multi_reduction <add>, %0, %cst [1] : vector<8x32xf32> to vector<8xf32>
    %6 = vector.shape_cast %5 : vector<8xf32> to vector<8x1xf32>
    %cst_5 = arith.constant 3.200000e+01 : f32
    %7 = vector.broadcast %cst_5 : f32 to vector<8x1xf32>
    %8 = arith.divf %6, %7 : vector<8x1xf32>
    %9 = vector.broadcast %8 : vector<8x1xf32> to vector<8x32xf32>
    %10 = arith.subf %0, %9 : vector<8x32xf32>
    %11 = arith.mulf %10, %10 : vector<8x32xf32>
    %cst_6 = arith.constant dense<0.000000e+00> : vector<8xf32>
    %12 = vector.multi_reduction <add>, %11, %cst_6 [1] : vector<8x32xf32> to vector<8xf32>
    %13 = vector.shape_cast %12 : vector<8xf32> to vector<8x1xf32>
    %cst_7 = arith.constant 3.200000e+01 : f32
    %14 = vector.broadcast %cst_7 : f32 to vector<8x1xf32>
    %15 = arith.divf %13, %14 : vector<8x1xf32>
    %16 = vector.broadcast %8 : vector<8x1xf32> to vector<8x32xf32>
    %17 = arith.subf %0, %16 : vector<8x32xf32>
    %cst_8 = arith.constant 9.99999974E-6 : f32
    %18 = vector.broadcast %cst_8 : f32 to vector<8x1xf32>
    %19 = arith.addf %15, %18 : vector<8x1xf32>
    %20 = math.rsqrt %19 : vector<8x1xf32>
    %21 = vector.broadcast %20 : vector<8x1xf32> to vector<8x32xf32>
    %22 = arith.mulf %17, %21 : vector<8x32xf32>
    %23 = vector.shape_cast %2 : vector<32xf32> to vector<1x32xf32>
    %24 = vector.broadcast %23 : vector<1x32xf32> to vector<8x32xf32>
    %25 = arith.mulf %22, %24 : vector<8x32xf32>
    %26 = vector.shape_cast %4 : vector<32xf32> to vector<1x32xf32>
    %27 = vector.broadcast %26 : vector<1x32xf32> to vector<8x32xf32>
    %28 = arith.addf %25, %27 : vector<8x32xf32>
    %29 = arith.truncf %28 : vector<8x32xf32> to vector<8x32xbf16>
    %c0_9 = arith.constant 0 : index
    %c0_10 = arith.constant 0 : index
    %30 = vector.load %arg4[%c0_9, %c0_10] : memref<32x32xbf16, #tpu.memory_space<vmem>>, vector<32x32xbf16>
    %cst_11 = arith.constant dense<0.000000e+00> : vector<8x32xf32>
    %31 = tpu.matmul %29, %30, %cst_11 {dimension_numbers = #tpu.dot_dimension_numbers<[1], [0], [0], [1], [0, 0, 1, 1], [], []>} : vector<8x32xbf16>, vector<32x32xbf16>, vector<8x32xf32> -> vector<8x32xf32>
    %c0_12 = arith.constant 0 : index
    %c0_13 = arith.constant 0 : index
    %32 = vector.load %arg5[%c0_12, %c0_13] : memref<1x32xf32, #tpu.memory_space<vmem>>, vector<1x32xf32>
    %33 = vector.shape_cast %32 : vector<1x32xf32> to vector<32xf32>
    %34 = vector.shape_cast %33 : vector<32xf32> to vector<1x32xf32>
    %35 = vector.broadcast %34 : vector<1x32xf32> to vector<8x32xf32>
    %36 = arith.addf %31, %35 : vector<8x32xf32>
    %c0_14 = arith.constant 0 : index
    %c0_15 = arith.constant 0 : index
    %37 = vector.load %arg6[%c0_14, %c0_15] : memref<32x32xbf16, #tpu.memory_space<vmem>>, vector<32x32xbf16>
    %cst_16 = arith.constant dense<0.000000e+00> : vector<8x32xf32>
    %38 = tpu.matmul %29, %37, %cst_16 {dimension_numbers = #tpu.dot_dimension_numbers<[1], [0], [0], [1], [0, 0, 1, 1], [], []>} : vector<8x32xbf16>, vector<32x32xbf16>, vector<8x32xf32> -> vector<8x32xf32>
    %c0_17 = arith.constant 0 : index
    %c0_18 = arith.constant 0 : index
    %39 = vector.load %arg7[%c0_17, %c0_18] : memref<1x32xf32, #tpu.memory_space<vmem>>, vector<1x32xf32>
    %40 = vector.shape_cast %39 : vector<1x32xf32> to vector<32xf32>
    %41 = vector.shape_cast %40 : vector<32xf32> to vector<1x32xf32>
    %42 = vector.broadcast %41 : vector<1x32xf32> to vector<8x32xf32>
    %43 = arith.addf %38, %42 : vector<8x32xf32>
    %c0_19 = arith.constant 0 : index
    %c0_20 = arith.constant 0 : index
    %44 = vector.load %arg8[%c0_19, %c0_20] : memref<32x32xbf16, #tpu.memory_space<vmem>>, vector<32x32xbf16>
    %cst_21 = arith.constant dense<0.000000e+00> : vector<8x32xf32>
    %45 = tpu.matmul %29, %44, %cst_21 {dimension_numbers = #tpu.dot_dimension_numbers<[1], [0], [0], [1], [0, 0, 1, 1], [], []>} : vector<8x32xbf16>, vector<32x32xbf16>, vector<8x32xf32> -> vector<8x32xf32>
    %c0_22 = arith.constant 0 : index
    %c0_23 = arith.constant 0 : index
    %46 = vector.load %arg9[%c0_22, %c0_23] : memref<1x32xf32, #tpu.memory_space<vmem>>, vector<1x32xf32>
    %47 = vector.shape_cast %46 : vector<1x32xf32> to vector<32xf32>
    %48 = vector.shape_cast %47 : vector<32xf32> to vector<1x32xf32>
    %49 = vector.broadcast %48 : vector<1x32xf32> to vector<8x32xf32>
    %50 = arith.addf %45, %49 : vector<8x32xf32>
    %51 = vector.shape_cast %36 : vector<8x32xf32> to vector<1x8x4x8xf32>
    %52 = tpu.transpose %51, [0, 2, 1, 3] : vector<1x8x4x8xf32> -> vector<1x4x8x8xf32>
    %53 = vector.shape_cast %52 : vector<1x4x8x8xf32> to vector<4x8x8xf32>
    %54 = arith.truncf %53 : vector<4x8x8xf32> to vector<4x8x8xbf16>
    %55 = vector.shape_cast %43 : vector<8x32xf32> to vector<1x8x4x8xf32>
    %56 = tpu.transpose %55, [0, 2, 1, 3] : vector<1x8x4x8xf32> -> vector<1x4x8x8xf32>
    %57 = vector.shape_cast %56 : vector<1x4x8x8xf32> to vector<4x8x8xf32>
    %58 = arith.truncf %57 : vector<4x8x8xf32> to vector<4x8x8xbf16>
    %59 = vector.shape_cast %50 : vector<8x32xf32> to vector<1x8x4x8xf32>
    %60 = tpu.transpose %59, [0, 2, 1, 3] : vector<1x8x4x8xf32> -> vector<1x4x8x8xf32>
    %61 = vector.shape_cast %60 : vector<1x4x8x8xf32> to vector<4x8x8xf32>
    %62 = arith.truncf %61 : vector<4x8x8xf32> to vector<4x8x8xbf16>
    "tpu.trace_start"() <{level = 10 : i32, message = "bqd,bkd->bqk"}> : () -> ()
    %cst_24 = arith.constant dense<0.000000e+00> : vector<4x8x8xf32>
    %63 = tpu.matmul %54, %58, %cst_24 {dimension_numbers = #tpu.dot_dimension_numbers<[2], [2], [1], [1], [0, 0, 0, 1, 1, 1], [0], [0]>} : vector<4x8x8xbf16>, vector<4x8x8xbf16>, vector<4x8x8xf32> -> vector<4x8x8xf32>
    "tpu.trace_stop"() : () -> ()
    %cst_25 = arith.constant dense<0xFF800000> : vector<4x8xf32>
    %64 = vector.multi_reduction <maximumf>, %63, %cst_25 [2] : vector<4x8x8xf32> to vector<4x8xf32>
    %65 = vector.shape_cast %64 : vector<4x8xf32> to vector<4x8x1xf32>
    %66 = vector.broadcast %65 : vector<4x8x1xf32> to vector<4x8x8xf32>
    %67 = arith.subf %63, %66 : vector<4x8x8xf32>
    %68 = math.exp %67 : vector<4x8x8xf32>
    %cst_26 = arith.constant dense<0.000000e+00> : vector<4x8xf32>
    %69 = vector.multi_reduction <add>, %68, %cst_26 [2] : vector<4x8x8xf32> to vector<4x8xf32>
    %70 = vector.shape_cast %69 : vector<4x8xf32> to vector<4x8x1xf32>
    %71 = tpu.reciprocal %70 {approx = true} : vector<4x8x1xf32> -> vector<4x8x1xf32>
    %72 = vector.broadcast %71 : vector<4x8x1xf32> to vector<4x8x8xf32>
    %73 = arith.mulf %68, %72 : vector<4x8x8xf32>
    %74 = arith.truncf %73 : vector<4x8x8xf32> to vector<4x8x8xbf16>
    "tpu.trace_start"() <{level = 10 : i32, message = "bqk,bkd->bqd"}> : () -> ()
    %cst_27 = arith.constant dense<0.000000e+00> : vector<4x8x8xf32>
    %75 = tpu.matmul %74, %62, %cst_27 {dimension_numbers = #tpu.dot_dimension_numbers<[2], [1], [1], [2], [0, 0, 0, 1, 1, 2], [0], [0]>} : vector<4x8x8xbf16>, vector<4x8x8xbf16>, vector<4x8x8xf32> -> vector<4x8x8xf32>
    "tpu.trace_stop"() : () -> ()
    %76 = vector.shape_cast %75 : vector<4x8x8xf32> to vector<1x4x8x8xf32>
    %77 = tpu.transpose %76, [0, 2, 1, 3] : vector<1x4x8x8xf32> -> vector<1x8x4x8xf32>
    %78 = vector.shape_cast %77 : vector<1x8x4x8xf32> to vector<8x32xf32>
    %79 = arith.truncf %78 : vector<8x32xf32> to vector<8x32xbf16>
    %c0_28 = arith.constant 0 : index
    %c0_29 = arith.constant 0 : index
    %80 = vector.load %arg10[%c0_28, %c0_29] : memref<32x32xbf16, #tpu.memory_space<vmem>>, vector<32x32xbf16>
    %cst_30 = arith.constant dense<0.000000e+00> : vector<8x32xf32>
    %81 = tpu.matmul %79, %80, %cst_30 {dimension_numbers = #tpu.dot_dimension_numbers<[1], [0], [0], [1], [0, 0, 1, 1], [], []>} : vector<8x32xbf16>, vector<32x32xbf16>, vector<8x32xf32> -> vector<8x32xf32>
    %c0_31 = arith.constant 0 : index
    %c0_32 = arith.constant 0 : index
    %82 = vector.load %arg11[%c0_31, %c0_32] : memref<1x32xf32, #tpu.memory_space<vmem>>, vector<1x32xf32>
    %83 = vector.shape_cast %82 : vector<1x32xf32> to vector<32xf32>
    %84 = vector.shape_cast %83 : vector<32xf32> to vector<1x32xf32>
    %85 = vector.broadcast %84 : vector<1x32xf32> to vector<8x32xf32>
    %86 = arith.addf %81, %85 : vector<8x32xf32>
    %87 = arith.addf %0, %86 : vector<8x32xf32>
    %c0_33 = arith.constant 0 : index
    %c0_34 = arith.constant 0 : index
    %88 = vector.load %arg12[%c0_33, %c0_34] : memref<1x32xf32, #tpu.memory_space<vmem>>, vector<1x32xf32>
    %89 = vector.shape_cast %88 : vector<1x32xf32> to vector<32xf32>
    %c0_35 = arith.constant 0 : index
    %c0_36 = arith.constant 0 : index
    %90 = vector.load %arg13[%c0_35, %c0_36] : memref<1x32xf32, #tpu.memory_space<vmem>>, vector<1x32xf32>
    %91 = vector.shape_cast %90 : vector<1x32xf32> to vector<32xf32>
    %cst_37 = arith.constant dense<0.000000e+00> : vector<8xf32>
    %92 = vector.multi_reduction <add>, %87, %cst_37 [1] : vector<8x32xf32> to vector<8xf32>
    %93 = vector.shape_cast %92 : vector<8xf32> to vector<8x1xf32>
    %cst_38 = arith.constant 3.200000e+01 : f32
    %94 = vector.broadcast %cst_38 : f32 to vector<8x1xf32>
    %95 = arith.divf %93, %94 : vector<8x1xf32>
    %96 = vector.broadcast %95 : vector<8x1xf32> to vector<8x32xf32>
    %97 = arith.subf %87, %96 : vector<8x32xf32>
    %98 = arith.mulf %97, %97 : vector<8x32xf32>
    %cst_39 = arith.constant dense<0.000000e+00> : vector<8xf32>
    %99 = vector.multi_reduction <add>, %98, %cst_39 [1] : vector<8x32xf32> to vector<8xf32>
    %100 = vector.shape_cast %99 : vector<8xf32> to vector<8x1xf32>
    %cst_40 = arith.constant 3.200000e+01 : f32
    %101 = vector.broadcast %cst_40 : f32 to vector<8x1xf32>
    %102 = arith.divf %100, %101 : vector<8x1xf32>
    %103 = vector.broadcast %95 : vector<8x1xf32> to vector<8x32xf32>
    %104 = arith.subf %87, %103 : vector<8x32xf32>
    %cst_41 = arith.constant 9.99999974E-6 : f32
    %105 = vector.broadcast %cst_41 : f32 to vector<8x1xf32>
    %106 = arith.addf %102, %105 : vector<8x1xf32>
    %107 = math.rsqrt %106 : vector<8x1xf32>
    %108 = vector.broadcast %107 : vector<8x1xf32> to vector<8x32xf32>
    %109 = arith.mulf %104, %108 : vector<8x32xf32>
    %110 = vector.shape_cast %89 : vector<32xf32> to vector<1x32xf32>
    %111 = vector.broadcast %110 : vector<1x32xf32> to vector<8x32xf32>
    %112 = arith.mulf %109, %111 : vector<8x32xf32>
    %113 = vector.shape_cast %91 : vector<32xf32> to vector<1x32xf32>
    %114 = vector.broadcast %113 : vector<1x32xf32> to vector<8x32xf32>
    %115 = arith.addf %112, %114 : vector<8x32xf32>
    %116 = arith.truncf %115 : vector<8x32xf32> to vector<8x32xbf16>
    %cst_42 = arith.constant 0.000000e+00 : f32
    %117 = vector.broadcast %cst_42 : f32 to vector<8x32xf32>
    %c0_43 = arith.constant 0 : index
    %c0_44 = arith.constant 0 : index
    %118 = vector.load %arg14[%c0_43, %c0_44] : memref<32x64xbf16, #tpu.memory_space<vmem>>, vector<32x64xbf16>
    %cst_45 = arith.constant dense<0.000000e+00> : vector<8x64xf32>
    %119 = tpu.matmul %116, %118, %cst_45 {dimension_numbers = #tpu.dot_dimension_numbers<[1], [0], [0], [1], [0, 0, 1, 1], [], []>} : vector<8x32xbf16>, vector<32x64xbf16>, vector<8x64xf32> -> vector<8x64xf32>
    %c0_46 = arith.constant 0 : index
    %c0_47 = arith.constant 0 : index
    %120 = vector.load %arg15[%c0_46, %c0_47] : memref<1x64xf32, #tpu.memory_space<vmem>>, vector<1x64xf32>
    %121 = vector.shape_cast %120 : vector<1x64xf32> to vector<64xf32>
    %122 = vector.shape_cast %121 : vector<64xf32> to vector<1x64xf32>
    %123 = vector.broadcast %122 : vector<1x64xf32> to vector<8x64xf32>
    %124 = arith.addf %119, %123 : vector<8x64xf32>
    %cst_48 = arith.constant 0.000000e+00 : f32
    %125 = vector.broadcast %cst_48 : f32 to vector<8x64xf32>
    %126 = arith.maximumf %124, %125 : vector<8x64xf32>
    %127 = arith.truncf %126 : vector<8x64xf32> to vector<8x64xbf16>
    %c0_49 = arith.constant 0 : index
    %c0_50 = arith.constant 0 : index
    %128 = vector.load %arg16[%c0_49, %c0_50] : memref<64x32xbf16, #tpu.memory_space<vmem>>, vector<64x32xbf16>
    %cst_51 = arith.constant dense<0.000000e+00> : vector<8x32xf32>
    %129 = tpu.matmul %127, %128, %cst_51 {dimension_numbers = #tpu.dot_dimension_numbers<[1], [0], [0], [1], [0, 0, 1, 1], [], []>} : vector<8x64xbf16>, vector<64x32xbf16>, vector<8x32xf32> -> vector<8x32xf32>
    %130 = arith.addf %117, %129 : vector<8x32xf32>
    %c0_52 = arith.constant 0 : index
    %c0_53 = arith.constant 0 : index
    %131 = vector.load %arg17[%c0_52, %c0_53] : memref<1x32xf32, #tpu.memory_space<vmem>>, vector<1x32xf32>
    %132 = vector.shape_cast %131 : vector<1x32xf32> to vector<32xf32>
    %133 = vector.shape_cast %132 : vector<32xf32> to vector<1x32xf32>
    %134 = vector.broadcast %133 : vector<1x32xf32> to vector<8x32xf32>
    %135 = arith.addf %130, %134 : vector<8x32xf32>
    %136 = arith.addf %87, %135 : vector<8x32xf32>
    %c0_54 = arith.constant 0 : index
    %c0_55 = arith.constant 0 : index
    %137 = vector.load %arg18[%c0_54, %c0_55] : memref<8x32xf32, #tpu.memory_space<vmem>>, vector<8x32xf32>
    tpu.vector_store %arg18[%c0_54, %c0_55], %136 {strides = array<i32>} : memref<8x32xf32, #tpu.memory_space<vmem>>, vector<8x32xf32>,
    return
  }
  func.func @transform_0(%arg0: i32) -> (i32, i32) {
    %c0_i32 = arith.constant 0 : i32
    %c0_i32_0 = arith.constant 0 : i32
    return %arg0, %c0_i32 : i32, i32
  }
  func.func @transform_1(%arg0: i32) -> (i32, i32) {
    %c0_i32 = arith.constant 0 : i32
    %c0_i32_0 = arith.constant 0 : i32
    %c0_i32_1 = arith.constant 0 : i32
    return %c0_i32, %c0_i32_0 : i32, i32
  }
  func.func @transform_2(%arg0: i32) -> (i32, i32) {
    %c0_i32 = arith.constant 0 : i32
    %c0_i32_0 = arith.constant 0 : i32
    %c0_i32_1 = arith.constant 0 : i32
    return %c0_i32, %c0_i32_0 : i32, i32
  }
  func.func @transform_3(%arg0: i32) -> (i32, i32) {
    %c0_i32 = arith.constant 0 : i32
    %c0_i32_0 = arith.constant 0 : i32
    %c0_i32_1 = arith.constant 0 : i32
    return %c0_i32, %c0_i32_0 : i32, i32
  }
  func.func @transform_4(%arg0: i32) -> (i32, i32) {
    %c0_i32 = arith.constant 0 : i32
    %c0_i32_0 = arith.constant 0 : i32
    %c0_i32_1 = arith.constant 0 : i32
    return %c0_i32, %c0_i32_0 : i32, i32
  }
  func.func @transform_5(%arg0: i32) -> (i32, i32) {
    %c0_i32 = arith.constant 0 : i32
    %c0_i32_0 = arith.constant 0 : i32
    %c0_i32_1 = arith.constant 0 : i32
    return %c0_i32, %c0_i32_0 : i32, i32
  }
  func.func @transform_6(%arg0: i32) -> (i32, i32) {
    %c0_i32 = arith.constant 0 : i32
    %c0_i32_0 = arith.constant 0 : i32
    %c0_i32_1 = arith.constant 0 : i32
    return %c0_i32, %c0_i32_0 : i32, i32
  }
  func.func @transform_7(%arg0: i32) -> (i32, i32) {
    %c0_i32 = arith.constant 0 : i32
    %c0_i32_0 = arith.constant 0 : i32
    %c0_i32_1 = arith.constant 0 : i32
    return %c0_i32, %c0_i32_0 : i32, i32
  }
  func.func @transform_8(%arg0: i32) -> (i32, i32) {
    %c0_i32 = arith.constant 0 : i32
    %c0_i32_0 = arith.constant 0 : i32
    %c0_i32_1 = arith.constant 0 : i32
    return %c0_i32, %c0_i32_0 : i32, i32
  }
  func.func @transform_9(%arg0: i32) -> (i32, i32) {
    %c0_i32 = arith.constant 0 : i32
    %c0_i32_0 = arith.constant 0 : i32
    %c0_i32_1 = arith.constant 0 : i32
    return %c0_i32, %c0_i32_0 : i32, i32
  }
  func.func @transform_10(%arg0: i32) -> (i32, i32) {
    %c0_i32 = arith.constant 0 : i32
    %c0_i32_0 = arith.constant 0 : i32
    %c0_i32_1 = arith.constant 0 : i32
    return %c0_i32, %c0_i32_0 : i32, i32
  }
  func.func @transform_11(%arg0: i32) -> (i32, i32) {
    %c0_i32 = arith.constant 0 : i32
    %c0_i32_0 = arith.constant 0 : i32
    %c0_i32_1 = arith.constant 0 : i32
    return %c0_i32, %c0_i32_0 : i32, i32
  }
  func.func @transform_12(%arg0: i32) -> (i32, i32) {
    %c0_i32 = arith.constant 0 : i32
    %c0_i32_0 = arith.constant 0 : i32
    %c0_i32_1 = arith.constant 0 : i32
    return %c0_i32, %c0_i32_0 : i32, i32
  }
  func.func @transform_13(%arg0: i32) -> (i32, i32) {
    %c0_i32 = arith.constant 0 : i32
    %c0_i32_0 = arith.constant 0 : i32
    %c0_i32_1 = arith.constant 0 : i32
    return %c0_i32, %c0_i32_0 : i32, i32
  }
  func.func @transform_14(%arg0: i32) -> (i32, i32) {
    %c0_i32 = arith.constant 0 : i32
    %c0_i32_0 = arith.constant 0 : i32
    %c0_i32_1 = arith.constant 0 : i32
    return %c0_i32, %c0_i32_0 : i32, i32
  }
  func.func @transform_15(%arg0: i32) -> (i32, i32) {
    %c0_i32 = arith.constant 0 : i32
    %c0_i32_0 = arith.constant 0 : i32
    %c0_i32_1 = arith.constant 0 : i32
    return %c0_i32, %c0_i32_0 : i32, i32
  }
  func.func @transform_16(%arg0: i32) -> (i32, i32) {
    %c0_i32 = arith.constant 0 : i32
    %c0_i32_0 = arith.constant 0 : i32
    %c0_i32_1 = arith.constant 0 : i32
    return %c0_i32, %c0_i32_0 : i32, i32
  }
  func.func @transform_17(%arg0: i32) -> (i32, i32) {
    %c0_i32 = arith.constant 0 : i32
    %c0_i32_0 = arith.constant 0 : i32
    return %arg0, %c0_i32 : i32, i32
  }
}

</mosaic_0001>

<llo_original>
// kernel: tpu_custom_call.1
$region0: #{tpu_custom_call.1}
  #allocation0 [shape = 'u32[]', space=smem, size = 0x4, offset = 0x4, fixed_abs, tag = 'smem constant byte address 0x4 - core index']
  #allocation1 [shape = 'u32[72,128]{1,0:T(1,128)}', space=vmem, size = 0x9000, scoped, tag = 'internal scratch']
  %s0 = inlined_call_operand.vmem [shape: f32[16,32], index: 0, kind: input, shape index: {}]
  %s1 = inlined_call_operand.hbm [shape: f32[1,32], index: 1, kind: input, shape index: {}]
  %s2 = inlined_call_operand.vmem [shape: f32[1,32], index: 2, kind: input, shape index: {}]
  %s3 = inlined_call_operand.vmem [shape: bf16[32,32], index: 3, kind: input, shape index: {}]
  %s4 = inlined_call_operand.vmem [shape: f32[1,32], index: 4, kind: input, shape index: {}]
  %s5 = inlined_call_operand.vmem [shape: bf16[32,32], index: 5, kind: input, shape index: {}]
  %s6 = inlined_call_operand.vmem [shape: f32[1,32], index: 6, kind: input, shape index: {}]
  %s7 = inlined_call_operand.hbm [shape: bf16[32,32], index: 7, kind: input, shape index: {}]
  %s8 = inlined_call_operand.vmem [shape: f32[1,32], index: 8, kind: input, shape index: {}]
  %s9 = inlined_call_operand.hbm [shape: bf16[32,32], index: 9, kind: input, shape index: {}]
  %s10 = inlined_call_operand.vmem [shape: f32[1,32], index: 10, kind: input, shape index: {}]
  %s11 = inlined_call_operand.vmem [shape: f32[1,32], index: 11, kind: input, shape index: {}]
  %s12 = inlined_call_operand.vmem [shape: f32[1,32], index: 12, kind: input, shape index: {}]
  %s13 = inlined_call_operand.hbm [shape: bf16[32,64], index: 13, kind: input, shape index: {}]
  %s14 = inlined_call_operand.vmem [shape: f32[1,64], index: 14, kind: input, shape index: {}]
  %s15 = inlined_call_operand.vmem [shape: bf16[64,32], index: 15, kind: input, shape index: {}]
  %s16 = inlined_call_operand.vmem [shape: f32[1,32], index: 16, kind: input, shape index: {}]
  %s17 = inlined_call_operand.hbm [shape: f32[16,32], index: 17, kind: output, shape index: {}]
  %s18 = sld [smem:[#allocation0]]
  $region117: #{tpu_custom_call.1} parent=0
    _
  %s20 = ssub.s32 1, %s18
  %s21 = scalar_select 0, %s20, %s18
  $region1: #{tpu_custom_call.1} parent=0
    #allocation2 [shape = 'u8[512]{0}', space=vmem, size = 0x400, scoped, tag = 'input window, operand 1, single buffered']
    #allocation3 [shape = 's32[2]{0}', space=sflag, size = 0x8, scoped, tag = 'scoped memory for tpu_custom_call.1']
    #allocation4 [shape = 's32[2]{0}', space=sflag, size = 0x8, scoped, tag = 'scoped memory for tpu_custom_call.1']
    #allocation5 [shape = 'u8[8192]{0}', space=vmem, size = 0x2000, scoped, tag = 'input window, operand 7, single buffered']
    #allocation6 [shape = 's32[1]{0}', space=sflag, size = 0x4, scoped, tag = 'scoped memory for tpu_custom_call.1']
    #allocation7 [shape = 'u8[8192]{0}', space=vmem, size = 0x2000, scoped, tag = 'input window, operand 9, single buffered']
    #allocation8 [shape = 'u8[8192]{0}', space=vmem, size = 0x2000, scoped, tag = 'input window, operand 13, single buffered']
    #allocation9 [shape = 's32[1]{0}', space=sflag, size = 0x4, scoped, tag = 'scoped memory for tpu_custom_call.1']
    #allocation10 [shape = 'u8[8192]{0}', space=vmem, size = 0x2000, scoped, tag = 'output window, operand 0']
    %22 = vsyncpa [#allocation3], 0
    %23 = vsyncpa [#allocation6], 0
    %24 = vsyncpa [#allocation9], 0
    %25 = vsyncpa [#allocation4], 0
    %s26 = scalar_lea.sflag [#allocation4], 1
    %27 = vsyncpa %s26, 0
    loop: start=0, step=1, limit=4
    $region2: #{tpu_custom_call.1} parent=1 // loop_pre_header
      _
    $region3: #{tpu_custom_call.1} parent=1 // loop_header
      %s29 = sphi 0, %s33
      %p30 = scmp.ge.s32.totalorder %s29, 4
      %s39 = sphi 0, %s41
      %s42 = sphi 0, %s39
      %s43 = sphi 0, %s42
      %s59 = sphi 0, %s43
      %s63 = sphi 0, %s63
      %s65 = sphi 0, %s63
      %s66 = sphi 0, %s65
      %s80 = sphi 0, %s66
      %s84 = sphi 0, %s84
      %s86 = sphi 0, %s84
      %s87 = sphi 0, %s86
      %s101 = sphi 0, %s87
      %s105 = sphi 0, %s105
      %s107 = sphi 0, %s105
      %s108 = sphi 0, %s107
      %s122 = sphi 0, %s108
      %s126 = sphi 0, %s126
      %s128 = sphi 0, %s126
      %s129 = sphi 0, %s128
      %s143 = sphi 0, %s129
      %s147 = sphi 0, %s147
      %s149 = sphi 0, %s147
      %s150 = sphi 0, %s149
      %s164 = sphi 0, %s150
      %s168 = sphi 0, %s168
      %s170 = sphi 0, %s168
      %s171 = sphi 0, %s170
      %s185 = sphi 0, %s171
      %s189 = sphi 0, %s189
      %s191 = sphi 0, %s189
      %s192 = sphi 0, %s191
      %s206 = sphi 0, %s192
      %s210 = sphi 0, %s210
      %s212 = sphi 0, %s210
      %s213 = sphi 0, %s212
      %s227 = sphi 0, %s213
      %s231 = sphi 0, %s231
      %s233 = sphi 0, %s231
      %s234 = sphi 0, %s233
      %s248 = sphi 0, %s234
      %s252 = sphi 0, %s252
      %s254 = sphi 0, %s252
      %s255 = sphi 0, %s254
      %s269 = sphi 0, %s255
      %s273 = sphi 0, %s273
      %s275 = sphi 0, %s273
      %s276 = sphi 0, %s275
      %s290 = sphi 0, %s276
      %s294 = sphi 0, %s294
      %s296 = sphi 0, %s294
      %s297 = sphi 0, %s296
      %s311 = sphi 0, %s297
      %s315 = sphi 0, %s315
      %s317 = sphi 0, %s315
      %s318 = sphi 0, %s317
      %s332 = sphi 0, %s318
      %s336 = sphi 0, %s336
      %s338 = sphi 0, %s336
      %s339 = sphi 0, %s338
      %s353 = sphi 0, %s339
      %s357 = sphi 0, %s357
      %s359 = sphi 0, %s357
      %s360 = sphi 0, %s359
      %s374 = sphi 0, %s360
      %s378 = sphi 0, %s378
      %s380 = sphi 0, %s378
      %s381 = sphi 0, %s380
      %s395 = sphi 0, %s381
      %s401 = sphi 0, %s403
      %s404 = sphi 0, %s401
      %s405 = sphi 0, %s404
      %s421 = sphi 0, %s405
    $region4: #{tpu_custom_call.1} parent=1 // loop_header_branch
      %32 = sbr.rel (%p30) target = $region8
    $region5: #{tpu_custom_call.1} parent=1 // loop_body
      %s34 = ssub.s32 %s29, 1
      %s35 = ssub.s32 %s29, 2
      %s36 = sadd.s32 %s29, 1
      %s37 = ssub.s32 %s29, %s36
      %p38 = scmp.eq.s32.totalorder %s37, 0
      %s40 = sadd.s32 %s39, 1
      %s41 = scalar_select %p38, %s39, %s40
      %p44 = pneg %p38
      %p45 = scmp.eq.s32.totalorder %s29, 1
      %p46 = por %p44, %p45
      %p47 = scmp.ne.s32.totalorder %s39, %s42
      %p48 = scmp.eq.s32.totalorder %s29, 0
      %p49 = por %p47, %p48
      %p50 = scmp.ne.s32.totalorder %s39, %s42
      %p51 = scmp.eq.s32.totalorder %s34, 1
      %p52 = por %p50, %p51
      %p53 = scmp.ne.s32.totalorder %s42, %s43
      %p54 = scmp.eq.s32.totalorder %s34, 0
      %p55 = por %p53, %p54
      %p56 = scmp.ne.s32.totalorder %s42, %s43
      %p57 = scmp.eq.s32.totalorder %s35, 1
      %p58 = por %p56, %p57
      %p60 = scmp.ne.s32.totalorder %s43, %s59
      %p61 = scmp.eq.s32.totalorder %s35, 0
      %p62 = por %p60, %p61
      %s64 = sadd.s32 %s63, 1
      %p67 = scmp.eq.s32.totalorder %s29, 1
      %p68 = scmp.ne.s32.totalorder %s63, %s65
      %p69 = scmp.eq.s32.totalorder %s29, 0
      %p70 = por %p68, %p69
      %p71 = scmp.ne.s32.totalorder %s63, %s65
      %p72 = scmp.eq.s32.totalorder %s34, 1
      %p73 = por %p71, %p72
      %p74 = scmp.ne.s32.totalorder %s65, %s66
      %p75 = scmp.eq.s32.totalorder %s34, 0
      %p76 = por %p74, %p75
      %p77 = scmp.ne.s32.totalorder %s65, %s66
      %p78 = scmp.eq.s32.totalorder %s35, 1
      %p79 = por %p77, %p78
      %p81 = scmp.ne.s32.totalorder %s66, %s80
      %p82 = scmp.eq.s32.totalorder %s35, 0
      %p83 = por %p81, %p82
      %s85 = sadd.s32 %s84, 1
      %p88 = scmp.eq.s32.totalorder %s29, 1
      %p89 = scmp.ne.s32.totalorder %s84, %s86
      %p90 = scmp.eq.s32.totalorder %s29, 0
      %p91 = por %p89, %p90
      %p92 = scmp.ne.s32.totalorder %s84, %s86
      %p93 = scmp.eq.s32.totalorder %s34, 1
      %p94 = por %p92, %p93
      %p95 = scmp.ne.s32.totalorder %s86, %s87
      %p96 = scmp.eq.s32.totalorder %s34, 0
      %p97 = por %p95, %p96
      %p98 = scmp.ne.s32.totalorder %s86, %s87
      %p99 = scmp.eq.s32.totalorder %s35, 1
      %p100 = por %p98, %p99
      %p102 = scmp.ne.s32.totalorder %s87, %s101
      %p103 = scmp.eq.s32.totalorder %s35, 0
      %p104 = por %p102, %p103
      %s106 = sadd.s32 %s105, 1
      %p109 = scmp.eq.s32.totalorder %s29, 1
      %p110 = scmp.ne.s32.totalorder %s105, %s107
      %p111 = scmp.eq.s32.totalorder %s29, 0
      %p112 = por %p110, %p111
      %p113 = scmp.ne.s32.totalorder %s105, %s107
      %p114 = scmp.eq.s32.totalorder %s34, 1
      %p115 = por %p113, %p114
      %p116 = scmp.ne.s32.totalorder %s107, %s108
      %p117 = scmp.eq.s32.totalorder %s34, 0
      %p118 = por %p116, %p117
      %p119 = scmp.ne.s32.totalorder %s107, %s108
      %p120 = scmp.eq.s32.totalorder %s35, 1
      %p121 = por %p119, %p120
      %p123 = scmp.ne.s32.totalorder %s108, %s122
      %p124 = scmp.eq.s32.totalorder %s35, 0
      %p125 = por %p123, %p124
      %s127 = sadd.s32 %s126, 1
      %p130 = scmp.eq.s32.totalorder %s29, 1
      %p131 = scmp.ne.s32.totalorder %s126, %s128
      %p132 = scmp.eq.s32.totalorder %s29, 0
      %p133 = por %p131, %p132
      %p134 = scmp.ne.s32.totalorder %s126, %s128
      %p135 = scmp.eq.s32.totalorder %s34, 1
      %p136 = por %p134, %p135
      %p137 = scmp.ne.s32.totalorder %s128, %s129
      %p138 = scmp.eq.s32.totalorder %s34, 0
      %p139 = por %p137, %p138
      %p140 = scmp.ne.s32.totalorder %s128, %s129
      %p141 = scmp.eq.s32.totalorder %s35, 1
      %p142 = por %p140, %p141
      %p144 = scmp.ne.s32.totalorder %s129, %s143
      %p145 = scmp.eq.s32.totalorder %s35, 0
      %p146 = por %p144, %p145
      %s148 = sadd.s32 %s147, 1
      %p151 = scmp.eq.s32.totalorder %s29, 1
      %p152 = scmp.ne.s32.totalorder %s147, %s149
      %p153 = scmp.eq.s32.totalorder %s29, 0
      %p154 = por %p152, %p153
      %p155 = scmp.ne.s32.totalorder %s147, %s149
      %p156 = scmp.eq.s32.totalorder %s34, 1
      %p157 = por %p155, %p156
      %p158 = scmp.ne.s32.totalorder %s149, %s150
      %p159 = scmp.eq.s32.totalorder %s34, 0
      %p160 = por %p158, %p159
      %p161 = scmp.ne.s32.totalorder %s149, %s150
      %p162 = scmp.eq.s32.totalorder %s35, 1
      %p163 = por %p161, %p162
      %p165 = scmp.ne.s32.totalorder %s150, %s164
      %p166 = scmp.eq.s32.totalorder %s35, 0
      %p167 = por %p165, %p166
      %s169 = sadd.s32 %s168, 1
      %p172 = scmp.eq.s32.totalorder %s29, 1
      %p173 = scmp.ne.s32.totalorder %s168, %s170
      %p174 = scmp.eq.s32.totalorder %s29, 0
      %p175 = por %p173, %p174
      %p176 = scmp.ne.s32.totalorder %s168, %s170
      %p177 = scmp.eq.s32.totalorder %s34, 1
      %p178 = por %p176, %p177
      %p179 = scmp.ne.s32.totalorder %s170, %s171
      %p180 = scmp.eq.s32.totalorder %s34, 0
      %p181 = por %p179, %p180
      %p182 = scmp.ne.s32.totalorder %s170, %s171
      %p183 = scmp.eq.s32.totalorder %s35, 1
      %p184 = por %p182, %p183
      %p186 = scmp.ne.s32.totalorder %s171, %s185
      %p187 = scmp.eq.s32.totalorder %s35, 0
      %p188 = por %p186, %p187
      %s190 = sadd.s32 %s189, 1
      %p193 = scmp.eq.s32.totalorder %s29, 1
      %p194 = scmp.ne.s32.totalorder %s189, %s191
      %p195 = scmp.eq.s32.totalorder %s29, 0
      %p196 = por %p194, %p195
      %p197 = scmp.ne.s32.totalorder %s189, %s191
      %p198 = scmp.eq.s32.totalorder %s34, 1
      %p199 = por %p197, %p198
      %p200 = scmp.ne.s32.totalorder %s191, %s192
      %p201 = scmp.eq.s32.totalorder %s34, 0
      %p202 = por %p200, %p201
      %p203 = scmp.ne.s32.totalorder %s191, %s192
      %p204 = scmp.eq.s32.totalorder %s35, 1
      %p205 = por %p203, %p204
      %p207 = scmp.ne.s32.totalorder %s192, %s206
      %p208 = scmp.eq.s32.totalorder %s35, 0
      %p209 = por %p207, %p208
      %s211 = sadd.s32 %s210, 1
      %p214 = scmp.eq.s32.totalorder %s29, 1
      %p215 = scmp.ne.s32.totalorder %s210, %s212
      %p216 = scmp.eq.s32.totalorder %s29, 0
      %p217 = por %p215, %p216
      %p218 = scmp.ne.s32.totalorder %s210, %s212
      %p219 = scmp.eq.s32.totalorder %s34, 1
      %p220 = por %p218, %p219
      %p221 = scmp.ne.s32.totalorder %s212, %s213
      %p222 = scmp.eq.s32.totalorder %s34, 0
      %p223 = por %p221, %p222
      %p224 = scmp.ne.s32.totalorder %s212, %s213
      %p225 = scmp.eq.s32.totalorder %s35, 1
      %p226 = por %p224, %p225
      %p228 = scmp.ne.s32.totalorder %s213, %s227
      %p229 = scmp.eq.s32.totalorder %s35, 0
      %p230 = por %p228, %p229
      %s232 = sadd.s32 %s231, 1
      %p235 = scmp.eq.s32.totalorder %s29, 1
      %p236 = scmp.ne.s32.totalorder %s231, %s233
      %p237 = scmp.eq.s32.totalorder %s29, 0
      %p238 = por %p236, %p237
      %p239 = scmp.ne.s32.totalorder %s231, %s233
      %p240 = scmp.eq.s32.totalorder %s34, 1
      %p241 = por %p239, %p240
      %p242 = scmp.ne.s32.totalorder %s233, %s234
      %p243 = scmp.eq.s32.totalorder %s34, 0
      %p244 = por %p242, %p243
      %p245 = scmp.ne.s32.totalorder %s233, %s234
      %p246 = scmp.eq.s32.totalorder %s35, 1
      %p247 = por %p245, %p246
      %p249 = scmp.ne.s32.totalorder %s234, %s248
      %p250 = scmp.eq.s32.totalorder %s35, 0
      %p251 = por %p249, %p250
      %s253 = sadd.s32 %s252, 1
      %p256 = scmp.eq.s32.totalorder %s29, 1
      %p257 = scmp.ne.s32.totalorder %s252, %s254
      %p258 = scmp.eq.s32.totalorder %s29, 0
      %p259 = por %p257, %p258
      %p260 = scmp.ne.s32.totalorder %s252, %s254
      %p261 = scmp.eq.s32.totalorder %s34, 1
      %p262 = por %p260, %p261
      %p263 = scmp.ne.s32.totalorder %s254, %s255
      %p264 = scmp.eq.s32.totalorder %s34, 0
      %p265 = por %p263, %p264
      %p266 = scmp.ne.s32.totalorder %s254, %s255
      %p267 = scmp.eq.s32.totalorder %s35, 1
      %p268 = por %p266, %p267
      %p270 = scmp.ne.s32.totalorder %s255, %s269
      %p271 = scmp.eq.s32.totalorder %s35, 0
      %p272 = por %p270, %p271
      %s274 = sadd.s32 %s273, 1
      %p277 = scmp.eq.s32.totalorder %s29, 1
      %p278 = scmp.ne.s32.totalorder %s273, %s275
      %p279 = scmp.eq.s32.totalorder %s29, 0
      %p280 = por %p278, %p279
      %p281 = scmp.ne.s32.totalorder %s273, %s275
      %p282 = scmp.eq.s32.totalorder %s34, 1
      %p283 = por %p281, %p282
      %p284 = scmp.ne.s32.totalorder %s275, %s276
      %p285 = scmp.eq.s32.totalorder %s34, 0
      %p286 = por %p284, %p285
      %p287 = scmp.ne.s32.totalorder %s275, %s276
      %p288 = scmp.eq.s32.totalorder %s35, 1
      %p289 = por %p287, %p288
      %p291 = scmp.ne.s32.totalorder %s276, %s290
      %p292 = scmp.eq.s32.totalorder %s35, 0
      %p293 = por %p291, %p292
      %s295 = sadd.s32 %s294, 1
      %p298 = scmp.eq.s32.totalorder %s29, 1
      %p299 = scmp.ne.s32.totalorder %s294, %s296
      %p300 = scmp.eq.s32.totalorder %s29, 0
      %p301 = por %p299, %p300
      %p302 = scmp.ne.s32.totalorder %s294, %s296
      %p303 = scmp.eq.s32.totalorder %s34, 1
      %p304 = por %p302, %p303
      %p305 = scmp.ne.s32.totalorder %s296, %s297
      %p306 = scmp.eq.s32.totalorder %s34, 0
      %p307 = por %p305, %p306
      %p308 = scmp.ne.s32.totalorder %s296, %s297
      %p309 = scmp.eq.s32.totalorder %s35, 1
      %p310 = por %p308, %p309
      %p312 = scmp.ne.s32.totalorder %s297, %s311
      %p313 = scmp.eq.s32.totalorder %s35, 0
      %p314 = por %p312, %p313
      %s316 = sadd.s32 %s315, 1
      %p319 = scmp.eq.s32.totalorder %s29, 1
      %p320 = scmp.ne.s32.totalorder %s315, %s317
      %p321 = scmp.eq.s32.totalorder %s29, 0
      %p322 = por %p320, %p321
      %p323 = scmp.ne.s32.totalorder %s315, %s317
      %p324 = scmp.eq.s32.totalorder %s34, 1
      %p325 = por %p323, %p324
      %p326 = scmp.ne.s32.totalorder %s317, %s318
      %p327 = scmp.eq.s32.totalorder %s34, 0
      %p328 = por %p326, %p327
      %p329 = scmp.ne.s32.totalorder %s317, %s318
      %p330 = scmp.eq.s32.totalorder %s35, 1
      %p331 = por %p329, %p330
      %p333 = scmp.ne.s32.totalorder %s318, %s332
      %p334 = scmp.eq.s32.totalorder %s35, 0
      %p335 = por %p333, %p334
      %s337 = sadd.s32 %s336, 1
      %p340 = scmp.eq.s32.totalorder %s29, 1
      %p341 = scmp.ne.s32.totalorder %s336, %s338
      %p342 = scmp.eq.s32.totalorder %s29, 0
      %p343 = por %p341, %p342
      %p344 = scmp.ne.s32.totalorder %s336, %s338
      %p345 = scmp.eq.s32.totalorder %s34, 1
      %p346 = por %p344, %p345
      %p347 = scmp.ne.s32.totalorder %s338, %s339
      %p348 = scmp.eq.s32.totalorder %s34, 0
      %p349 = por %p347, %p348
      %p350 = scmp.ne.s32.totalorder %s338, %s339
      %p351 = scmp.eq.s32.totalorder %s35, 1
      %p352 = por %p350, %p351
      %p354 = scmp.ne.s32.totalorder %s339, %s353
      %p355 = scmp.eq.s32.totalorder %s35, 0
      %p356 = por %p354, %p355
      %s358 = sadd.s32 %s357, 1
      %p361 = scmp.eq.s32.totalorder %s29, 1
      %p362 = scmp.ne.s32.totalorder %s357, %s359
      %p363 = scmp.eq.s32.totalorder %s29, 0
      %p364 = por %p362, %p363
      %p365 = scmp.ne.s32.totalorder %s357, %s359
      %p366 = scmp.eq.s32.totalorder %s34, 1
      %p367 = por %p365, %p366
      %p368 = scmp.ne.s32.totalorder %s359, %s360
      %p369 = scmp.eq.s32.totalorder %s34, 0
      %p370 = por %p368, %p369
      %p371 = scmp.ne.s32.totalorder %s359, %s360
      %p372 = scmp.eq.s32.totalorder %s35, 1
      %p373 = por %p371, %p372
      %p375 = scmp.ne.s32.totalorder %s360, %s374
      %p376 = scmp.eq.s32.totalorder %s35, 0
      %p377 = por %p375, %p376
      %s379 = sadd.s32 %s378, 1
      %p382 = scmp.eq.s32.totalorder %s29, 1
      %p383 = scmp.ne.s32.totalorder %s378, %s380
      %p384 = scmp.eq.s32.totalorder %s29, 0
      %p385 = por %p383, %p384
      %p386 = scmp.ne.s32.totalorder %s378, %s380
      %p387 = scmp.eq.s32.totalorder %s34, 1
      %p388 = por %p386, %p387
      %p389 = scmp.ne.s32.totalorder %s380, %s381
      %p390 = scmp.eq.s32.totalorder %s34, 0
      %p391 = por %p389, %p390
      %p392 = scmp.ne.s32.totalorder %s380, %s381
      %p393 = scmp.eq.s32.totalorder %s35, 1
      %p394 = por %p392, %p393
      %p396 = scmp.ne.s32.totalorder %s381, %s395
      %p397 = scmp.eq.s32.totalorder %s35, 0
      %p398 = por %p396, %p397
      %s399 = ssub.s32 %s29, %s36
      %p400 = scmp.eq.s32.totalorder %s399, 0
      %s402 = sadd.s32 %s401, 1
      %s403 = scalar_select %p400, %s401, %s402
      %p406 = pneg %p400
      %p407 = scmp.eq.s32.totalorder %s29, 1
      %p408 = por %p406, %p407
      %p409 = scmp.ne.s32.totalorder %s401, %s404
      %p410 = scmp.eq.s32.totalorder %s29, 0
      %p411 = por %p409, %p410
      %p412 = scmp.ne.s32.totalorder %s401, %s404
      %p413 = scmp.eq.s32.totalorder %s34, 1
      %p414 = por %p412, %p413
      %p415 = scmp.ne.s32.totalorder %s404, %s405
      %p416 = scmp.eq.s32.totalorder %s34, 0
      %p417 = por %p415, %p416
      %p418 = scmp.ne.s32.totalorder %s404, %s405
      %p419 = scmp.eq.s32.totalorder %s35, 1
      %p420 = por %p418, %p419
      %p422 = scmp.ne.s32.totalorder %s405, %s421
      %p423 = scmp.eq.s32.totalorder %s35, 0
      %p424 = por %p422, %p423
      %p425 = scmp.le.s32.totalorder 1, %s29
      %p426 = scmp.lt.s32.totalorder %s29, 3
      %p427 = pnand %p425, %p426
      %p428 = pneg %p427
      // Predicated region
      $region9: #{tpu_custom_call.1} parent=5 // pred_check
        _
      $region10: #{tpu_custom_call.1} parent=5 // pred_check_branch
        %430 = sbr.rel (%p427) target = $region12
      $region11: #{tpu_custom_call.1} parent=5 // pred_region
        %s431 = ssub.s32 %s29, 1
        // Predicated region
        $region13: #{tpu_custom_call.1} parent=11 // pred_check
          %p432 = pneg %p76
        $region14: #{tpu_custom_call.1} parent=11 // pred_check_branch
          %434 = sbr.rel (%p432) target = $region16
        $region15: #{tpu_custom_call.1} parent=11 // pred_region
          %436 = vsyncadd [#allocation3], 0
          %s438 = sshll.u32 %s1, 4
          %s439 = int_to_ptr.hbm [resolvable:$true] %s438
          %s440 = sshll.u32 [#allocation2], 4
          %s441 = int_to_ptr.vmem [resolvable:$true] %s440
          %443 = dma.hbm_to_vmem [thread:$0]  %s439, 16, %s441, [#allocation3]
        $region16: #{tpu_custom_call.1} parent=11 // pred_fallthru
          _
        // Predicated region
        $region17: #{tpu_custom_call.1} parent=11 // pred_check
          %p444 = pneg %p97
        $region18: #{tpu_custom_call.1} parent=11 // pred_check_branch
          %446 = sbr.rel (%p444) target = $region20
        $region19: #{tpu_custom_call.1} parent=11 // pred_region
          _
        $region20: #{tpu_custom_call.1} parent=11 // pred_fallthru
          _
        // Predicated region
        $region21: #{tpu_custom_call.1} parent=11 // pred_check
          %p447 = pneg %p118
        $region22: #{tpu_custom_call.1} parent=11 // pred_check_branch
          %449 = sbr.rel (%p447) target = $region24
        $region23: #{tpu_custom_call.1} parent=11 // pred_region
          _
        $region24: #{tpu_custom_call.1} parent=11 // pred_fallthru
          _
        // Predicated region
        $region25: #{tpu_custom_call.1} parent=11 // pred_check
          %p450 = pneg %p139
        $region26: #{tpu_custom_call.1} parent=11 // pred_check_branch
          %452 = sbr.rel (%p450) target = $region28
        $region27: #{tpu_custom_call.1} parent=11 // pred_region
          _
        $region28: #{tpu_custom_call.1} parent=11 // pred_fallthru
          _
        // Predicated region
        $region29: #{tpu_custom_call.1} parent=11 // pred_check
          %p453 = pneg %p160
        $region30: #{tpu_custom_call.1} parent=11 // pred_check_branch
          %455 = sbr.rel (%p453) target = $region32
        $region31: #{tpu_custom_call.1} parent=11 // pred_region
          _
        $region32: #{tpu_custom_call.1} parent=11 // pred_fallthru
          _
        // Predicated region
        $region33: #{tpu_custom_call.1} parent=11 // pred_check
          %p456 = pneg %p181
        $region34: #{tpu_custom_call.1} parent=11 // pred_check_branch
          %458 = sbr.rel (%p456) target = $region36
        $region35: #{tpu_custom_call.1} parent=11 // pred_region
          _
        $region36: #{tpu_custom_call.1} parent=11 // pred_fallthru
          _
        // Predicated region
        $region37: #{tpu_custom_call.1} parent=11 // pred_check
          %p459 = pneg %p202
        $region38: #{tpu_custom_call.1} parent=11 // pred_check_branch
          %461 = sbr.rel (%p459) target = $region40
        $region39: #{tpu_custom_call.1} parent=11 // pred_region
          %463 = vsyncadd [#allocation6], 0
          %s464 = sshll.u32 %s7, 4
          %s465 = int_to_ptr.hbm [resolvable:$true] %s464
          %s466 = sshll.u32 [#allocation5], 4
          %s467 = int_to_ptr.vmem [resolvable:$true] %s466
          %472 = dma.hbm_to_vmem [thread:$0]  %s465, 256, %s467, [#allocation6], 64, 64, 4
        $region40: #{tpu_custom_call.1} parent=11 // pred_fallthru
          _
        // Predicated region
        $region41: #{tpu_custom_call.1} parent=11 // pred_check
          %p473 = pneg %p223
        $region42: #{tpu_custom_call.1} parent=11 // pred_check_branch
          %475 = sbr.rel (%p473) target = $region44
        $region43: #{tpu_custom_call.1} parent=11 // pred_region
          _
        $region44: #{tpu_custom_call.1} parent=11 // pred_fallthru
          _
        // Predicated region
        $region45: #{tpu_custom_call.1} parent=11 // pred_check
          %p476 = pneg %p244
        $region46: #{tpu_custom_call.1} parent=11 // pred_check_branch
          %478 = sbr.rel (%p476) target = $region48
        $region47: #{tpu_custom_call.1} parent=11 // pred_region
          %480 = vsyncadd [#allocation6], 0
          %s481 = sshll.u32 %s9, 4
          %s482 = int_to_ptr.hbm [resolvable:$true] %s481
          %s483 = sshll.u32 [#allocation7], 4
          %s484 = int_to_ptr.vmem [resolvable:$true] %s483
          %489 = dma.hbm_to_vmem [thread:$0]  %s482, 256, %s484, [#allocation6], 64, 64, 4
        $region48: #{tpu_custom_call.1} parent=11 // pred_fallthru
          _
        // Predicated region
        $region49: #{tpu_custom_call.1} parent=11 // pred_check
          %p490 = pneg %p265
        $region50: #{tpu_custom_call.1} parent=11 // pred_check_branch
          %492 = sbr.rel (%p490) target = $region52
        $region51: #{tpu_custom_call.1} parent=11 // pred_region
          _
        $region52: #{tpu_custom_call.1} parent=11 // pred_fallthru
          _
        // Predicated region
        $region53: #{tpu_custom_call.1} parent=11 // pred_check
          %p493 = pneg %p286
        $region54: #{tpu_custom_call.1} parent=11 // pred_check_branch
          %495 = sbr.rel (%p493) target = $region56
        $region55: #{tpu_custom_call.1} parent=11 // pred_region
          _
        $region56: #{tpu_custom_call.1} parent=11 // pred_fallthru
          _
        // Predicated region
        $region57: #{tpu_custom_call.1} parent=11 // pred_check
          %p496 = pneg %p307
        $region58: #{tpu_custom_call.1} parent=11 // pred_check_branch
          %498 = sbr.rel (%p496) target = $region60
        $region59: #{tpu_custom_call.1} parent=11 // pred_region
          _
        $region60: #{tpu_custom_call.1} parent=11 // pred_fallthru
          _
        // Predicated region
        $region61: #{tpu_custom_call.1} parent=11 // pred_check
          %p499 = pneg %p328
        $region62: #{tpu_custom_call.1} parent=11 // pred_check_branch
          %501 = sbr.rel (%p499) target = $region64
        $region63: #{tpu_custom_call.1} parent=11 // pred_region
          %503 = vsyncadd [#allocation9], 0
          %s504 = sshll.u32 %s13, 4
          %s505 = int_to_ptr.hbm [resolvable:$true] %s504
          %s506 = sshll.u32 [#allocation8], 4
          %s507 = int_to_ptr.vmem [resolvable:$true] %s506
          %512 = dma.hbm_to_vmem [thread:$0]  %s505, 256, %s507, [#allocation9], 64, 64, 4
        $region64: #{tpu_custom_call.1} parent=11 // pred_fallthru
          _
        // Predicated region
        $region65: #{tpu_custom_call.1} parent=11 // pred_check
          %p513 = pneg %p349
        $region66: #{tpu_custom_call.1} parent=11 // pred_check_branch
          %515 = sbr.rel (%p513) target = $region68
        $region67: #{tpu_custom_call.1} parent=11 // pred_region
          _
        $region68: #{tpu_custom_call.1} parent=11 // pred_fallthru
          _
        // Predicated region
        $region69: #{tpu_custom_call.1} parent=11 // pred_check
          %p516 = pneg %p370
        $region70: #{tpu_custom_call.1} parent=11 // pred_check_branch
          %518 = sbr.rel (%p516) target = $region72
        $region71: #{tpu_custom_call.1} parent=11 // pred_region
          _
        $region72: #{tpu_custom_call.1} parent=11 // pred_fallthru
          _
        // Predicated region
        $region73: #{tpu_custom_call.1} parent=11 // pred_check
          %p519 = pneg %p391
        $region74: #{tpu_custom_call.1} parent=11 // pred_check_branch
          %521 = sbr.rel (%p519) target = $region76
        $region75: #{tpu_custom_call.1} parent=11 // pred_region
          _
        $region76: #{tpu_custom_call.1} parent=11 // pred_fallthru
          _
      $region12: #{tpu_custom_call.1} parent=5 // pred_fallthru
        _
      %p522 = scmp.lt.s32.totalorder %s29, 2
      // Predicated region
      $region77: #{tpu_custom_call.1} parent=5 // pred_check
        %p523 = pneg %p522
      $region78: #{tpu_custom_call.1} parent=5 // pred_check_branch
        %525 = sbr.rel (%p523) target = $region80
      $region79: #{tpu_custom_call.1} parent=5 // pred_region
        // Predicated region
        $region81: #{tpu_custom_call.1} parent=79 // pred_check
          %p526 = pneg %p49
        $region82: #{tpu_custom_call.1} parent=79 // pred_check_branch
          %528 = sbr.rel (%p526) target = $region84
        $region83: #{tpu_custom_call.1} parent=79 // pred_region
          %p529 = scmp.lt.s32.totalorder %s29, 1
          %s530 = scalar_select %p529, %s29, 1
          %s531 = smul.addr %s530, 8
          %s532 = scalar_lea.vmem %s0, %s531
        $region84: #{tpu_custom_call.1} parent=79 // pred_fallthru
          _
      $region80: #{tpu_custom_call.1} parent=5 // pred_fallthru
        _
      %p533 = scmp.le.s32.totalorder 1, %s29
      %p534 = scmp.lt.s32.totalorder %s29, 3
      %p535 = pnand %p533, %p534
      %p536 = pneg %p535
      // Predicated region
      $region85: #{tpu_custom_call.1} parent=5 // pred_check
        _
      $region86: #{tpu_custom_call.1} parent=5 // pred_check_branch
        %538 = sbr.rel (%p535) target = $region88
      $region87: #{tpu_custom_call.1} parent=5 // pred_region
        %s539 = ssub.s32 %s29, 1
        // Predicated region
        $region89: #{tpu_custom_call.1} parent=87 // pred_check
          %p540 = pneg %p76
        $region90: #{tpu_custom_call.1} parent=87 // pred_check_branch
          %542 = sbr.rel (%p540) target = $region92
        $region91: #{tpu_custom_call.1} parent=87 // pred_region
          %544 = dma.done [#allocation3], 16
        $region92: #{tpu_custom_call.1} parent=87 // pred_fallthru
          _
        // Predicated region
        $region93: #{tpu_custom_call.1} parent=87 // pred_check
          %p545 = pneg %p202
        $region94: #{tpu_custom_call.1} parent=87 // pred_check_branch
          %547 = sbr.rel (%p545) target = $region96
        $region95: #{tpu_custom_call.1} parent=87 // pred_region
          %549 = dma.done [#allocation6], 256
        $region96: #{tpu_custom_call.1} parent=87 // pred_fallthru
          _
        // Predicated region
        $region97: #{tpu_custom_call.1} parent=87 // pred_check
          %p550 = pneg %p244
        $region98: #{tpu_custom_call.1} parent=87 // pred_check_branch
          %552 = sbr.rel (%p550) target = $region100
        $region99: #{tpu_custom_call.1} parent=87 // pred_region
          %554 = dma.done [#allocation6], 256
        $region100: #{tpu_custom_call.1} parent=87 // pred_fallthru
          _
        // Predicated region
        $region101: #{tpu_custom_call.1} parent=87 // pred_check
          %p555 = pneg %p328
        $region102: #{tpu_custom_call.1} parent=87 // pred_check_branch
          %557 = sbr.rel (%p555) target = $region104
        $region103: #{tpu_custom_call.1} parent=87 // pred_region
          %559 = dma.done [#allocation9], 256
        $region104: #{tpu_custom_call.1} parent=87 // pred_fallthru
          _
        %p560 = scmp.lt.s32.totalorder %s34, 1
        %s561 = scalar_select %p560, %s34, 1
        %s562 = smul.addr %s561, 8
        %s563 = scalar_lea.vmem %s0, %s562
        %p564 = pneg %p55
        %p565 = pneg %p52
        %p566 = pneg %p76
        %p567 = pneg %p73
        %p568 = pneg %p97
        %p569 = pneg %p94
        %p570 = pneg %p118
        %p571 = pneg %p115
        %p572 = pneg %p139
        %p573 = pneg %p136
        %p574 = pneg %p160
        %p575 = pneg %p157
        %p576 = pneg %p181
        %p577 = pneg %p178
        %p578 = pneg %p202
        %p579 = pneg %p199
        %p580 = pneg %p223
        %p581 = pneg %p220
        %p582 = pneg %p244
        %p583 = pneg %p241
        %p584 = pneg %p265
        %p585 = pneg %p262
        %p586 = pneg %p286
        %p587 = pneg %p283
        %p588 = pneg %p307
        %p589 = pneg %p304
        %p590 = pneg %p328
        %p591 = pneg %p325
        %p592 = pneg %p349
        %p593 = pneg %p346
        %p594 = pneg %p370
        %p595 = pneg %p367
        %p596 = pneg %p391
        %p597 = pneg %p388
        %p598 = pneg %p417
        %p599 = pneg %p414
        %s600 = sand.u32 %s404, 1
        %s601 = scalar_lea.sflag [#allocation4], %s600
        %s602 = sand.u32 %s404, 1
        %s603 = smul.addr %s602, 8
        %s604 = scalar_lea.vmem [#allocation10], %s603
        %p605 = scmp.lt.s32.totalorder %s34, 1
        %s606 = scalar_select %p605, %s34, 1
        %s607 = smul.addr %s606, 8
        %s608 = scalar_lea.vmem %s0, %s607
        %v610 = vld [vmem:[%s608] sm:$0xff]
        %v611 = vld [vmem:[#allocation2] sm:$0x1]
        %v612 = vld [vmem:[%s2] sm:$0x1]
        %vm613 = vcmask 261120
        %v614 = vsel %vm613, %v610, 0.0
        %615 = vadd.xlane.f32.xlu0 %v614
        %v616 = vpop.xlane.xlu0 %615
        %v617 = vrcp.pop 32.0
        %v618 = vmul.f32 32.0, %v617
        %v619 = vsub.f32 1.0, %v618
        %v620 = vmul.f32 %v617, %v619
        %v621 = vadd.f32 %v617, %v620
        %vm622 = vweird.f32 %v617
        %v623 = vsel %vm622, %v617, %v621
        %v624 = vmul.f32 %v616, %v623
        %v625 = vsub.f32 %v610, %v624
        %v626 = vmul.f32 %v625, %v625
        %v627 = vsel %vm613, %v626, 0.0
        %628 = vadd.xlane.f32.xlu0 %v627
        %v629 = vpop.xlane.xlu0 %628
        %v630 = vmul.f32 %v629, %v623
        %v631 = vadd.f32 %v630, 1e-05
        %v632 = vrsqrt.pop %v631
        %v633 = vmul.f32 %v632, %v631
        %v634 = vmul.f32 %v633, %v632
        %v635 = vmul.f32 0.5, %v634
        %v636 = vsub.f32 1.5, %v635
        %v637 = vmul.f32 %v632, %v636
        %vm638 = vweird.f32 %v631
        %vm639 = vweird.f32 %v632
        %vm640 = vmor %vm638, %vm639
        %v641 = vsel %vm640, %v632, %v637
        %v642 = vmul.f32 %v625, %v641
        %v644 = vperm.slane %v611, 0
        %v646 = vmul.f32 %v642, %v644
        %v648 = vperm.slane %v612, 0
        %v650 = vadd.f32 %v646, %v648
        %v651 = vpack.c.bf16 %v650, %v650
        %v652 = vld [vmem:[%s3] sm:$0xf]
        %v653 = vld [vmem:[%s3 + $0x4] sm:$0xf]
        %v654 = vld [vmem:[%s3 + $0x8] sm:$0xf]
        %v655 = vld [vmem:[%s3 + $0xc] sm:$0xf]
        %v656 = vld [vmem:[%s4] sm:$0x1]
        %v658 = vperm.slane %v656, 0
        %v664 = vunpack.c.l.b16 %v652
        %v665 = vunpack.c.l.b16 %v653
        %v666 = vunpack.c.l.b16 %v654
        %v667 = vunpack.c.l.b16 %v655
        %v668 = vpack.c.b16 %v665, %v664
        %v669 = vpack.c.b16 %v667, %v666
        %v673 = vsel %vm613, %v651, 0
        %675 = vmatpush.bf16.msra.mxu0 0
        %676 = vmatpush.bf16.msra.mxu0 0
        %677 = vmatpush.bf16.msra.mxu0 0
        %678 = vmatpush.bf16.msra.mxu0 0
        %679 = vmatpush.bf16.msra.mxu0 0
        %680 = vmatpush.bf16.msra.mxu0 0
        %681 = vmatpush.bf16.msra.mxu0 %v669
        %682 = vmatpush.bf16.msra.mxu0 %v668
        %683 = vmatmul.bf16.gmra.mxu0 %v673
        %v684 = vpop.f32.mrf.mxu0
        %v685 = vadd.f32 %v658, %v684
        %v686 = vpop.f32.mrf.mxu0
        %687 = vdwg.mxu0
        %v688 = vld [vmem:[%s5] sm:$0xf]
        %v689 = vld [vmem:[%s5 + $0x4] sm:$0xf]
        %v690 = vld [vmem:[%s5 + $0x8] sm:$0xf]
        %v691 = vld [vmem:[%s5 + $0xc] sm:$0xf]
        %v692 = vld [vmem:[%s6] sm:$0x1]
        %v694 = vperm.slane %v692, 0
        %v700 = vunpack.c.l.b16 %v688
        %v701 = vunpack.c.l.b16 %v689
        %v702 = vunpack.c.l.b16 %v690
        %v703 = vunpack.c.l.b16 %v691
        %v704 = vpack.c.b16 %v701, %v700
        %v705 = vpack.c.b16 %v703, %v702
        %708 = vmatpush.bf16.msra.mxu0 0
        %709 = vmatpush.bf16.msra.mxu0 0
        %710 = vmatpush.bf16.msra.mxu0 0
        %711 = vmatpush.bf16.msra.mxu0 0
        %712 = vmatpush.bf16.msra.mxu0 0
        %713 = vmatpush.bf16.msra.mxu0 0
        %714 = vmatpush.bf16.msra.mxu0 %v705
        %715 = vmatpush.bf16.msra.mxu0 %v704
        %716 = vmatmul.bf16.gmra.mxu0 %v673
        %v717 = vpop.f32.mrf.mxu0
        %v718 = vadd.f32 %v694, %v717
        %v719 = vpop.f32.mrf.mxu0
        %720 = vdwg.mxu0
        %v721 = vld [vmem:[#allocation5] sm:$0xf]
        %v722 = vld [vmem:[#allocation5 + $0x4] sm:$0xf]
        %v723 = vld [vmem:[#allocation5 + $0x8] sm:$0xf]
        %v724 = vld [vmem:[#allocation5 + $0xc] sm:$0xf]
        %v725 = vld [vmem:[%s8] sm:$0x1]
        %v727 = vperm.slane %v725, 0
        %v733 = vunpack.c.l.b16 %v721
        %v734 = vunpack.c.l.b16 %v722
        %v735 = vunpack.c.l.b16 %v723
        %v736 = vunpack.c.l.b16 %v724
        %v737 = vpack.c.b16 %v734, %v733
        %v738 = vpack.c.b16 %v736, %v735
        %741 = vmatpush.bf16.msra.mxu0 0
        %742 = vmatpush.bf16.msra.mxu0 0
        %743 = vmatpush.bf16.msra.mxu0 0
        %744 = vmatpush.bf16.msra.mxu0 0
        %745 = vmatpush.bf16.msra.mxu0 0
        %746 = vmatpush.bf16.msra.mxu0 0
        %747 = vmatpush.bf16.msra.mxu0 %v738
        %748 = vmatpush.bf16.msra.mxu0 %v737
        %749 = vmatmul.bf16.gmra.mxu0 %v673
        %v750 = vpop.f32.mrf.mxu0
        %v751 = vadd.f32 %v727, %v750
        %v752 = vpop.f32.mrf.mxu0
        %753 = vdwg.mxu0
        %755 = vrot.lane.b32.xlu0 %v685, 120
        %v756 = vpop.permute.xlu0 %755
        %758 = vrot.lane.b32.xlu0 %v685, 112
        %v759 = vpop.permute.xlu0 %758
        %761 = vrot.lane.b32.xlu0 %v685, 104
        %v762 = vpop.permute.xlu0 %761
        %v764 = vrot.slane %v759, 4
        %vm765 = vcmask 1047556
        %v766 = vsel %vm765, %v764, %v685
        %v767 = vrot.slane %v685, 4
        %v768 = vsel %vm765, %v759, %v767
        %v770 = vunpack.c.l.s4 1983009808
        %v771 = vunpack.c.0.s8 %v770
        %v772 = vperm.slane %v766, %v771
        %v774 = vunpack.c.l.s4 1983009808
        %v775 = vunpack.c.0.s8 %v774
        %v776 = vperm.slane %v768, %v775
        %v777 = vrot.slane %v762, 4
        %v778 = vsel %vm765, %v777, %v756
        %v779 = vrot.slane %v756, 4
        %v780 = vsel %vm765, %v762, %v779
        %v782 = vunpack.c.l.s4 1983009808
        %v783 = vunpack.c.0.s8 %v782
        %v784 = vperm.slane %v778, %v783
        %v786 = vunpack.c.l.s4 1983009808
        %v787 = vunpack.c.0.s8 %v786
        %v788 = vperm.slane %v780, %v787
        %v789 = vrot.slane %v784, 4
        %v790 = vsel %vm765, %v789, %v772
        %v791 = vrot.slane %v772, 4
        %v792 = vsel %vm765, %v784, %v791
        %v794 = vunpack.c.l.s4 1934713408
        %v795 = vunpack.c.0.s8 %v794
        %v796 = vperm.slane %v790, %v795
        %v798 = vunpack.c.l.s4 1934713408
        %v799 = vunpack.c.0.s8 %v798
        %v800 = vperm.slane %v792, %v799
        %v801 = vrot.slane %v788, 4
        %v802 = vsel %vm765, %v801, %v776
        %v803 = vrot.slane %v776, 4
        %v804 = vsel %vm765, %v788, %v803
        %v806 = vunpack.c.l.s4 1934713408
        %v807 = vunpack.c.0.s8 %v806
        %v808 = vperm.slane %v802, %v807
        %v810 = vunpack.c.l.s4 1934713408
        %v811 = vunpack.c.0.s8 %v810
        %v812 = vperm.slane %v804, %v811
        %v813 = vrot.slane %v796, 4
        %v814 = vsel %vm765, 0.0, %v813
        %v815 = vrot.slane %v800, 4
        %v816 = vsel %vm765, 0.0, %v815
        %v817 = vrot.slane %v808, 4
        %v818 = vsel %vm765, 0.0, %v817
        %v819 = vrot.slane %v812, 4
        %v820 = vsel %vm765, 0.0, %v819
        %v821 = vsel %vm765, %v815, %v796
        %v823 = vunpack.c.l.s4 1983009808
        %v824 = vunpack.c.0.s8 %v823
        %v825 = vperm.slane %v821, %v824
        %v826 = vrot.slane %v816, 4
        %v827 = vsel %vm765, %v826, %v814
        %v829 = vunpack.c.l.s4 1983009808
        %v830 = vunpack.c.0.s8 %v829
        %v831 = vperm.slane %v827, %v830
        %v832 = vsel %vm765, %v819, %v808
        %v834 = vunpack.c.l.s4 1983009808
        %v835 = vunpack.c.0.s8 %v834
        %v836 = vperm.slane %v832, %v835
        %v837 = vrot.slane %v820, 4
        %v838 = vsel %vm765, %v837, %v818
        %v840 = vunpack.c.l.s4 1983009808
        %v841 = vunpack.c.0.s8 %v840
        %v842 = vperm.slane %v838, %v841
        %v843 = vrot.slane %v831, 4
        %v844 = vsel %vm765, %v843, %v825
        %v845 = vrot.slane %v825, 4
        %v846 = vsel %vm765, %v831, %v845
        %v848 = vunpack.c.l.s4 1934713408
        %v849 = vunpack.c.0.s8 %v848
        %v850 = vperm.slane %v844, %v849
        %v852 = vunpack.c.l.s4 1934713408
        %v853 = vunpack.c.0.s8 %v852
        %v854 = vperm.slane %v846, %v853
        %v855 = vrot.slane %v842, 4
        %v856 = vsel %vm765, %v855, %v836
        %v857 = vrot.slane %v836, 4
        %v858 = vsel %vm765, %v842, %v857
        %v860 = vunpack.c.l.s4 1934713408
        %v861 = vunpack.c.0.s8 %v860
        %v862 = vperm.slane %v856, %v861
        %v864 = vunpack.c.l.s4 1934713408
        %v865 = vunpack.c.0.s8 %v864
        %v866 = vperm.slane %v858, %v865
        %v867 = vrot.slane %v862, 4
        %v868 = vsel %vm765, %v867, %v850
        %v869 = vrot.slane %v850, 4
        %v870 = vsel %vm765, %v862, %v869
        %v871 = vrot.slane %v866, 4
        %v872 = vsel %vm765, %v871, %v854
        %v873 = vrot.slane %v854, 4
        %v874 = vsel %vm765, %v866, %v873
        %v875 = vpack.c.bf16 %v868, %v868
        %v876 = vpack.c.bf16 %v870, %v870
        %v877 = vpack.c.bf16 %v872, %v872
        %v878 = vpack.c.bf16 %v874, %v874
        %880 = vrot.lane.b32.xlu0 %v718, 120
        %v881 = vpop.permute.xlu0 %880
        %883 = vrot.lane.b32.xlu0 %v718, 112
        %v884 = vpop.permute.xlu0 %883
        %886 = vrot.lane.b32.xlu0 %v718, 104
        %v887 = vpop.permute.xlu0 %886
        %v889 = vrot.slane %v884, 4
        %v890 = vsel %vm765, %v889, %v718
        %v891 = vrot.slane %v718, 4
        %v892 = vsel %vm765, %v884, %v891
        %v894 = vunpack.c.l.s4 1983009808
        %v895 = vunpack.c.0.s8 %v894
        %v896 = vperm.slane %v890, %v895
        %v898 = vunpack.c.l.s4 1983009808
        %v899 = vunpack.c.0.s8 %v898
        %v900 = vperm.slane %v892, %v899
        %v901 = vrot.slane %v887, 4
        %v902 = vsel %vm765, %v901, %v881
        %v903 = vrot.slane %v881, 4
        %v904 = vsel %vm765, %v887, %v903
        %v906 = vunpack.c.l.s4 1983009808
        %v907 = vunpack.c.0.s8 %v906
        %v908 = vperm.slane %v902, %v907
        %v910 = vunpack.c.l.s4 1983009808
        %v911 = vunpack.c.0.s8 %v910
        %v912 = vperm.slane %v904, %v911
        %v913 = vrot.slane %v908, 4
        %v914 = vsel %vm765, %v913, %v896
        %v915 = vrot.slane %v896, 4
        %v916 = vsel %vm765, %v908, %v915
        %v918 = vunpack.c.l.s4 1934713408
        %v919 = vunpack.c.0.s8 %v918
        %v920 = vperm.slane %v914, %v919
        %v922 = vunpack.c.l.s4 1934713408
        %v923 = vunpack.c.0.s8 %v922
        %v924 = vperm.slane %v916, %v923
        %v925 = vrot.slane %v912, 4
        %v926 = vsel %vm765, %v925, %v900
        %v927 = vrot.slane %v900, 4
        %v928 = vsel %vm765, %v912, %v927
        %v930 = vunpack.c.l.s4 1934713408
        %v931 = vunpack.c.0.s8 %v930
        %v932 = vperm.slane %v926, %v931
        %v934 = vunpack.c.l.s4 1934713408
        %v935 = vunpack.c.0.s8 %v934
        %v936 = vperm.slane %v928, %v935
        %v937 = vrot.slane %v920, 4
        %v938 = vsel %vm765, 0.0, %v937
        %v939 = vrot.slane %v924, 4
        %v940 = vsel %vm765, 0.0, %v939
        %v941 = vrot.slane %v932, 4
        %v942 = vsel %vm765, 0.0, %v941
        %v943 = vrot.slane %v936, 4
        %v944 = vsel %vm765, 0.0, %v943
        %v945 = vsel %vm765, %v939, %v920
        %v947 = vunpack.c.l.s4 1983009808
        %v948 = vunpack.c.0.s8 %v947
        %v949 = vperm.slane %v945, %v948
        %v950 = vrot.slane %v940, 4
        %v951 = vsel %vm765, %v950, %v938
        %v953 = vunpack.c.l.s4 1983009808
        %v954 = vunpack.c.0.s8 %v953
        %v955 = vperm.slane %v951, %v954
        %v956 = vsel %vm765, %v943, %v932
        %v958 = vunpack.c.l.s4 1983009808
        %v959 = vunpack.c.0.s8 %v958
        %v960 = vperm.slane %v956, %v959
        %v961 = vrot.slane %v944, 4
        %v962 = vsel %vm765, %v961, %v942
        %v964 = vunpack.c.l.s4 1983009808
        %v965 = vunpack.c.0.s8 %v964
        %v966 = vperm.slane %v962, %v965
        %v967 = vrot.slane %v955, 4
        %v968 = vsel %vm765, %v967, %v949
        %v969 = vrot.slane %v949, 4
        %v970 = vsel %vm765, %v955, %v969
        %v972 = vunpack.c.l.s4 1934713408
        %v973 = vunpack.c.0.s8 %v972
        %v974 = vperm.slane %v968, %v973
        %v976 = vunpack.c.l.s4 1934713408
        %v977 = vunpack.c.0.s8 %v976
        %v978 = vperm.slane %v970, %v977
        %v979 = vrot.slane %v966, 4
        %v980 = vsel %vm765, %v979, %v960
        %v981 = vrot.slane %v960, 4
        %v982 = vsel %vm765, %v966, %v981
        %v984 = vunpack.c.l.s4 1934713408
        %v985 = vunpack.c.0.s8 %v984
        %v986 = vperm.slane %v980, %v985
        %v988 = vunpack.c.l.s4 1934713408
        %v989 = vunpack.c.0.s8 %v988
        %v990 = vperm.slane %v982, %v989
        %v991 = vrot.slane %v986, 4
        %v992 = vsel %vm765, %v991, %v974
        %v993 = vrot.slane %v974, 4
        %v994 = vsel %vm765, %v986, %v993
        %v995 = vrot.slane %v990, 4
        %v996 = vsel %vm765, %v995, %v978
        %v997 = vrot.slane %v978, 4
        %v998 = vsel %vm765, %v990, %v997
        %v999 = vpack.c.bf16 %v992, %v992
        %v1000 = vpack.c.bf16 %v994, %v994
        %v1001 = vpack.c.bf16 %v996, %v996
        %v1002 = vpack.c.bf16 %v998, %v998
        %1004 = vrot.lane.b32.xlu0 %v751, 120
        %v1005 = vpop.permute.xlu0 %1004
        %1007 = vrot.lane.b32.xlu0 %v751, 112
        %v1008 = vpop.permute.xlu0 %1007
        %1010 = vrot.lane.b32.xlu0 %v751, 104
        %v1011 = vpop.permute.xlu0 %1010
        %v1013 = vrot.slane %v1008, 4
        %v1014 = vsel %vm765, %v1013, %v751
        %v1015 = vrot.slane %v751, 4
        %v1016 = vsel %vm765, %v1008, %v1015
        %v1018 = vunpack.c.l.s4 1983009808
        %v1019 = vunpack.c.0.s8 %v1018
        %v1020 = vperm.slane %v1014, %v1019
        %v1022 = vunpack.c.l.s4 1983009808
        %v1023 = vunpack.c.0.s8 %v1022
        %v1024 = vperm.slane %v1016, %v1023
        %v1025 = vrot.slane %v1011, 4
        %v1026 = vsel %vm765, %v1025, %v1005
        %v1027 = vrot.slane %v1005, 4
        %v1028 = vsel %vm765, %v1011, %v1027
        %v1030 = vunpack.c.l.s4 1983009808
        %v1031 = vunpack.c.0.s8 %v1030
        %v1032 = vperm.slane %v1026, %v1031
        %v1034 = vunpack.c.l.s4 1983009808
        %v1035 = vunpack.c.0.s8 %v1034
        %v1036 = vperm.slane %v1028, %v1035
        %v1037 = vrot.slane %v1032, 4
        %v1038 = vsel %vm765, %v1037, %v1020
        %v1039 = vrot.slane %v1020, 4
        %v1040 = vsel %vm765, %v1032, %v1039
        %v1042 = vunpack.c.l.s4 1934713408
        %v1043 = vunpack.c.0.s8 %v1042
        %v1044 = vperm.slane %v1038, %v1043
        %v1046 = vunpack.c.l.s4 1934713408
        %v1047 = vunpack.c.0.s8 %v1046
        %v1048 = vperm.slane %v1040, %v1047
        %v1049 = vrot.slane %v1036, 4
        %v1050 = vsel %vm765, %v1049, %v1024
        %v1051 = vrot.slane %v1024, 4
        %v1052 = vsel %vm765, %v1036, %v1051
        %v1054 = vunpack.c.l.s4 1934713408
        %v1055 = vunpack.c.0.s8 %v1054
        %v1056 = vperm.slane %v1050, %v1055
        %v1058 = vunpack.c.l.s4 1934713408
        %v1059 = vunpack.c.0.s8 %v1058
        %v1060 = vperm.slane %v1052, %v1059
        %v1061 = vrot.slane %v1044, 4
        %v1062 = vsel %vm765, 0.0, %v1061
        %v1063 = vrot.slane %v1048, 4
        %v1064 = vsel %vm765, 0.0, %v1063
        %v1065 = vrot.slane %v1056, 4
        %v1066 = vsel %vm765, 0.0, %v1065
        %v1067 = vrot.slane %v1060, 4
        %v1068 = vsel %vm765, 0.0, %v1067
        %v1069 = vsel %vm765, %v1063, %v1044
        %v1071 = vunpack.c.l.s4 1983009808
        %v1072 = vunpack.c.0.s8 %v1071
        %v1073 = vperm.slane %v1069, %v1072
        %v1074 = vrot.slane %v1064, 4
        %v1075 = vsel %vm765, %v1074, %v1062
        %v1077 = vunpack.c.l.s4 1983009808
        %v1078 = vunpack.c.0.s8 %v1077
        %v1079 = vperm.slane %v1075, %v1078
        %v1080 = vsel %vm765, %v1067, %v1056
        %v1082 = vunpack.c.l.s4 1983009808
        %v1083 = vunpack.c.0.s8 %v1082
        %v1084 = vperm.slane %v1080, %v1083
        %v1085 = vrot.slane %v1068, 4
        %v1086 = vsel %vm765, %v1085, %v1066
        %v1088 = vunpack.c.l.s4 1983009808
        %v1089 = vunpack.c.0.s8 %v1088
        %v1090 = vperm.slane %v1086, %v1089
        %v1091 = vrot.slane %v1079, 4
        %v1092 = vsel %vm765, %v1091, %v1073
        %v1093 = vrot.slane %v1073, 4
        %v1094 = vsel %vm765, %v1079, %v1093
        %v1096 = vunpack.c.l.s4 1934713408
        %v1097 = vunpack.c.0.s8 %v1096
        %v1098 = vperm.slane %v1092, %v1097
        %v1100 = vunpack.c.l.s4 1934713408
        %v1101 = vunpack.c.0.s8 %v1100
        %v1102 = vperm.slane %v1094, %v1101
        %v1103 = vrot.slane %v1090, 4
        %v1104 = vsel %vm765, %v1103, %v1084
        %v1105 = vrot.slane %v1084, 4
        %v1106 = vsel %vm765, %v1090, %v1105
        %v1108 = vunpack.c.l.s4 1934713408
        %v1109 = vunpack.c.0.s8 %v1108
        %v1110 = vperm.slane %v1104, %v1109
        %v1112 = vunpack.c.l.s4 1934713408
        %v1113 = vunpack.c.0.s8 %v1112
        %v1114 = vperm.slane %v1106, %v1113
        %v1115 = vrot.slane %v1110, 4
        %v1116 = vsel %vm765, %v1115, %v1098
        %v1117 = vrot.slane %v1098, 4
        %v1118 = vsel %vm765, %v1110, %v1117
        %v1119 = vrot.slane %v1114, 4
        %v1120 = vsel %vm765, %v1119, %v1102
        %v1121 = vrot.slane %v1102, 4
        %v1122 = vsel %vm765, %v1114, %v1121
        %v1123 = vpack.c.bf16 %v1116, %v1116
        %v1124 = vpack.c.bf16 %v1118, %v1118
        %v1125 = vpack.c.bf16 %v1120, %v1120
        %v1126 = vpack.c.bf16 %v1122, %v1122
        %vm1127 = vcmask 64512
        %v1129 = vsel %vm1127, %v875, 0
        %v1132 = vsel %vm1127, %v999, 0
        %1134 = vmatpush.bf16.xpose.msra.mxu0 0
        %1135 = vmatpush.bf16.xpose.msra.mxu0 0
        %1136 = vmatpush.bf16.xpose.msra.mxu0 0
        %1137 = vmatpush.bf16.xpose.msra.mxu0 0
        %1138 = vmatpush.bf16.xpose.msra.mxu0 0
        %1139 = vmatpush.bf16.xpose.msra.mxu0 0
        %1140 = vmatpush.bf16.xpose.msra.mxu0 0
        %1141 = vmatpush.bf16.xpose.msra.mxu0 %v1132
        %1142 = vmatmul.bf16.gmra.mxu0 %v1129
        %v1143 = vpop.f32.mrf.mxu0
        %v1144 = vadd.f32 0.0, %v1143
        %v1145 = vpop.f32.mrf.mxu0
        %1146 = vdwg.mxu0
        %v1148 = vsel %vm1127, %v876, 0
        %v1151 = vsel %vm1127, %v1000, 0
        %1153 = vmatpush.bf16.xpose.msra.mxu0 0
        %1154 = vmatpush.bf16.xpose.msra.mxu0 0
        %1155 = vmatpush.bf16.xpose.msra.mxu0 0
        %1156 = vmatpush.bf16.xpose.msra.mxu0 0
        %1157 = vmatpush.bf16.xpose.msra.mxu0 0
        %1158 = vmatpush.bf16.xpose.msra.mxu0 0
        %1159 = vmatpush.bf16.xpose.msra.mxu0 0
        %1160 = vmatpush.bf16.xpose.msra.mxu0 %v1151
        %1161 = vmatmul.bf16.gmra.mxu0 %v1148
        %v1162 = vpop.f32.mrf.mxu0
        %v1163 = vadd.f32 0.0, %v1162
        %v1164 = vpop.f32.mrf.mxu0
        %1165 = vdwg.mxu0
        %v1167 = vsel %vm1127, %v877, 0
        %v1170 = vsel %vm1127, %v1001, 0
        %1172 = vmatpush.bf16.xpose.msra.mxu0 0
        %1173 = vmatpush.bf16.xpose.msra.mxu0 0
        %1174 = vmatpush.bf16.xpose.msra.mxu0 0
        %1175 = vmatpush.bf16.xpose.msra.mxu0 0
        %1176 = vmatpush.bf16.xpose.msra.mxu0 0
        %1177 = vmatpush.bf16.xpose.msra.mxu0 0
        %1178 = vmatpush.bf16.xpose.msra.mxu0 0
        %1179 = vmatpush.bf16.xpose.msra.mxu0 %v1170
        %1180 = vmatmul.bf16.gmra.mxu0 %v1167
        %v1181 = vpop.f32.mrf.mxu0
        %v1182 = vadd.f32 0.0, %v1181
        %v1183 = vpop.f32.mrf.mxu0
        %1184 = vdwg.mxu0
        %v1186 = vsel %vm1127, %v878, 0
        %v1189 = vsel %vm1127, %v1002, 0
        %1191 = vmatpush.bf16.xpose.msra.mxu0 0
        %1192 = vmatpush.bf16.xpose.msra.mxu0 0
        %1193 = vmatpush.bf16.xpose.msra.mxu0 0
        %1194 = vmatpush.bf16.xpose.msra.mxu0 0
        %1195 = vmatpush.bf16.xpose.msra.mxu0 0
        %1196 = vmatpush.bf16.xpose.msra.mxu0 0
        %1197 = vmatpush.bf16.xpose.msra.mxu0 0
        %1198 = vmatpush.bf16.xpose.msra.mxu0 %v1189
        %1199 = vmatmul.bf16.gmra.mxu0 %v1186
        %v1200 = vpop.f32.mrf.mxu0
        %v1201 = vadd.f32 0.0, %v1200
        %v1202 = vpop.f32.mrf.mxu0
        %1203 = vdwg.mxu0
        %v1204 = vsel %vm1127, %v1144, -inf
        %1205 = vmax.xlane.f32.xlu0 %v1204
        %v1206 = vpop.xlane.xlu0 %1205
        %v1207 = vsel %vm1127, %v1163, -inf
        %1208 = vmax.xlane.f32.xlu0 %v1207
        %v1209 = vpop.xlane.xlu0 %1208
        %v1210 = vsel %vm1127, %v1182, -inf
        %1211 = vmax.xlane.f32.xlu0 %v1210
        %v1212 = vpop.xlane.xlu0 %1211
        %v1213 = vsel %vm1127, %v1201, -inf
        %1214 = vmax.xlane.f32.xlu0 %v1213
        %v1215 = vpop.xlane.xlu0 %1214
        %v1216 = vsub.f32 %v1144, %v1206
        %v1217 = vsub.f32 %v1163, %v1209
        %v1218 = vsub.f32 %v1182, %v1212
        %v1219 = vsub.f32 %v1201, %v1215
        %v1220 = vmul.f32 %v1216, 1.442695
        %v1221 = vpow.pop %v1220
        %v1222 = vmul.f32 %v1217, 1.442695
        %v1223 = vpow.pop %v1222
        %v1224 = vmul.f32 %v1218, 1.442695
        %v1225 = vpow.pop %v1224
        %v1226 = vmul.f32 %v1219, 1.442695
        %v1227 = vpow.pop %v1226
        %v1228 = vsel %vm1127, %v1221, 0.0
        %1229 = vadd.xlane.f32.xlu0 %v1228
        %v1230 = vpop.xlane.xlu0 %1229
        %v1231 = vsel %vm1127, %v1223, 0.0
        %1232 = vadd.xlane.f32.xlu0 %v1231
        %v1233 = vpop.xlane.xlu0 %1232
        %v1234 = vsel %vm1127, %v1225, 0.0
        %1235 = vadd.xlane.f32.xlu0 %v1234
        %v1236 = vpop.xlane.xlu0 %1235
        %v1237 = vsel %vm1127, %v1227, 0.0
        %1238 = vadd.xlane.f32.xlu0 %v1237
        %v1239 = vpop.xlane.xlu0 %1238
        %v1240 = vrcp.pop %v1230
        %v1241 = vrcp.pop %v1233
        %v1242 = vrcp.pop %v1236
        %v1243 = vrcp.pop %v1239
        %v1244 = vmul.f32 %v1221, %v1240
        %v1245 = vmul.f32 %v1223, %v1241
        %v1246 = vmul.f32 %v1225, %v1242
        %v1247 = vmul.f32 %v1227, %v1243
        %v1248 = vpack.c.bf16 %v1244, %v1244
        %v1249 = vpack.c.bf16 %v1245, %v1245
        %v1250 = vpack.c.bf16 %v1246, %v1246
        %v1251 = vpack.c.bf16 %v1247, %v1247
        %v1253 = vsel %vm1127, %v1248, 0
        %vm1255 = vcmask 1043456
        %v1257 = vsel %vm1255, %v1123, 0
        %1259 = vmatpush.bf16.msra.mxu0 0
        %1260 = vmatpush.bf16.msra.mxu0 0
        %1261 = vmatpush.bf16.msra.mxu0 0
        %1262 = vmatpush.bf16.msra.mxu0 0
        %1263 = vmatpush.bf16.msra.mxu0 0
        %1264 = vmatpush.bf16.msra.mxu0 0
        %1265 = vmatpush.bf16.msra.mxu0 0
        %1266 = vmatpush.bf16.msra.mxu0 %v1257
        %1267 = vmatmul.bf16.gmra.mxu0 %v1253
        %v1268 = vpop.f32.mrf.mxu0
        %v1269 = vadd.f32 0.0, %v1268
        %v1270 = vpop.f32.mrf.mxu0
        %1271 = vdwg.mxu0
        %v1273 = vsel %vm1127, %v1249, 0
        %v1276 = vsel %vm1255, %v1124, 0
        %1278 = vmatpush.bf16.msra.mxu0 0
        %1279 = vmatpush.bf16.msra.mxu0 0
        %1280 = vmatpush.bf16.msra.mxu0 0
        %1281 = vmatpush.bf16.msra.mxu0 0
        %1282 = vmatpush.bf16.msra.mxu0 0
        %1283 = vmatpush.bf16.msra.mxu0 0
        %1284 = vmatpush.bf16.msra.mxu0 0
        %1285 = vmatpush.bf16.msra.mxu0 %v1276
        %1286 = vmatmul.bf16.gmra.mxu0 %v1273
        %v1287 = vpop.f32.mrf.mxu0
        %v1288 = vadd.f32 0.0, %v1287
        %v1289 = vpop.f32.mrf.mxu0
        %1290 = vdwg.mxu0
        %v1292 = vsel %vm1127, %v1250, 0
        %v1295 = vsel %vm1255, %v1125, 0
        %1297 = vmatpush.bf16.msra.mxu0 0
        %1298 = vmatpush.bf16.msra.mxu0 0
        %1299 = vmatpush.bf16.msra.mxu0 0
        %1300 = vmatpush.bf16.msra.mxu0 0
        %1301 = vmatpush.bf16.msra.mxu0 0
        %1302 = vmatpush.bf16.msra.mxu0 0
        %1303 = vmatpush.bf16.msra.mxu0 0
        %1304 = vmatpush.bf16.msra.mxu0 %v1295
        %1305 = vmatmul.bf16.gmra.mxu0 %v1292
        %v1306 = vpop.f32.mrf.mxu0
        %v1307 = vadd.f32 0.0, %v1306
        %v1308 = vpop.f32.mrf.mxu0
        %1309 = vdwg.mxu0
        %v1311 = vsel %vm1127, %v1251, 0
        %v1314 = vsel %vm1255, %v1126, 0
        %1316 = vmatpush.bf16.msra.mxu0 0
        %1317 = vmatpush.bf16.msra.mxu0 0
        %1318 = vmatpush.bf16.msra.mxu0 0
        %1319 = vmatpush.bf16.msra.mxu0 0
        %1320 = vmatpush.bf16.msra.mxu0 0
        %1321 = vmatpush.bf16.msra.mxu0 0
        %1322 = vmatpush.bf16.msra.mxu0 0
        %1323 = vmatpush.bf16.msra.mxu0 %v1314
        %1324 = vmatmul.bf16.gmra.mxu0 %v1311
        %v1325 = vpop.f32.mrf.mxu0
        %v1326 = vadd.f32 0.0, %v1325
        %v1327 = vpop.f32.mrf.mxu0
        %1328 = vdwg.mxu0
        %v1329 = vrot.slane %v1307, 4
        %v1330 = vsel %vm765, %v1329, %v1269
        %v1331 = vrot.slane %v1269, 4
        %v1332 = vsel %vm765, %v1307, %v1331
        %v1334 = vunpack.c.l.s4 1983009808
        %v1335 = vunpack.c.0.s8 %v1334
        %v1336 = vperm.slane %v1330, %v1335
        %v1338 = vunpack.c.l.s4 1983009808
        %v1339 = vunpack.c.0.s8 %v1338
        %v1340 = vperm.slane %v1332, %v1339
        %v1341 = vrot.slane %v1326, 4
        %v1342 = vsel %vm765, %v1341, %v1288
        %v1343 = vrot.slane %v1288, 4
        %v1344 = vsel %vm765, %v1326, %v1343
        %v1346 = vunpack.c.l.s4 1983009808
        %v1347 = vunpack.c.0.s8 %v1346
        %v1348 = vperm.slane %v1342, %v1347
        %v1350 = vunpack.c.l.s4 1983009808
        %v1351 = vunpack.c.0.s8 %v1350
        %v1352 = vperm.slane %v1344, %v1351
        %v1353 = vrot.slane %v1348, 4
        %v1354 = vsel %vm765, %v1353, %v1336
        %v1355 = vrot.slane %v1336, 4
        %v1356 = vsel %vm765, %v1348, %v1355
        %v1358 = vunpack.c.l.s4 1934713408
        %v1359 = vunpack.c.0.s8 %v1358
        %v1360 = vperm.slane %v1354, %v1359
        %v1362 = vunpack.c.l.s4 1934713408
        %v1363 = vunpack.c.0.s8 %v1362
        %v1364 = vperm.slane %v1356, %v1363
        %v1365 = vrot.slane %v1352, 4
        %v1366 = vsel %vm765, %v1365, %v1340
        %v1367 = vrot.slane %v1340, 4
        %v1368 = vsel %vm765, %v1352, %v1367
        %v1370 = vunpack.c.l.s4 1934713408
        %v1371 = vunpack.c.0.s8 %v1370
        %v1372 = vperm.slane %v1366, %v1371
        %v1374 = vunpack.c.l.s4 1934713408
        %v1375 = vunpack.c.0.s8 %v1374
        %v1376 = vperm.slane %v1368, %v1375
        %v1377 = vrot.slane %v1360, 4
        %v1378 = vsel %vm765, 0.0, %v1377
        %v1379 = vrot.slane %v1364, 4
        %v1380 = vsel %vm765, 0.0, %v1379
        %v1381 = vrot.slane %v1372, 4
        %v1382 = vsel %vm765, 0.0, %v1381
        %v1383 = vrot.slane %v1376, 4
        %v1384 = vsel %vm765, 0.0, %v1383
        %v1385 = vsel %vm765, %v1379, %v1360
        %v1387 = vunpack.c.l.s4 1983009808
        %v1388 = vunpack.c.0.s8 %v1387
        %v1389 = vperm.slane %v1385, %v1388
        %v1390 = vrot.slane %v1380, 4
        %v1391 = vsel %vm765, %v1390, %v1378
        %v1393 = vunpack.c.l.s4 1983009808
        %v1394 = vunpack.c.0.s8 %v1393
        %v1395 = vperm.slane %v1391, %v1394
        %v1396 = vsel %vm765, %v1383, %v1372
        %v1398 = vunpack.c.l.s4 1983009808
        %v1399 = vunpack.c.0.s8 %v1398
        %v1400 = vperm.slane %v1396, %v1399
        %v1401 = vrot.slane %v1384, 4
        %v1402 = vsel %vm765, %v1401, %v1382
        %v1404 = vunpack.c.l.s4 1983009808
        %v1405 = vunpack.c.0.s8 %v1404
        %v1406 = vperm.slane %v1402, %v1405
        %v1407 = vrot.slane %v1395, 4
        %v1408 = vsel %vm765, %v1407, %v1389
        %v1409 = vrot.slane %v1389, 4
        %v1410 = vsel %vm765, %v1395, %v1409
        %v1412 = vunpack.c.l.s4 1934713408
        %v1413 = vunpack.c.0.s8 %v1412
        %v1414 = vperm.slane %v1408, %v1413
        %v1416 = vunpack.c.l.s4 1934713408
        %v1417 = vunpack.c.0.s8 %v1416
        %v1418 = vperm.slane %v1410, %v1417
        %v1419 = vrot.slane %v1406, 4
        %v1420 = vsel %vm765, %v1419, %v1400
        %v1421 = vrot.slane %v1400, 4
        %v1422 = vsel %vm765, %v1406, %v1421
        %v1424 = vunpack.c.l.s4 1934713408
        %v1425 = vunpack.c.0.s8 %v1424
        %v1426 = vperm.slane %v1420, %v1425
        %v1428 = vunpack.c.l.s4 1934713408
        %v1429 = vunpack.c.0.s8 %v1428
        %v1430 = vperm.slane %v1422, %v1429
        %v1431 = vrot.slane %v1426, 4
        %v1432 = vsel %vm765, %v1431, %v1414
        %v1433 = vrot.slane %v1414, 4
        %v1434 = vsel %vm765, %v1426, %v1433
        %v1435 = vrot.slane %v1430, 4
        %v1436 = vsel %vm765, %v1435, %v1418
        %v1437 = vrot.slane %v1418, 4
        %v1438 = vsel %vm765, %v1430, %v1437
        %1440 = vrot.lane.b32.xlu0 %v1434, 8
        %v1441 = vpop.permute.xlu0 %1440
        %1444 = vrot.lane.b32.xlu0 %v1436, 16
        %v1445 = vpop.permute.xlu0 %1444
        %1448 = vrot.lane.b32.xlu0 %v1438, 24
        %v1449 = vpop.permute.xlu0 %1448
        %v1451 = vsel %vm1127, %v1432, %v1441
        %vm1452 = vcmask 130048
        %v1453 = vsel %vm1452, %v1451, %v1445
        %vm1454 = vcmask 195584
        %v1455 = vsel %vm1454, %v1453, %v1449
        %v1456 = vpack.c.bf16 %v1455, %v1455
        %v1457 = vld [vmem:[#allocation7] sm:$0xf]
        %v1458 = vld [vmem:[#allocation7 + $0x4] sm:$0xf]
        %v1459 = vld [vmem:[#allocation7 + $0x8] sm:$0xf]
        %v1460 = vld [vmem:[#allocation7 + $0xc] sm:$0xf]
        %v1461 = vld [vmem:[%s10] sm:$0x1]
        %v1463 = vperm.slane %v1461, 0
        %v1469 = vunpack.c.l.b16 %v1457
        %v1470 = vunpack.c.l.b16 %v1458
        %v1471 = vunpack.c.l.b16 %v1459
        %v1472 = vunpack.c.l.b16 %v1460
        %v1473 = vpack.c.b16 %v1470, %v1469
        %v1474 = vpack.c.b16 %v1472, %v1471
        %v1478 = vsel %vm613, %v1456, 0
        %1480 = vmatpush.bf16.msra.mxu0 0
        %1481 = vmatpush.bf16.msra.mxu0 0
        %1482 = vmatpush.bf16.msra.mxu0 0
        %1483 = vmatpush.bf16.msra.mxu0 0
        %1484 = vmatpush.bf16.msra.mxu0 0
        %1485 = vmatpush.bf16.msra.mxu0 0
        %1486 = vmatpush.bf16.msra.mxu0 %v1474
        %1487 = vmatpush.bf16.msra.mxu0 %v1473
        %1488 = vmatmul.bf16.gmra.mxu0 %v1478
        %v1489 = vpop.f32.mrf.mxu0
        %v1490 = vadd.f32 %v1463, %v1489
        %v1491 = vpop.f32.mrf.mxu0
        %1492 = vdwg.mxu0
        %v1493 = vadd.f32 %v610, %v1490
        %v1494 = vld [vmem:[%s11] sm:$0x1]
        %v1495 = vld [vmem:[%s12] sm:$0x1]
        %v1496 = vsel %vm613, %v1493, 0.0
        %1497 = vadd.xlane.f32.xlu0 %v1496
        %v1498 = vpop.xlane.xlu0 %1497
        %v1499 = vmul.f32 %v1498, %v623
        %v1500 = vsub.f32 %v1493, %v1499
        %v1501 = vmul.f32 %v1500, %v1500
        %v1502 = vsel %vm613, %v1501, 0.0
        %1503 = vadd.xlane.f32.xlu0 %v1502
        %v1504 = vpop.xlane.xlu0 %1503
        %v1505 = vmul.f32 %v1504, %v623
        %v1506 = vadd.f32 %v1505, 1e-05
        %v1507 = vrsqrt.pop %v1506
        %v1508 = vmul.f32 %v1507, %v1506
        %v1509 = vmul.f32 %v1508, %v1507
        %v1510 = vmul.f32 0.5, %v1509
        %v1511 = vsub.f32 1.5, %v1510
        %v1512 = vmul.f32 %v1507, %v1511
        %vm1513 = vweird.f32 %v1506
        %vm1514 = vweird.f32 %v1507
        %vm1515 = vmor %vm1513, %vm1514
        %v1516 = vsel %vm1515, %v1507, %v1512
        %v1517 = vmul.f32 %v1500, %v1516
        %v1519 = vperm.slane %v1494, 0
        %v1521 = vmul.f32 %v1517, %v1519
        %v1523 = vperm.slane %v1495, 0
        %v1525 = vadd.f32 %v1521, %v1523
        %v1526 = vpack.c.bf16 %v1525, %v1525
        %v1527 = vld [vmem:[#allocation8] sm:$0xf]
        %v1528 = vld [vmem:[#allocation8 + $0x4] sm:$0xf]
        %v1529 = vld [vmem:[#allocation8 + $0x8] sm:$0xf]
        %v1530 = vld [vmem:[#allocation8 + $0xc] sm:$0xf]
        %v1531 = vld [vmem:[%s14] sm:$0x1]
        %v1533 = vperm.slane %v1531, 0
        %v1539 = vunpack.c.l.b16 %v1527
        %v1540 = vunpack.c.l.b16 %v1528
        %v1541 = vunpack.c.l.b16 %v1529
        %v1542 = vunpack.c.l.b16 %v1530
        %v1543 = vpack.c.b16 %v1540, %v1539
        %v1544 = vpack.c.b16 %v1542, %v1541
        %v1548 = vsel %vm613, %v1526, 0
        %1550 = vmatpush.bf16.msra.mxu0 0
        %1551 = vmatpush.bf16.msra.mxu0 0
        %1552 = vmatpush.bf16.msra.mxu0 0
        %1553 = vmatpush.bf16.msra.mxu0 0
        %1554 = vmatpush.bf16.msra.mxu0 0
        %1555 = vmatpush.bf16.msra.mxu0 0
        %1556 = vmatpush.bf16.msra.mxu0 %v1544
        %1557 = vmatpush.bf16.msra.mxu0 %v1543
        %1558 = vmatmul.bf16.gmra.mxu0 %v1548
        %v1559 = vpop.f32.mrf.mxu0
        %v1560 = vadd.f32 %v1533, %v1559
        %v1561 = vpop.f32.mrf.mxu0
        %1562 = vdwg.mxu0
        %v1563 = vmax.f32 %v1560, 0.0
        %v1564 = vpack.c.bf16 %v1563, %v1563
        %v1565 = vld [vmem:[%s15] sm:$0xf]
        %v1566 = vld [vmem:[%s15 + $0x4] sm:$0xf]
        %v1567 = vld [vmem:[%s15 + $0x8] sm:$0xf]
        %v1568 = vld [vmem:[%s15 + $0xc] sm:$0xf]
        %v1569 = vld [vmem:[%s15 + $0x10] sm:$0xf]
        %v1570 = vld [vmem:[%s15 + $0x14] sm:$0xf]
        %v1571 = vld [vmem:[%s15 + $0x18] sm:$0xf]
        %v1572 = vld [vmem:[%s15 + $0x1c] sm:$0xf]
        %v1573 = vld [vmem:[%s16] sm:$0x1]
        %v1575 = vperm.slane %v1573, 0
        %v1585 = vunpack.c.l.b16 %v1565
        %v1586 = vunpack.c.l.b16 %v1566
        %v1587 = vunpack.c.l.b16 %v1567
        %v1588 = vunpack.c.l.b16 %v1568
        %v1589 = vunpack.c.l.b16 %v1569
        %v1590 = vunpack.c.l.b16 %v1570
        %v1591 = vunpack.c.l.b16 %v1571
        %v1592 = vunpack.c.l.b16 %v1572
        %v1593 = vpack.c.b16 %v1586, %v1585
        %v1594 = vpack.c.b16 %v1588, %v1587
        %v1595 = vpack.c.b16 %v1590, %v1589
        %v1596 = vpack.c.b16 %v1592, %v1591
        %vm1601 = vcmask 523264
        %v1603 = vsel %vm1601, %v1564, 0
        %1605 = vmatpush.bf16.msra.mxu0 0
        %1606 = vmatpush.bf16.msra.mxu0 0
        %1607 = vmatpush.bf16.msra.mxu0 0
        %1608 = vmatpush.bf16.msra.mxu0 0
        %1609 = vmatpush.bf16.msra.mxu0 %v1596
        %1610 = vmatpush.bf16.msra.mxu0 %v1595
        %1611 = vmatpush.bf16.msra.mxu0 %v1594
        %1612 = vmatpush.bf16.msra.mxu0 %v1593
        %1613 = vmatmul.bf16.gmra.mxu0 %v1603
        %v1614 = vpop.f32.mrf.mxu0
        %v1615 = vadd.f32 %v1575, %v1614
        %v1616 = vpop.f32.mrf.mxu0
        %1617 = vdwg.mxu0
        %v1618 = vadd.f32 %v1493, %v1615
        %1619 = vst.msk [vmem:[%s604] sm:$0xff] %vm613, %v1618
        %s1620 = sand.u32 %s404, 1
        %s1621 = scalar_lea.sflag [#allocation4], %s1620
        %s1622 = sand.u32 %s404, 1
        %s1623 = smul.addr %s1622, 8
        %s1624 = scalar_lea.vmem [#allocation10], %s1623
        // Predicated region
        $region105: #{tpu_custom_call.1} parent=87 // pred_check
          %p1625 = pneg %p414
        $region106: #{tpu_custom_call.1} parent=87 // pred_check_branch
          %1627 = sbr.rel (%p1625) target = $region108
        $region107: #{tpu_custom_call.1} parent=87 // pred_region
          %1629 = vsyncadd %s1621, 0
          %s1630 = smul.addr %s34, 8
          %s1631 = scalar_lea.hbm %s17, %s1630
          %s1633 = sshll.u32 %s1624, 4
          %s1634 = int_to_ptr.vmem [resolvable:$true] %s1633
          %s1635 = sshll.u32 %s1631, 4
          %s1636 = int_to_ptr.hbm [resolvable:$true] %s1635
          %1638 = dma.vmem_to_hbm [thread:$0]  %s1634, 128, %s1636, %s1621
        $region108: #{tpu_custom_call.1} parent=87 // pred_fallthru
          _
      $region88: #{tpu_custom_call.1} parent=5 // pred_fallthru
        _
      %p1639 = scmp.le.s32.totalorder 2, %s29
      // Predicated region
      $region109: #{tpu_custom_call.1} parent=5 // pred_check
        %p1640 = pneg %p1639
      $region110: #{tpu_custom_call.1} parent=5 // pred_check_branch
        %1642 = sbr.rel (%p1640) target = $region112
      $region111: #{tpu_custom_call.1} parent=5 // pred_region
        %s1643 = ssub.s32 %s29, 2
        // Predicated region
        $region113: #{tpu_custom_call.1} parent=111 // pred_check
          %p1644 = pneg %p420
        $region114: #{tpu_custom_call.1} parent=111 // pred_check_branch
          %1646 = sbr.rel (%p1644) target = $region116
        $region115: #{tpu_custom_call.1} parent=111 // pred_region
          %s1647 = sand.u32 %s405, 1
          %s1648 = scalar_lea.sflag [#allocation4], %s1647
          %s1649 = sand.u32 %s405, 1
          %s1650 = smul.addr %s1649, 8
          %s1651 = scalar_lea.vmem [#allocation10], %s1650
          %1653 = dma.done %s1648, 128
        $region116: #{tpu_custom_call.1} parent=111 // pred_fallthru
          _
      $region112: #{tpu_custom_call.1} parent=5 // pred_fallthru
        _
    $region6: #{tpu_custom_call.1} parent=1 // loop_footer
      %s33 = sadd.s32 1, %s29
    $region7: #{tpu_custom_call.1} parent=1 // loop_footer_branch
      %28 = sbr.rel target = $region3
    $region8: #{tpu_custom_call.1} parent=1 // loop_exit
      _
    %1654 = vsyncpa [#allocation3], 1
    %s1655 = scalar_lea.sflag [#allocation3], 1
    %1656 = vsyncpa %s1655, 1
    %1657 = vsyncpa [#allocation6], 1
    %1658 = vsyncpa [#allocation9], 1
    %1659 = vsyncpa [#allocation4], 1
    %s1660 = scalar_lea.sflag [#allocation4], 1
    %1661 = vsyncpa %s1660, 1

// kernel: tpu_custom_call.1
$region0: #{tpu_custom_call.1}
  #allocation0 [shape = 'u32[]', space=smem, size = 0x4, offset = 0x4, fixed_abs, tag = 'smem constant byte address 0x4 - core index']
  #allocation1 [shape = 'u32[72,128]{1,0:T(1,128)}', space=vmem, size = 0x9000, scoped, tag = 'internal scratch']
  %s0 = inlined_call_operand.vmem [shape: f32[16,32], index: 0, kind: input, shape index: {}]
  %s1 = inlined_call_operand.hbm [shape: f32[1,32], index: 1, kind: input, shape index: {}]
  %s2 = inlined_call_operand.vmem [shape: f32[1,32], index: 2, kind: input, shape index: {}]
  %s3 = inlined_call_operand.vmem [shape: bf16[32,32], index: 3, kind: input, shape index: {}]
  %s4 = inlined_call_operand.vmem [shape: f32[1,32], index: 4, kind: input, shape index: {}]
  %s5 = inlined_call_operand.vmem [shape: bf16[32,32], index: 5, kind: input, shape index: {}]
  %s6 = inlined_call_operand.vmem [shape: f32[1,32], index: 6, kind: input, shape index: {}]
  %s7 = inlined_call_operand.hbm [shape: bf16[32,32], index: 7, kind: input, shape index: {}]
  %s8 = inlined_call_operand.vmem [shape: f32[1,32], index: 8, kind: input, shape index: {}]
  %s9 = inlined_call_operand.hbm [shape: bf16[32,32], index: 9, kind: input, shape index: {}]
  %s10 = inlined_call_operand.vmem [shape: f32[1,32], index: 10, kind: input, shape index: {}]
  %s11 = inlined_call_operand.vmem [shape: f32[1,32], index: 11, kind: input, shape index: {}]
  %s12 = inlined_call_operand.vmem [shape: f32[1,32], index: 12, kind: input, shape index: {}]
  %s13 = inlined_call_operand.hbm [shape: bf16[32,64], index: 13, kind: input, shape index: {}]
  %s14 = inlined_call_operand.vmem [shape: f32[1,64], index: 14, kind: input, shape index: {}]
  %s15 = inlined_call_operand.vmem [shape: bf16[64,32], index: 15, kind: input, shape index: {}]
  %s16 = inlined_call_operand.vmem [shape: f32[1,32], index: 16, kind: input, shape index: {}]
  %s17 = inlined_call_operand.hbm [shape: f32[16,32], index: 17, kind: output, shape index: {}]
  %s18 = sld [smem:[#allocation0]]
  $region117: #{tpu_custom_call.1} parent=0
    _
  %s20 = ssub.s32 1, %s18
  %s21 = scalar_select 0, %s20, %s18
  $region1: #{tpu_custom_call.1} parent=0
    #allocation2 [shape = 'u8[512]{0}', space=vmem, size = 0x400, scoped, tag = 'input window, operand 1, single buffered']
    #allocation3 [shape = 's32[2]{0}', space=sflag, size = 0x8, scoped, tag = 'scoped memory for tpu_custom_call.1']
    #allocation4 [shape = 's32[2]{0}', space=sflag, size = 0x8, scoped, tag = 'scoped memory for tpu_custom_call.1']
    #allocation5 [shape = 'u8[8192]{0}', space=vmem, size = 0x2000, scoped, tag = 'input window, operand 7, single buffered']
    #allocation6 [shape = 's32[1]{0}', space=sflag, size = 0x4, scoped, tag = 'scoped memory for tpu_custom_call.1']
    #allocation7 [shape = 'u8[8192]{0}', space=vmem, size = 0x2000, scoped, tag = 'input window, operand 9, single buffered']
    #allocation8 [shape = 'u8[8192]{0}', space=vmem, size = 0x2000, scoped, tag = 'input window, operand 13, single buffered']
    #allocation9 [shape = 's32[1]{0}', space=sflag, size = 0x4, scoped, tag = 'scoped memory for tpu_custom_call.1']
    #allocation10 [shape = 'u8[8192]{0}', space=vmem, size = 0x2000, scoped, tag = 'output window, operand 0']
    %22 = vsyncpa [#allocation3], 0
    %23 = vsyncpa [#allocation6], 0
    %24 = vsyncpa [#allocation9], 0
    %25 = vsyncpa [#allocation4], 0
    %s26 = scalar_lea.sflag [#allocation4], 1
    %27 = vsyncpa %s26, 0
    loop: start=0, step=1, limit=4
    $region2: #{tpu_custom_call.1} parent=1 // loop_pre_header
      _
    $region3: #{tpu_custom_call.1} parent=1 // loop_header
      %s29 = sphi 0, %s33
      %p30 = scmp.ge.s32.totalorder %s29, 4
      %s39 = sphi 0, %s41
      %s42 = sphi 0, %s39
      %s43 = sphi 0, %s42
      %s59 = sphi 0, %s43
      %s63 = sphi 0, %s63
      %s65 = sphi 0, %s63
      %s66 = sphi 0, %s65
      %s80 = sphi 0, %s66
      %s84 = sphi 0, %s84
      %s86 = sphi 0, %s84
      %s87 = sphi 0, %s86
      %s101 = sphi 0, %s87
      %s105 = sphi 0, %s105
      %s107 = sphi 0, %s105
      %s108 = sphi 0, %s107
      %s122 = sphi 0, %s108
      %s126 = sphi 0, %s126
      %s128 = sphi 0, %s126
      %s129 = sphi 0, %s128
      %s143 = sphi 0, %s129
      %s147 = sphi 0, %s147
      %s149 = sphi 0, %s147
      %s150 = sphi 0, %s149
      %s164 = sphi 0, %s150
      %s168 = sphi 0, %s168
      %s170 = sphi 0, %s168
      %s171 = sphi 0, %s170
      %s185 = sphi 0, %s171
      %s189 = sphi 0, %s189
      %s191 = sphi 0, %s189
      %s192 = sphi 0, %s191
      %s206 = sphi 0, %s192
      %s210 = sphi 0, %s210
      %s212 = sphi 0, %s210
      %s213 = sphi 0, %s212
      %s227 = sphi 0, %s213
      %s231 = sphi 0, %s231
      %s233 = sphi 0, %s231
      %s234 = sphi 0, %s233
      %s248 = sphi 0, %s234
      %s252 = sphi 0, %s252
      %s254 = sphi 0, %s252
      %s255 = sphi 0, %s254
      %s269 = sphi 0, %s255
      %s273 = sphi 0, %s273
      %s275 = sphi 0, %s273
      %s276 = sphi 0, %s275
      %s290 = sphi 0, %s276
      %s294 = sphi 0, %s294
      %s296 = sphi 0, %s294
      %s297 = sphi 0, %s296
      %s311 = sphi 0, %s297
      %s315 = sphi 0, %s315
      %s317 = sphi 0, %s315
      %s318 = sphi 0, %s317
      %s332 = sphi 0, %s318
      %s336 = sphi 0, %s336
      %s338 = sphi 0, %s336
      %s339 = sphi 0, %s338
      %s353 = sphi 0, %s339
      %s357 = sphi 0, %s357
      %s359 = sphi 0, %s357
      %s360 = sphi 0, %s359
      %s374 = sphi 0, %s360
      %s378 = sphi 0, %s378
      %s380 = sphi 0, %s378
      %s381 = sphi 0, %s380
      %s395 = sphi 0, %s381
      %s401 = sphi 0, %s403
      %s404 = sphi 0, %s401
      %s405 = sphi 0, %s404
      %s421 = sphi 0, %s405
    $region4: #{tpu_custom_call.1} parent=1 // loop_header_branch
      %32 = sbr.rel (%p30) target = $region8
    $region5: #{tpu_custom_call.1} parent=1 // loop_body
      %s34 = ssub.s32 %s29, 1
      %s35 = ssub.s32 %s29, 2
      %s36 = sadd.s32 %s29, 1
      %s37 = ssub.s32 %s29, %s36
      %p38 = scmp.eq.s32.totalorder %s37, 0
      %s40 = sadd.s32 %s39, 1
      %s41 = scalar_select %p38, %s39, %s40
      %p44 = pneg %p38
      %p45 = scmp.eq.s32.totalorder %s29, 1
      %p46 = por %p44, %p45
      %p47 = scmp.ne.s32.totalorder %s39, %s42
      %p48 = scmp.eq.s32.totalorder %s29, 0
      %p49 = por %p47, %p48
      %p50 = scmp.ne.s32.totalorder %s39, %s42
      %p51 = scmp.eq.s32.totalorder %s34, 1
      %p52 = por %p50, %p51
      %p53 = scmp.ne.s32.totalorder %s42, %s43
      %p54 = scmp.eq.s32.totalorder %s34, 0
      %p55 = por %p53, %p54
      %p56 = scmp.ne.s32.totalorder %s42, %s43
      %p57 = scmp.eq.s32.totalorder %s35, 1
      %p58 = por %p56, %p57
      %p60 = scmp.ne.s32.totalorder %s43, %s59
      %p61 = scmp.eq.s32.totalorder %s35, 0
      %p62 = por %p60, %p61
      %s64 = sadd.s32 %s63, 1
      %p67 = scmp.eq.s32.totalorder %s29, 1
      %p68 = scmp.ne.s32.totalorder %s63, %s65
      %p69 = scmp.eq.s32.totalorder %s29, 0
      %p70 = por %p68, %p69
      %p71 = scmp.ne.s32.totalorder %s63, %s65
      %p72 = scmp.eq.s32.totalorder %s34, 1
      %p73 = por %p71, %p72
      %p74 = scmp.ne.s32.totalorder %s65, %s66
      %p75 = scmp.eq.s32.totalorder %s34, 0
      %p76 = por %p74, %p75
      %p77 = scmp.ne.s32.totalorder %s65, %s66
      %p78 = scmp.eq.s32.totalorder %s35, 1
      %p79 = por %p77, %p78
      %p81 = scmp.ne.s32.totalorder %s66, %s80
      %p82 = scmp.eq.s32.totalorder %s35, 0
      %p83 = por %p81, %p82
      %s85 = sadd.s32 %s84, 1
      %p88 = scmp.eq.s32.totalorder %s29, 1
      %p89 = scmp.ne.s32.totalorder %s84, %s86
      %p90 = scmp.eq.s32.totalorder %s29, 0
      %p91 = por %p89, %p90
      %p92 = scmp.ne.s32.totalorder %s84, %s86
      %p93 = scmp.eq.s32.totalorder %s34, 1
      %p94 = por %p92, %p93
      %p95 = scmp.ne.s32.totalorder %s86, %s87
      %p96 = scmp.eq.s32.totalorder %s34, 0
      %p97 = por %p95, %p96
      %p98 = scmp.ne.s32.totalorder %s86, %s87
      %p99 = scmp.eq.s32.totalorder %s35, 1
      %p100 = por %p98, %p99
      %p102 = scmp.ne.s32.totalorder %s87, %s101
      %p103 = scmp.eq.s32.totalorder %s35, 0
      %p104 = por %p102, %p103
      %s106 = sadd.s32 %s105, 1
      %p109 = scmp.eq.s32.totalorder %s29, 1
      %p110 = scmp.ne.s32.totalorder %s105, %s107
      %p111 = scmp.eq.s32.totalorder %s29, 0
      %p112 = por %p110, %p111
      %p113 = scmp.ne.s32.totalorder %s105, %s107
      %p114 = scmp.eq.s32.totalorder %s34, 1
      %p115 = por %p113, %p114
      %p116 = scmp.ne.s32.totalorder %s107, %s108
      %p117 = scmp.eq.s32.totalorder %s34, 0
      %p118 = por %p116, %p117
      %p119 = scmp.ne.s32.totalorder %s107, %s108
      %p120 = scmp.eq.s32.totalorder %s35, 1
      %p121 = por %p119, %p120
      %p123 = scmp.ne.s32.totalorder %s108, %s122
      %p124 = scmp.eq.s32.totalorder %s35, 0
      %p125 = por %p123, %p124
      %s127 = sadd.s32 %s126, 1
      %p130 = scmp.eq.s32.totalorder %s29, 1
      %p131 = scmp.ne.s32.totalorder %s126, %s128
      %p132 = scmp.eq.s32.totalorder %s29, 0
      %p133 = por %p131, %p132
      %p134 = scmp.ne.s32.totalorder %s126, %s128
      %p135 = scmp.eq.s32.totalorder %s34, 1
      %p136 = por %p134, %p135
      %p137 = scmp.ne.s32.totalorder %s128, %s129
      %p138 = scmp.eq.s32.totalorder %s34, 0
      %p139 = por %p137, %p138
      %p140 = scmp.ne.s32.totalorder %s128, %s129
      %p141 = scmp.eq.s32.totalorder %s35, 1
      %p142 = por %p140, %p141
      %p144 = scmp.ne.s32.totalorder %s129, %s143
      %p145 = scmp.eq.s32.totalorder %s35, 0
      %p146 = por %p144, %p145
      %s148 = sadd.s32 %s147, 1
      %p151 = scmp.eq.s32.totalorder %s29, 1
      %p152 = scmp.ne.s32.totalorder %s147, %s149
      %p153 = scmp.eq.s32.totalorder %s29, 0
      %p154 = por %p152, %p153
      %p155 = scmp.ne.s32.totalorder %s147, %s149
      %p156 = scmp.eq.s32.totalorder %s34, 1
      %p157 = por %p155, %p156
      %p158 = scmp.ne.s32.totalorder %s149, %s150
      %p159 = scmp.eq.s32.totalorder %s34, 0
      %p160 = por %p158, %p159
      %p161 = scmp.ne.s32.totalorder %s149, %s150
      %p162 = scmp.eq.s32.totalorder %s35, 1
      %p163 = por %p161, %p162
      %p165 = scmp.ne.s32.totalorder %s150, %s164
      %p166 = scmp.eq.s32.totalorder %s35, 0
      %p167 = por %p165, %p166
      %s169 = sadd.s32 %s168, 1
      %p172 = scmp.eq.s32.totalorder %s29, 1
      %p173 = scmp.ne.s32.totalorder %s168, %s170
      %p174 = scmp.eq.s32.totalorder %s29, 0
      %p175 = por %p173, %p174
      %p176 = scmp.ne.s32.totalorder %s168, %s170
      %p177 = scmp.eq.s32.totalorder %s34, 1
      %p178 = por %p176, %p177
      %p179 = scmp.ne.s32.totalorder %s170, %s171
      %p180 = scmp.eq.s32.totalorder %s34, 0
      %p181 = por %p179, %p180
      %p182 = scmp.ne.s32.totalorder %s170, %s171
      %p183 = scmp.eq.s32.totalorder %s35, 1
      %p184 = por %p182, %p183
      %p186 = scmp.ne.s32.totalorder %s171, %s185
      %p187 = scmp.eq.s32.totalorder %s35, 0
      %p188 = por %p186, %p187
      %s190 = sadd.s32 %s189, 1
      %p193 = scmp.eq.s32.totalorder %s29, 1
      %p194 = scmp.ne.s32.totalorder %s189, %s191
      %p195 = scmp.eq.s32.totalorder %s29, 0
      %p196 = por %p194, %p195
      %p197 = scmp.ne.s32.totalorder %s189, %s191
      %p198 = scmp.eq.s32.totalorder %s34, 1
      %p199 = por %p197, %p198
      %p200 = scmp.ne.s32.totalorder %s191, %s192
      %p201 = scmp.eq.s32.totalorder %s34, 0
      %p202 = por %p200, %p201
      %p203 = scmp.ne.s32.totalorder %s191, %s192
      %p204 = scmp.eq.s32.totalorder %s35, 1
      %p205 = por %p203, %p204
      %p207 = scmp.ne.s32.totalorder %s192, %s206
      %p208 = scmp.eq.s32.totalorder %s35, 0
      %p209 = por %p207, %p208
      %s211 = sadd.s32 %s210, 1
      %p214 = scmp.eq.s32.totalorder %s29, 1
      %p215 = scmp.ne.s32.totalorder %s210, %s212
      %p216 = scmp.eq.s32.totalorder %s29, 0
      %p217 = por %p215, %p216
      %p218 = scmp.ne.s32.totalorder %s210, %s212
      %p219 = scmp.eq.s32.totalorder %s34, 1
      %p220 = por %p218, %p219
      %p221 = scmp.ne.s32.totalorder %s212, %s213
      %p222 = scmp.eq.s32.totalorder %s34, 0
      %p223 = por %p221, %p222
      %p224 = scmp.ne.s32.totalorder %s212, %s213
      %p225 = scmp.eq.s32.totalorder %s35, 1
      %p226 = por %p224, %p225
      %p228 = scmp.ne.s32.totalorder %s213, %s227
      %p229 = scmp.eq.s32.totalorder %s35, 0
      %p230 = por %p228, %p229
      %s232 = sadd.s32 %s231, 1
      %p235 = scmp.eq.s32.totalorder %s29, 1
      %p236 = scmp.ne.s32.totalorder %s231, %s233
      %p237 = scmp.eq.s32.totalorder %s29, 0
      %p238 = por %p236, %p237
      %p239 = scmp.ne.s32.totalorder %s231, %s233
      %p240 = scmp.eq.s32.totalorder %s34, 1
      %p241 = por %p239, %p240
      %p242 = scmp.ne.s32.totalorder %s233, %s234
      %p243 = scmp.eq.s32.totalorder %s34, 0
      %p244 = por %p242, %p243
      %p245 = scmp.ne.s32.totalorder %s233, %s234
      %p246 = scmp.eq.s32.totalorder %s35, 1
      %p247 = por %p245, %p246
      %p249 = scmp.ne.s32.totalorder %s234, %s248
      %p250 = scmp.eq.s32.totalorder %s35, 0
      %p251 = por %p249, %p250
      %s253 = sadd.s32 %s252, 1
      %p256 = scmp.eq.s32.totalorder %s29, 1
      %p257 = scmp.ne.s32.totalorder %s252, %s254
      %p258 = scmp.eq.s32.totalorder %s29, 0
      %p259 = por %p257, %p258
      %p260 = scmp.ne.s32.totalorder %s252, %s254
      %p261 = scmp.eq.s32.totalorder %s34, 1
      %p262 = por %p260, %p261
      %p263 = scmp.ne.s32.totalorder %s254, %s255
      %p264 = scmp.eq.s32.totalorder %s34, 0
      %p265 = por %p263, %p264
      %p266 = scmp.ne.s32.totalorder %s254, %s255
      %p267 = scmp.eq.s32.totalorder %s35, 1
      %p268 = por %p266, %p267
      %p270 = scmp.ne.s32.totalorder %s255, %s269
      %p271 = scmp.eq.s32.totalorder %s35, 0
      %p272 = por %p270, %p271
      %s274 = sadd.s32 %s273, 1
      %p277 = scmp.eq.s32.totalorder %s29, 1
      %p278 = scmp.ne.s32.totalorder %s273, %s275
      %p279 = scmp.eq.s32.totalorder %s29, 0
      %p280 = por %p278, %p279
      %p281 = scmp.ne.s32.totalorder %s273, %s275
      %p282 = scmp.eq.s32.totalorder %s34, 1
      %p283 = por %p281, %p282
      %p284 = scmp.ne.s32.totalorder %s275, %s276
      %p285 = scmp.eq.s32.totalorder %s34, 0
      %p286 = por %p284, %p285
      %p287 = scmp.ne.s32.totalorder %s275, %s276
      %p288 = scmp.eq.s32.totalorder %s35, 1
      %p289 = por %p287, %p288
      %p291 = scmp.ne.s32.totalorder %s276, %s290
      %p292 = scmp.eq.s32.totalorder %s35, 0
      %p293 = por %p291, %p292
      %s295 = sadd.s32 %s294, 1
      %p298 = scmp.eq.s32.totalorder %s29, 1
      %p299 = scmp.ne.s32.totalorder %s294, %s296
      %p300 = scmp.eq.s32.totalorder %s29, 0
      %p301 = por %p299, %p300
      %p302 = scmp.ne.s32.totalorder %s294, %s296
      %p303 = scmp.eq.s32.totalorder %s34, 1
      %p304 = por %p302, %p303
      %p305 = scmp.ne.s32.totalorder %s296, %s297
      %p306 = scmp.eq.s32.totalorder %s34, 0
      %p307 = por %p305, %p306
      %p308 = scmp.ne.s32.totalorder %s296, %s297
      %p309 = scmp.eq.s32.totalorder %s35, 1
      %p310 = por %p308, %p309
      %p312 = scmp.ne.s32.totalorder %s297, %s311
      %p313 = scmp.eq.s32.totalorder %s35, 0
      %p314 = por %p312, %p313
      %s316 = sadd.s32 %s315, 1
      %p319 = scmp.eq.s32.totalorder %s29, 1
      %p320 = scmp.ne.s32.totalorder %s315, %s317
      %p321 = scmp.eq.s32.totalorder %s29, 0
      %p322 = por %p320, %p321
      %p323 = scmp.ne.s32.totalorder %s315, %s317
      %p324 = scmp.eq.s32.totalorder %s34, 1
      %p325 = por %p323, %p324
      %p326 = scmp.ne.s32.totalorder %s317, %s318
      %p327 = scmp.eq.s32.totalorder %s34, 0
      %p328 = por %p326, %p327
      %p329 = scmp.ne.s32.totalorder %s317, %s318
      %p330 = scmp.eq.s32.totalorder %s35, 1
      %p331 = por %p329, %p330
      %p333 = scmp.ne.s32.totalorder %s318, %s332
      %p334 = scmp.eq.s32.totalorder %s35, 0
      %p335 = por %p333, %p334
      %s337 = sadd.s32 %s336, 1
      %p340 = scmp.eq.s32.totalorder %s29, 1
      %p341 = scmp.ne.s32.totalorder %s336, %s338
      %p342 = scmp.eq.s32.totalorder %s29, 0
      %p343 = por %p341, %p342
      %p344 = scmp.ne.s32.totalorder %s336, %s338
      %p345 = scmp.eq.s32.totalorder %s34, 1
      %p346 = por %p344, %p345
      %p347 = scmp.ne.s32.totalorder %s338, %s339
      %p348 = scmp.eq.s32.totalorder %s34, 0
      %p349 = por %p347, %p348
      %p350 = scmp.ne.s32.totalorder %s338, %s339
      %p351 = scmp.eq.s32.totalorder %s35, 1
      %p352 = por %p350, %p351
      %p354 = scmp.ne.s32.totalorder %s339, %s353
      %p355 = scmp.eq.s32.totalorder %s35, 0
      %p356 = por %p354, %p355
      %s358 = sadd.s32 %s357, 1
      %p361 = scmp.eq.s32.totalorder %s29, 1
      %p362 = scmp.ne.s32.totalorder %s357, %s359
      %p363 = scmp.eq.s32.totalorder %s29, 0
      %p364 = por %p362, %p363
      %p365 = scmp.ne.s32.totalorder %s357, %s359
      %p366 = scmp.eq.s32.totalorder %s34, 1
      %p367 = por %p365, %p366
      %p368 = scmp.ne.s32.totalorder %s359, %s360
      %p369 = scmp.eq.s32.totalorder %s34, 0
      %p370 = por %p368, %p369
      %p371 = scmp.ne.s32.totalorder %s359, %s360
      %p372 = scmp.eq.s32.totalorder %s35, 1
      %p373 = por %p371, %p372
      %p375 = scmp.ne.s32.totalorder %s360, %s374
      %p376 = scmp.eq.s32.totalorder %s35, 0
      %p377 = por %p375, %p376
      %s379 = sadd.s32 %s378, 1
      %p382 = scmp.eq.s32.totalorder %s29, 1
      %p383 = scmp.ne.s32.totalorder %s378, %s380
      %p384 = scmp.eq.s32.totalorder %s29, 0
      %p385 = por %p383, %p384
      %p386 = scmp.ne.s32.totalorder %s378, %s380
      %p387 = scmp.eq.s32.totalorder %s34, 1
      %p388 = por %p386, %p387
      %p389 = scmp.ne.s32.totalorder %s380, %s381
      %p390 = scmp.eq.s32.totalorder %s34, 0
      %p391 = por %p389, %p390
      %p392 = scmp.ne.s32.totalorder %s380, %s381
      %p393 = scmp.eq.s32.totalorder %s35, 1
      %p394 = por %p392, %p393
      %p396 = scmp.ne.s32.totalorder %s381, %s395
      %p397 = scmp.eq.s32.totalorder %s35, 0
      %p398 = por %p396, %p397
      %s399 = ssub.s32 %s29, %s36
      %p400 = scmp.eq.s32.totalorder %s399, 0
      %s402 = sadd.s32 %s401, 1
      %s403 = scalar_select %p400, %s401, %s402
      %p406 = pneg %p400
      %p407 = scmp.eq.s32.totalorder %s29, 1
      %p408 = por %p406, %p407
      %p409 = scmp.ne.s32.totalorder %s401, %s404
      %p410 = scmp.eq.s32.totalorder %s29, 0
      %p411 = por %p409, %p410
      %p412 = scmp.ne.s32.totalorder %s401, %s404
      %p413 = scmp.eq.s32.totalorder %s34, 1
      %p414 = por %p412, %p413
      %p415 = scmp.ne.s32.totalorder %s404, %s405
      %p416 = scmp.eq.s32.totalorder %s34, 0
      %p417 = por %p415, %p416
      %p418 = scmp.ne.s32.totalorder %s404, %s405
      %p419 = scmp.eq.s32.totalorder %s35, 1
      %p420 = por %p418, %p419
      %p422 = scmp.ne.s32.totalorder %s405, %s421
      %p423 = scmp.eq.s32.totalorder %s35, 0
      %p424 = por %p422, %p423
      %p425 = scmp.le.s32.totalorder 1, %s29
      %p426 = scmp.lt.s32.totalorder %s29, 3
      %p427 = pnand %p425, %p426
      %p428 = pneg %p427
      // Predicated region
      $region9: #{tpu_custom_call.1} parent=5 // pred_check
        _
      $region10: #{tpu_custom_call.1} parent=5 // pred_check_branch
        %430 = sbr.rel (%p427) target = $region12
      $region11: #{tpu_custom_call.1} parent=5 // pred_region
        %s431 = ssub.s32 %s29, 1
        // Predicated region
        $region13: #{tpu_custom_call.1} parent=11 // pred_check
          %p432 = pneg %p76
        $region14: #{tpu_custom_call.1} parent=11 // pred_check_branch
          %434 = sbr.rel (%p432) target = $region16
        $region15: #{tpu_custom_call.1} parent=11 // pred_region
          %436 = vsyncadd [#allocation3], 0
          %s438 = sshll.u32 %s1, 4
          %s439 = int_to_ptr.hbm [resolvable:$true] %s438
          %s440 = sshll.u32 [#allocation2], 4
          %s441 = int_to_ptr.vmem [resolvable:$true] %s440
          %443 = dma.hbm_to_vmem [thread:$0]  %s439, 16, %s441, [#allocation3]
        $region16: #{tpu_custom_call.1} parent=11 // pred_fallthru
          _
        // Predicated region
        $region17: #{tpu_custom_call.1} parent=11 // pred_check
          %p444 = pneg %p97
        $region18: #{tpu_custom_call.1} parent=11 // pred_check_branch
          %446 = sbr.rel (%p444) target = $region20
        $region19: #{tpu_custom_call.1} parent=11 // pred_region
          _
        $region20: #{tpu_custom_call.1} parent=11 // pred_fallthru
          _
        // Predicated region
        $region21: #{tpu_custom_call.1} parent=11 // pred_check
          %p447 = pneg %p118
        $region22: #{tpu_custom_call.1} parent=11 // pred_check_branch
          %449 = sbr.rel (%p447) target = $region24
        $region23: #{tpu_custom_call.1} parent=11 // pred_region
          _
        $region24: #{tpu_custom_call.1} parent=11 // pred_fallthru
          _
        // Predicated region
        $region25: #{tpu_custom_call.1} parent=11 // pred_check
          %p450 = pneg %p139
        $region26: #{tpu_custom_call.1} parent=11 // pred_check_branch
          %452 = sbr.rel (%p450) target = $region28
        $region27: #{tpu_custom_call.1} parent=11 // pred_region
          _
        $region28: #{tpu_custom_call.1} parent=11 // pred_fallthru
          _
        // Predicated region
        $region29: #{tpu_custom_call.1} parent=11 // pred_check
          %p453 = pneg %p160
        $region30: #{tpu_custom_call.1} parent=11 // pred_check_branch
          %455 = sbr.rel (%p453) target = $region32
        $region31: #{tpu_custom_call.1} parent=11 // pred_region
          _
        $region32: #{tpu_custom_call.1} parent=11 // pred_fallthru
          _
        // Predicated region
        $region33: #{tpu_custom_call.1} parent=11 // pred_check
          %p456 = pneg %p181
        $region34: #{tpu_custom_call.1} parent=11 // pred_check_branch
          %458 = sbr.rel (%p456) target = $region36
        $region35: #{tpu_custom_call.1} parent=11 // pred_region
          _
        $region36: #{tpu_custom_call.1} parent=11 // pred_fallthru
          _
        // Predicated region
        $region37: #{tpu_custom_call.1} parent=11 // pred_check
          %p459 = pneg %p202
        $region38: #{tpu_custom_call.1} parent=11 // pred_check_branch
          %461 = sbr.rel (%p459) target = $region40
        $region39: #{tpu_custom_call.1} parent=11 // pred_region
          %463 = vsyncadd [#allocation6], 0
          %s464 = sshll.u32 %s7, 4
          %s465 = int_to_ptr.hbm [resolvable:$true] %s464
          %s466 = sshll.u32 [#allocation5], 4
          %s467 = int_to_ptr.vmem [resolvable:$true] %s466
          %472 = dma.hbm_to_vmem [thread:$0]  %s465, 256, %s467, [#allocation6], 64, 64, 4
        $region40: #{tpu_custom_call.1} parent=11 // pred_fallthru
          _
        // Predicated region
        $region41: #{tpu_custom_call.1} parent=11 // pred_check
          %p473 = pneg %p223
        $region42: #{tpu_custom_call.1} parent=11 // pred_check_branch
          %475 = sbr.rel (%p473) target = $region44
        $region43: #{tpu_custom_call.1} parent=11 // pred_region
          _
        $region44: #{tpu_custom_call.1} parent=11 // pred_fallthru
          _
        // Predicated region
        $region45: #{tpu_custom_call.1} parent=11 // pred_check
          %p476 = pneg %p244
        $region46: #{tpu_custom_call.1} parent=11 // pred_check_branch
          %478 = sbr.rel (%p476) target = $region48
        $region47: #{tpu_custom_call.1} parent=11 // pred_region
          %480 = vsyncadd [#allocation6], 0
          %s481 = sshll.u32 %s9, 4
          %s482 = int_to_ptr.hbm [resolvable:$true] %s481
          %s483 = sshll.u32 [#allocation7], 4
          %s484 = int_to_ptr.vmem [resolvable:$true] %s483
          %489 = dma.hbm_to_vmem [thread:$0]  %s482, 256, %s484, [#allocation6], 64, 64, 4
        $region48: #{tpu_custom_call.1} parent=11 // pred_fallthru
          _
        // Predicated region
        $region49: #{tpu_custom_call.1} parent=11 // pred_check
          %p490 = pneg %p265
        $region50: #{tpu_custom_call.1} parent=11 // pred_check_branch
          %492 = sbr.rel (%p490) target = $region52
        $region51: #{tpu_custom_call.1} parent=11 // pred_region
          _
        $region52: #{tpu_custom_call.1} parent=11 // pred_fallthru
          _
        // Predicated region
        $region53: #{tpu_custom_call.1} parent=11 // pred_check
          %p493 = pneg %p286
        $region54: #{tpu_custom_call.1} parent=11 // pred_check_branch
          %495 = sbr.rel (%p493) target = $region56
        $region55: #{tpu_custom_call.1} parent=11 // pred_region
          _
        $region56: #{tpu_custom_call.1} parent=11 // pred_fallthru
          _
        // Predicated region
        $region57: #{tpu_custom_call.1} parent=11 // pred_check
          %p496 = pneg %p307
        $region58: #{tpu_custom_call.1} parent=11 // pred_check_branch
          %498 = sbr.rel (%p496) target = $region60
        $region59: #{tpu_custom_call.1} parent=11 // pred_region
          _
        $region60: #{tpu_custom_call.1} parent=11 // pred_fallthru
          _
        // Predicated region
        $region61: #{tpu_custom_call.1} parent=11 // pred_check
          %p499 = pneg %p328
        $region62: #{tpu_custom_call.1} parent=11 // pred_check_branch
          %501 = sbr.rel (%p499) target = $region64
        $region63: #{tpu_custom_call.1} parent=11 // pred_region
          %503 = vsyncadd [#allocation9], 0
          %s504 = sshll.u32 %s13, 4
          %s505 = int_to_ptr.hbm [resolvable:$true] %s504
          %s506 = sshll.u32 [#allocation8], 4
          %s507 = int_to_ptr.vmem [resolvable:$true] %s506
          %512 = dma.hbm_to_vmem [thread:$0]  %s505, 256, %s507, [#allocation9], 64, 64, 4
        $region64: #{tpu_custom_call.1} parent=11 // pred_fallthru
          _
        // Predicated region
        $region65: #{tpu_custom_call.1} parent=11 // pred_check
          %p513 = pneg %p349
        $region66: #{tpu_custom_call.1} parent=11 // pred_check_branch
          %515 = sbr.rel (%p513) target = $region68
        $region67: #{tpu_custom_call.1} parent=11 // pred_region
          _
        $region68: #{tpu_custom_call.1} parent=11 // pred_fallthru
          _
        // Predicated region
        $region69: #{tpu_custom_call.1} parent=11 // pred_check
          %p516 = pneg %p370
        $region70: #{tpu_custom_call.1} parent=11 // pred_check_branch
          %518 = sbr.rel (%p516) target = $region72
        $region71: #{tpu_custom_call.1} parent=11 // pred_region
          _
        $region72: #{tpu_custom_call.1} parent=11 // pred_fallthru
          _
        // Predicated region
        $region73: #{tpu_custom_call.1} parent=11 // pred_check
          %p519 = pneg %p391
        $region74: #{tpu_custom_call.1} parent=11 // pred_check_branch
          %521 = sbr.rel (%p519) target = $region76
        $region75: #{tpu_custom_call.1} parent=11 // pred_region
          _
        $region76: #{tpu_custom_call.1} parent=11 // pred_fallthru
          _
      $region12: #{tpu_custom_call.1} parent=5 // pred_fallthru
        _
      %p522 = scmp.lt.s32.totalorder %s29, 2
      // Predicated region
      $region77: #{tpu_custom_call.1} parent=5 // pred_check
        %p523 = pneg %p522
      $region78: #{tpu_custom_call.1} parent=5 // pred_check_branch
        %525 = sbr.rel (%p523) target = $region80
      $region79: #{tpu_custom_call.1} parent=5 // pred_region
        // Predicated region
        $region81: #{tpu_custom_call.1} parent=79 // pred_check
          %p526 = pneg %p49
        $region82: #{tpu_custom_call.1} parent=79 // pred_check_branch
          %528 = sbr.rel (%p526) target = $region84
        $region83: #{tpu_custom_call.1} parent=79 // pred_region
          %p529 = scmp.lt.s32.totalorder %s29, 1
          %s530 = scalar_select %p529, %s29, 1
          %s531 = smul.addr %s530, 8
          %s532 = scalar_lea.vmem %s0, %s531
        $region84: #{tpu_custom_call.1} parent=79 // pred_fallthru
          _
      $region80: #{tpu_custom_call.1} parent=5 // pred_fallthru
        _
      %p533 = scmp.le.s32.totalorder 1, %s29
      %p534 = scmp.lt.s32.totalorder %s29, 3
      %p535 = pnand %p533, %p534
      %p536 = pneg %p535
      // Predicated region
      $region85: #{tpu_custom_call.1} parent=5 // pred_check
        _
      $region86: #{tpu_custom_call.1} parent=5 // pred_check_branch
        %538 = sbr.rel (%p535) target = $region88
      $region87: #{tpu_custom_call.1} parent=5 // pred_region
        %s539 = ssub.s32 %s29, 1
        // Predicated region
        $region89: #{tpu_custom_call.1} parent=87 // pred_check
          %p540 = pneg %p76
        $region90: #{tpu_custom_call.1} parent=87 // pred_check_branch
          %542 = sbr.rel (%p540) target = $region92
        $region91: #{tpu_custom_call.1} parent=87 // pred_region
          %544 = dma.done [#allocation3], 16
        $region92: #{tpu_custom_call.1} parent=87 // pred_fallthru
          _
        // Predicated region
        $region93: #{tpu_custom_call.1} parent=87 // pred_check
          %p545 = pneg %p202
        $region94: #{tpu_custom_call.1} parent=87 // pred_check_branch
          %547 = sbr.rel (%p545) target = $region96
        $region95: #{tpu_custom_call.1} parent=87 // pred_region
          %549 = dma.done [#allocation6], 256
        $region96: #{tpu_custom_call.1} parent=87 // pred_fallthru
          _
        // Predicated region
        $region97: #{tpu_custom_call.1} parent=87 // pred_check
          %p550 = pneg %p244
        $region98: #{tpu_custom_call.1} parent=87 // pred_check_branch
          %552 = sbr.rel (%p550) target = $region100
        $region99: #{tpu_custom_call.1} parent=87 // pred_region
          %554 = dma.done [#allocation6], 256
        $region100: #{tpu_custom_call.1} parent=87 // pred_fallthru
          _
        // Predicated region
        $region101: #{tpu_custom_call.1} parent=87 // pred_check
          %p555 = pneg %p328
        $region102: #{tpu_custom_call.1} parent=87 // pred_check_branch
          %557 = sbr.rel (%p555) target = $region104
        $region103: #{tpu_custom_call.1} parent=87 // pred_region
          %559 = dma.done [#allocation9], 256
        $region104: #{tpu_custom_call.1} parent=87 // pred_fallthru
          _
        %p560 = scmp.lt.s32.totalorder %s34, 1
        %s561 = scalar_select %p560, %s34, 1
        %s562 = smul.addr %s561, 8
        %s563 = scalar_lea.vmem %s0, %s562
        %p564 = pneg %p55
        %p565 = pneg %p52
        %p566 = pneg %p76
        %p567 = pneg %p73
        %p568 = pneg %p97
        %p569 = pneg %p94
        %p570 = pneg %p118
        %p571 = pneg %p115
        %p572 = pneg %p139
        %p573 = pneg %p136
        %p574 = pneg %p160
        %p575 = pneg %p157
        %p576 = pneg %p181
        %p577 = pneg %p178
        %p578 = pneg %p202
        %p579 = pneg %p199
        %p580 = pneg %p223
        %p581 = pneg %p220
        %p582 = pneg %p244
        %p583 = pneg %p241
        %p584 = pneg %p265
        %p585 = pneg %p262
        %p586 = pneg %p286
        %p587 = pneg %p283
        %p588 = pneg %p307
        %p589 = pneg %p304
        %p590 = pneg %p328
        %p591 = pneg %p325
        %p592 = pneg %p349
        %p593 = pneg %p346
        %p594 = pneg %p370
        %p595 = pneg %p367
        %p596 = pneg %p391
        %p597 = pneg %p388
        %p598 = pneg %p417
        %p599 = pneg %p414
        %s600 = sand.u32 %s404, 1
        %s601 = scalar_lea.sflag [#allocation4], %s600
        %s602 = sand.u32 %s404, 1
        %s603 = smul.addr %s602, 8
        %s604 = scalar_lea.vmem [#allocation10], %s603
        %p605 = scmp.lt.s32.totalorder %s34, 1
        %s606 = scalar_select %p605, %s34, 1
        %s607 = smul.addr %s606, 8
        %s608 = scalar_lea.vmem %s0, %s607
        %v610 = vld [vmem:[%s608] sm:$0xff]
        %v611 = vld [vmem:[#allocation2] sm:$0x1]
        %v612 = vld [vmem:[%s2] sm:$0x1]
        %vm613 = vcmask 261120
        %v614 = vsel %vm613, %v610, 0.0
        %615 = vadd.xlane.f32.xlu0 %v614
        %v616 = vpop.xlane.xlu0 %615
        %v617 = vrcp.pop 32.0
        %v618 = vmul.f32 32.0, %v617
        %v619 = vsub.f32 1.0, %v618
        %v620 = vmul.f32 %v617, %v619
        %v621 = vadd.f32 %v617, %v620
        %vm622 = vweird.f32 %v617
        %v623 = vsel %vm622, %v617, %v621
        %v624 = vmul.f32 %v616, %v623
        %v625 = vsub.f32 %v610, %v624
        %v626 = vmul.f32 %v625, %v625
        %v627 = vsel %vm613, %v626, 0.0
        %628 = vadd.xlane.f32.xlu0 %v627
        %v629 = vpop.xlane.xlu0 %628
        %v630 = vmul.f32 %v629, %v623
        %v631 = vadd.f32 %v630, 1e-05
        %v632 = vrsqrt.pop %v631
        %v633 = vmul.f32 %v632, %v631
        %v634 = vmul.f32 %v633, %v632
        %v635 = vmul.f32 0.5, %v634
        %v636 = vsub.f32 1.5, %v635
        %v637 = vmul.f32 %v632, %v636
        %vm638 = vweird.f32 %v631
        %vm639 = vweird.f32 %v632
        %vm640 = vmor %vm638, %vm639
        %v641 = vsel %vm640, %v632, %v637
        %v642 = vmul.f32 %v625, %v641
        %v644 = vperm.slane %v611, 0
        %v646 = vmul.f32 %v642, %v644
        %v648 = vperm.slane %v612, 0
        %v650 = vadd.f32 %v646, %v648
        %v651 = vpack.c.bf16 %v650, %v650
        %v652 = vld [vmem:[%s3] sm:$0xf]
        %v653 = vld [vmem:[%s3 + $0x4] sm:$0xf]
        %v654 = vld [vmem:[%s3 + $0x8] sm:$0xf]
        %v655 = vld [vmem:[%s3 + $0xc] sm:$0xf]
        %v656 = vld [vmem:[%s4] sm:$0x1]
        %v658 = vperm.slane %v656, 0
        %v664 = vunpack.c.l.b16 %v652
        %v665 = vunpack.c.l.b16 %v653
        %v666 = vunpack.c.l.b16 %v654
        %v667 = vunpack.c.l.b16 %v655
        %v668 = vpack.c.b16 %v665, %v664
        %v669 = vpack.c.b16 %v667, %v666
        %v673 = vsel %vm613, %v651, 0
        %675 = vmatpush.bf16.msra.mxu0 0
        %676 = vmatpush.bf16.msra.mxu0 0
        %677 = vmatpush.bf16.msra.mxu0 0
        %678 = vmatpush.bf16.msra.mxu0 0
        %679 = vmatpush.bf16.msra.mxu0 0
        %680 = vmatpush.bf16.msra.mxu0 0
        %681 = vmatpush.bf16.msra.mxu0 %v669
        %682 = vmatpush.bf16.msra.mxu0 %v668
        %683 = vmatmul.bf16.gmra.mxu0 %v673
        %v684 = vpop.f32.mrf.mxu0
        %v685 = vadd.f32 %v658, %v684
        %v686 = vpop.f32.mrf.mxu0
        %687 = vdwg.mxu0
        %v688 = vld [vmem:[%s5] sm:$0xf]
        %v689 = vld [vmem:[%s5 + $0x4] sm:$0xf]
        %v690 = vld [vmem:[%s5 + $0x8] sm:$0xf]
        %v691 = vld [vmem:[%s5 + $0xc] sm:$0xf]
        %v692 = vld [vmem:[%s6] sm:$0x1]
        %v694 = vperm.slane %v692, 0
        %v700 = vunpack.c.l.b16 %v688
        %v701 = vunpack.c.l.b16 %v689
        %v702 = vunpack.c.l.b16 %v690
        %v703 = vunpack.c.l.b16 %v691
        %v704 = vpack.c.b16 %v701, %v700
        %v705 = vpack.c.b16 %v703, %v702
        %708 = vmatpush.bf16.msra.mxu0 0
        %709 = vmatpush.bf16.msra.mxu0 0
        %710 = vmatpush.bf16.msra.mxu0 0
        %711 = vmatpush.bf16.msra.mxu0 0
        %712 = vmatpush.bf16.msra.mxu0 0
        %713 = vmatpush.bf16.msra.mxu0 0
        %714 = vmatpush.bf16.msra.mxu0 %v705
        %715 = vmatpush.bf16.msra.mxu0 %v704
        %716 = vmatmul.bf16.gmra.mxu0 %v673
        %v717 = vpop.f32.mrf.mxu0
        %v718 = vadd.f32 %v694, %v717
        %v719 = vpop.f32.mrf.mxu0
        %720 = vdwg.mxu0
        %v721 = vld [vmem:[#allocation5] sm:$0xf]
        %v722 = vld [vmem:[#allocation5 + $0x4] sm:$0xf]
        %v723 = vld [vmem:[#allocation5 + $0x8] sm:$0xf]
        %v724 = vld [vmem:[#allocation5 + $0xc] sm:$0xf]
        %v725 = vld [vmem:[%s8] sm:$0x1]
        %v727 = vperm.slane %v725, 0
        %v733 = vunpack.c.l.b16 %v721
        %v734 = vunpack.c.l.b16 %v722
        %v735 = vunpack.c.l.b16 %v723
        %v736 = vunpack.c.l.b16 %v724
        %v737 = vpack.c.b16 %v734, %v733
        %v738 = vpack.c.b16 %v736, %v735
        %741 = vmatpush.bf16.msra.mxu0 0
        %742 = vmatpush.bf16.msra.mxu0 0
        %743 = vmatpush.bf16.msra.mxu0 0
        %744 = vmatpush.bf16.msra.mxu0 0
        %745 = vmatpush.bf16.msra.mxu0 0
        %746 = vmatpush.bf16.msra.mxu0 0
        %747 = vmatpush.bf16.msra.mxu0 %v738
        %748 = vmatpush.bf16.msra.mxu0 %v737
        %749 = vmatmul.bf16.gmra.mxu0 %v673
        %v750 = vpop.f32.mrf.mxu0
        %v751 = vadd.f32 %v727, %v750
        %v752 = vpop.f32.mrf.mxu0
        %753 = vdwg.mxu0
        %755 = vrot.lane.b32.xlu0 %v685, 120
        %v756 = vpop.permute.xlu0 %755
        %758 = vrot.lane.b32.xlu0 %v685, 112
        %v759 = vpop.permute.xlu0 %758
        %761 = vrot.lane.b32.xlu0 %v685, 104
        %v762 = vpop.permute.xlu0 %761
        %v764 = vrot.slane %v759, 4
        %vm765 = vcmask 1047556
        %v766 = vsel %vm765, %v764, %v685
        %v767 = vrot.slane %v685, 4
        %v768 = vsel %vm765, %v759, %v767
        %v770 = vunpack.c.l.s4 1983009808
        %v771 = vunpack.c.0.s8 %v770
        %v772 = vperm.slane %v766, %v771
        %v774 = vunpack.c.l.s4 1983009808
        %v775 = vunpack.c.0.s8 %v774
        %v776 = vperm.slane %v768, %v775
        %v777 = vrot.slane %v762, 4
        %v778 = vsel %vm765, %v777, %v756
        %v779 = vrot.slane %v756, 4
        %v780 = vsel %vm765, %v762, %v779
        %v782 = vunpack.c.l.s4 1983009808
        %v783 = vunpack.c.0.s8 %v782
        %v784 = vperm.slane %v778, %v783
        %v786 = vunpack.c.l.s4 1983009808
        %v787 = vunpack.c.0.s8 %v786
        %v788 = vperm.slane %v780, %v787
        %v789 = vrot.slane %v784, 4
        %v790 = vsel %vm765, %v789, %v772
        %v791 = vrot.slane %v772, 4
        %v792 = vsel %vm765, %v784, %v791
        %v794 = vunpack.c.l.s4 1934713408
        %v795 = vunpack.c.0.s8 %v794
        %v796 = vperm.slane %v790, %v795
        %v798 = vunpack.c.l.s4 1934713408
        %v799 = vunpack.c.0.s8 %v798
        %v800 = vperm.slane %v792, %v799
        %v801 = vrot.slane %v788, 4
        %v802 = vsel %vm765, %v801, %v776
        %v803 = vrot.slane %v776, 4
        %v804 = vsel %vm765, %v788, %v803
        %v806 = vunpack.c.l.s4 1934713408
        %v807 = vunpack.c.0.s8 %v806
        %v808 = vperm.slane %v802, %v807
        %v810 = vunpack.c.l.s4 1934713408
        %v811 = vunpack.c.0.s8 %v810
        %v812 = vperm.slane %v804, %v811
        %v813 = vrot.slane %v796, 4
        %v814 = vsel %vm765, 0.0, %v813
        %v815 = vrot.slane %v800, 4
        %v816 = vsel %vm765, 0.0, %v815
        %v817 = vrot.slane %v808, 4
        %v818 = vsel %vm765, 0.0, %v817
        %v819 = vrot.slane %v812, 4
        %v820 = vsel %vm765, 0.0, %v819
        %v821 = vsel %vm765, %v815, %v796
        %v823 = vunpack.c.l.s4 1983009808
        %v824 = vunpack.c.0.s8 %v823
        %v825 = vperm.slane %v821, %v824
        %v826 = vrot.slane %v816, 4
        %v827 = vsel %vm765, %v826, %v814
        %v829 = vunpack.c.l.s4 1983009808
        %v830 = vunpack.c.0.s8 %v829
        %v831 = vperm.slane %v827, %v830
        %v832 = vsel %vm765, %v819, %v808
        %v834 = vunpack.c.l.s4 1983009808
        %v835 = vunpack.c.0.s8 %v834
        %v836 = vperm.slane %v832, %v835
        %v837 = vrot.slane %v820, 4
        %v838 = vsel %vm765, %v837, %v818
        %v840 = vunpack.c.l.s4 1983009808
        %v841 = vunpack.c.0.s8 %v840
        %v842 = vperm.slane %v838, %v841
        %v843 = vrot.slane %v831, 4
        %v844 = vsel %vm765, %v843, %v825
        %v845 = vrot.slane %v825, 4
        %v846 = vsel %vm765, %v831, %v845
        %v848 = vunpack.c.l.s4 1934713408
        %v849 = vunpack.c.0.s8 %v848
        %v850 = vperm.slane %v844, %v849
        %v852 = vunpack.c.l.s4 1934713408
        %v853 = vunpack.c.0.s8 %v852
        %v854 = vperm.slane %v846, %v853
        %v855 = vrot.slane %v842, 4
        %v856 = vsel %vm765, %v855, %v836
        %v857 = vrot.slane %v836, 4
        %v858 = vsel %vm765, %v842, %v857
        %v860 = vunpack.c.l.s4 1934713408
        %v861 = vunpack.c.0.s8 %v860
        %v862 = vperm.slane %v856, %v861
        %v864 = vunpack.c.l.s4 1934713408
        %v865 = vunpack.c.0.s8 %v864
        %v866 = vperm.slane %v858, %v865
        %v867 = vrot.slane %v862, 4
        %v868 = vsel %vm765, %v867, %v850
        %v869 = vrot.slane %v850, 4
        %v870 = vsel %vm765, %v862, %v869
        %v871 = vrot.slane %v866, 4
        %v872 = vsel %vm765, %v871, %v854
        %v873 = vrot.slane %v854, 4
        %v874 = vsel %vm765, %v866, %v873
        %v875 = vpack.c.bf16 %v868, %v868
        %v876 = vpack.c.bf16 %v870, %v870
        %v877 = vpack.c.bf16 %v872, %v872
        %v878 = vpack.c.bf16 %v874, %v874
        %880 = vrot.lane.b32.xlu0 %v718, 120
        %v881 = vpop.permute.xlu0 %880
        %883 = vrot.lane.b32.xlu0 %v718, 112
        %v884 = vpop.permute.xlu0 %883
        %886 = vrot.lane.b32.xlu0 %v718, 104
        %v887 = vpop.permute.xlu0 %886
        %v889 = vrot.slane %v884, 4
        %v890 = vsel %vm765, %v889, %v718
        %v891 = vrot.slane %v718, 4
        %v892 = vsel %vm765, %v884, %v891
        %v894 = vunpack.c.l.s4 1983009808
        %v895 = vunpack.c.0.s8 %v894
        %v896 = vperm.slane %v890, %v895
        %v898 = vunpack.c.l.s4 1983009808
        %v899 = vunpack.c.0.s8 %v898
        %v900 = vperm.slane %v892, %v899
        %v901 = vrot.slane %v887, 4
        %v902 = vsel %vm765, %v901, %v881
        %v903 = vrot.slane %v881, 4
        %v904 = vsel %vm765, %v887, %v903
        %v906 = vunpack.c.l.s4 1983009808
        %v907 = vunpack.c.0.s8 %v906
        %v908 = vperm.slane %v902, %v907
        %v910 = vunpack.c.l.s4 1983009808
        %v911 = vunpack.c.0.s8 %v910
        %v912 = vperm.slane %v904, %v911
        %v913 = vrot.slane %v908, 4
        %v914 = vsel %vm765, %v913, %v896
        %v915 = vrot.slane %v896, 4
        %v916 = vsel %vm765, %v908, %v915
        %v918 = vunpack.c.l.s4 1934713408
        %v919 = vunpack.c.0.s8 %v918
        %v920 = vperm.slane %v914, %v919
        %v922 = vunpack.c.l.s4 1934713408
        %v923 = vunpack.c.0.s8 %v922
        %v924 = vperm.slane %v916, %v923
        %v925 = vrot.slane %v912, 4
        %v926 = vsel %vm765, %v925, %v900
        %v927 = vrot.slane %v900, 4
        %v928 = vsel %vm765, %v912, %v927
        %v930 = vunpack.c.l.s4 1934713408
        %v931 = vunpack.c.0.s8 %v930
        %v932 = vperm.slane %v926, %v931
        %v934 = vunpack.c.l.s4 1934713408
        %v935 = vunpack.c.0.s8 %v934
        %v936 = vperm.slane %v928, %v935
        %v937 = vrot.slane %v920, 4
        %v938 = vsel %vm765, 0.0, %v937
        %v939 = vrot.slane %v924, 4
        %v940 = vsel %vm765, 0.0, %v939
        %v941 = vrot.slane %v932, 4
        %v942 = vsel %vm765, 0.0, %v941
        %v943 = vrot.slane %v936, 4
        %v944 = vsel %vm765, 0.0, %v943
        %v945 = vsel %vm765, %v939, %v920
        %v947 = vunpack.c.l.s4 1983009808
        %v948 = vunpack.c.0.s8 %v947
        %v949 = vperm.slane %v945, %v948
        %v950 = vrot.slane %v940, 4
        %v951 = vsel %vm765, %v950, %v938
        %v953 = vunpack.c.l.s4 1983009808
        %v954 = vunpack.c.0.s8 %v953
        %v955 = vperm.slane %v951, %v954
        %v956 = vsel %vm765, %v943, %v932
        %v958 = vunpack.c.l.s4 1983009808
        %v959 = vunpack.c.0.s8 %v958
        %v960 = vperm.slane %v956, %v959
        %v961 = vrot.slane %v944, 4
        %v962 = vsel %vm765, %v961, %v942
        %v964 = vunpack.c.l.s4 1983009808
        %v965 = vunpack.c.0.s8 %v964
        %v966 = vperm.slane %v962, %v965
        %v967 = vrot.slane %v955, 4
        %v968 = vsel %vm765, %v967, %v949
        %v969 = vrot.slane %v949, 4
        %v970 = vsel %vm765, %v955, %v969
        %v972 = vunpack.c.l.s4 1934713408
        %v973 = vunpack.c.0.s8 %v972
        %v974 = vperm.slane %v968, %v973
        %v976 = vunpack.c.l.s4 1934713408
        %v977 = vunpack.c.0.s8 %v976
        %v978 = vperm.slane %v970, %v977
        %v979 = vrot.slane %v966, 4
        %v980 = vsel %vm765, %v979, %v960
        %v981 = vrot.slane %v960, 4
        %v982 = vsel %vm765, %v966, %v981
        %v984 = vunpack.c.l.s4 1934713408
        %v985 = vunpack.c.0.s8 %v984
        %v986 = vperm.slane %v980, %v985
        %v988 = vunpack.c.l.s4 1934713408
        %v989 = vunpack.c.0.s8 %v988
        %v990 = vperm.slane %v982, %v989
        %v991 = vrot.slane %v986, 4
        %v992 = vsel %vm765, %v991, %v974
        %v993 = vrot.slane %v974, 4
        %v994 = vsel %vm765, %v986, %v993
        %v995 = vrot.slane %v990, 4
        %v996 = vsel %vm765, %v995, %v978
        %v997 = vrot.slane %v978, 4
        %v998 = vsel %vm765, %v990, %v997
        %v999 = vpack.c.bf16 %v992, %v992
        %v1000 = vpack.c.bf16 %v994, %v994
        %v1001 = vpack.c.bf16 %v996, %v996
        %v1002 = vpack.c.bf16 %v998, %v998
        %1004 = vrot.lane.b32.xlu0 %v751, 120
        %v1005 = vpop.permute.xlu0 %1004
        %1007 = vrot.lane.b32.xlu0 %v751, 112
        %v1008 = vpop.permute.xlu0 %1007
        %1010 = vrot.lane.b32.xlu0 %v751, 104
        %v1011 = vpop.permute.xlu0 %1010
        %v1013 = vrot.slane %v1008, 4
        %v1014 = vsel %vm765, %v1013, %v751
        %v1015 = vrot.slane %v751, 4
        %v1016 = vsel %vm765, %v1008, %v1015
        %v1018 = vunpack.c.l.s4 1983009808
        %v1019 = vunpack.c.0.s8 %v1018
        %v1020 = vperm.slane %v1014, %v1019
        %v1022 = vunpack.c.l.s4 1983009808
        %v1023 = vunpack.c.0.s8 %v1022
        %v1024 = vperm.slane %v1016, %v1023
        %v1025 = vrot.slane %v1011, 4
        %v1026 = vsel %vm765, %v1025, %v1005
        %v1027 = vrot.slane %v1005, 4
        %v1028 = vsel %vm765, %v1011, %v1027
        %v1030 = vunpack.c.l.s4 1983009808
        %v1031 = vunpack.c.0.s8 %v1030
        %v1032 = vperm.slane %v1026, %v1031
        %v1034 = vunpack.c.l.s4 1983009808
        %v1035 = vunpack.c.0.s8 %v1034
        %v1036 = vperm.slane %v1028, %v1035
        %v1037 = vrot.slane %v1032, 4
        %v1038 = vsel %vm765, %v1037, %v1020
        %v1039 = vrot.slane %v1020, 4
        %v1040 = vsel %vm765, %v1032, %v1039
        %v1042 = vunpack.c.l.s4 1934713408
        %v1043 = vunpack.c.0.s8 %v1042
        %v1044 = vperm.slane %v1038, %v1043
        %v1046 = vunpack.c.l.s4 1934713408
        %v1047 = vunpack.c.0.s8 %v1046
        %v1048 = vperm.slane %v1040, %v1047
        %v1049 = vrot.slane %v1036, 4
        %v1050 = vsel %vm765, %v1049, %v1024
        %v1051 = vrot.slane %v1024, 4
        %v1052 = vsel %vm765, %v1036, %v1051
        %v1054 = vunpack.c.l.s4 1934713408
        %v1055 = vunpack.c.0.s8 %v1054
        %v1056 = vperm.slane %v1050, %v1055
        %v1058 = vunpack.c.l.s4 1934713408
        %v1059 = vunpack.c.0.s8 %v1058
        %v1060 = vperm.slane %v1052, %v1059
        %v1061 = vrot.slane %v1044, 4
        %v1062 = vsel %vm765, 0.0, %v1061
        %v1063 = vrot.slane %v1048, 4
        %v1064 = vsel %vm765, 0.0, %v1063
        %v1065 = vrot.slane %v1056, 4
        %v1066 = vsel %vm765, 0.0, %v1065
        %v1067 = vrot.slane %v1060, 4
        %v1068 = vsel %vm765, 0.0, %v1067
        %v1069 = vsel %vm765, %v1063, %v1044
        %v1071 = vunpack.c.l.s4 1983009808
        %v1072 = vunpack.c.0.s8 %v1071
        %v1073 = vperm.slane %v1069, %v1072
        %v1074 = vrot.slane %v1064, 4
        %v1075 = vsel %vm765, %v1074, %v1062
        %v1077 = vunpack.c.l.s4 1983009808
        %v1078 = vunpack.c.0.s8 %v1077
        %v1079 = vperm.slane %v1075, %v1078
        %v1080 = vsel %vm765, %v1067, %v1056
        %v1082 = vunpack.c.l.s4 1983009808
        %v1083 = vunpack.c.0.s8 %v1082
        %v1084 = vperm.slane %v1080, %v1083
        %v1085 = vrot.slane %v1068, 4
        %v1086 = vsel %vm765, %v1085, %v1066
        %v1088 = vunpack.c.l.s4 1983009808
        %v1089 = vunpack.c.0.s8 %v1088
        %v1090 = vperm.slane %v1086, %v1089
        %v1091 = vrot.slane %v1079, 4
        %v1092 = vsel %vm765, %v1091, %v1073
        %v1093 = vrot.slane %v1073, 4
        %v1094 = vsel %vm765, %v1079, %v1093
        %v1096 = vunpack.c.l.s4 1934713408
        %v1097 = vunpack.c.0.s8 %v1096
        %v1098 = vperm.slane %v1092, %v1097
        %v1100 = vunpack.c.l.s4 1934713408
        %v1101 = vunpack.c.0.s8 %v1100
        %v1102 = vperm.slane %v1094, %v1101
        %v1103 = vrot.slane %v1090, 4
        %v1104 = vsel %vm765, %v1103, %v1084
        %v1105 = vrot.slane %v1084, 4
        %v1106 = vsel %vm765, %v1090, %v1105
        %v1108 = vunpack.c.l.s4 1934713408
        %v1109 = vunpack.c.0.s8 %v1108
        %v1110 = vperm.slane %v1104, %v1109
        %v1112 = vunpack.c.l.s4 1934713408
        %v1113 = vunpack.c.0.s8 %v1112
        %v1114 = vperm.slane %v1106, %v1113
        %v1115 = vrot.slane %v1110, 4
        %v1116 = vsel %vm765, %v1115, %v1098
        %v1117 = vrot.slane %v1098, 4
        %v1118 = vsel %vm765, %v1110, %v1117
        %v1119 = vrot.slane %v1114, 4
        %v1120 = vsel %vm765, %v1119, %v1102
        %v1121 = vrot.slane %v1102, 4
        %v1122 = vsel %vm765, %v1114, %v1121
        %v1123 = vpack.c.bf16 %v1116, %v1116
        %v1124 = vpack.c.bf16 %v1118, %v1118
        %v1125 = vpack.c.bf16 %v1120, %v1120
        %v1126 = vpack.c.bf16 %v1122, %v1122
        %vm1127 = vcmask 64512
        %v1129 = vsel %vm1127, %v875, 0
        %v1132 = vsel %vm1127, %v999, 0
        %1134 = vmatpush.bf16.xpose.msra.mxu0 0
        %1135 = vmatpush.bf16.xpose.msra.mxu0 0
        %1136 = vmatpush.bf16.xpose.msra.mxu0 0
        %1137 = vmatpush.bf16.xpose.msra.mxu0 0
        %1138 = vmatpush.bf16.xpose.msra.mxu0 0
        %1139 = vmatpush.bf16.xpose.msra.mxu0 0
        %1140 = vmatpush.bf16.xpose.msra.mxu0 0
        %1141 = vmatpush.bf16.xpose.msra.mxu0 %v1132
        %1142 = vmatmul.bf16.gmra.mxu0 %v1129
        %v1143 = vpop.f32.mrf.mxu0
        %v1144 = vadd.f32 0.0, %v1143
        %v1145 = vpop.f32.mrf.mxu0
        %1146 = vdwg.mxu0
        %v1148 = vsel %vm1127, %v876, 0
        %v1151 = vsel %vm1127, %v1000, 0
        %1153 = vmatpush.bf16.xpose.msra.mxu0 0
        %1154 = vmatpush.bf16.xpose.msra.mxu0 0
        %1155 = vmatpush.bf16.xpose.msra.mxu0 0
        %1156 = vmatpush.bf16.xpose.msra.mxu0 0
        %1157 = vmatpush.bf16.xpose.msra.mxu0 0
        %1158 = vmatpush.bf16.xpose.msra.mxu0 0
        %1159 = vmatpush.bf16.xpose.msra.mxu0 0
        %1160 = vmatpush.bf16.xpose.msra.mxu0 %v1151
        %1161 = vmatmul.bf16.gmra.mxu0 %v1148
        %v1162 = vpop.f32.mrf.mxu0
        %v1163 = vadd.f32 0.0, %v1162
        %v1164 = vpop.f32.mrf.mxu0
        %1165 = vdwg.mxu0
        %v1167 = vsel %vm1127, %v877, 0
        %v1170 = vsel %vm1127, %v1001, 0
        %1172 = vmatpush.bf16.xpose.msra.mxu0 0
        %1173 = vmatpush.bf16.xpose.msra.mxu0 0
        %1174 = vmatpush.bf16.xpose.msra.mxu0 0
        %1175 = vmatpush.bf16.xpose.msra.mxu0 0
        %1176 = vmatpush.bf16.xpose.msra.mxu0 0
        %1177 = vmatpush.bf16.xpose.msra.mxu0 0
        %1178 = vmatpush.bf16.xpose.msra.mxu0 0
        %1179 = vmatpush.bf16.xpose.msra.mxu0 %v1170
        %1180 = vmatmul.bf16.gmra.mxu0 %v1167
        %v1181 = vpop.f32.mrf.mxu0
        %v1182 = vadd.f32 0.0, %v1181
        %v1183 = vpop.f32.mrf.mxu0
        %1184 = vdwg.mxu0
        %v1186 = vsel %vm1127, %v878, 0
        %v1189 = vsel %vm1127, %v1002, 0
        %1191 = vmatpush.bf16.xpose.msra.mxu0 0
        %1192 = vmatpush.bf16.xpose.msra.mxu0 0
        %1193 = vmatpush.bf16.xpose.msra.mxu0 0
        %1194 = vmatpush.bf16.xpose.msra.mxu0 0
        %1195 = vmatpush.bf16.xpose.msra.mxu0 0
        %1196 = vmatpush.bf16.xpose.msra.mxu0 0
        %1197 = vmatpush.bf16.xpose.msra.mxu0 0
        %1198 = vmatpush.bf16.xpose.msra.mxu0 %v1189
        %1199 = vmatmul.bf16.gmra.mxu0 %v1186
        %v1200 = vpop.f32.mrf.mxu0
        %v1201 = vadd.f32 0.0, %v1200
        %v1202 = vpop.f32.mrf.mxu0
        %1203 = vdwg.mxu0
        %v1204 = vsel %vm1127, %v1144, -inf
        %1205 = vmax.xlane.f32.xlu0 %v1204
        %v1206 = vpop.xlane.xlu0 %1205
        %v1207 = vsel %vm1127, %v1163, -inf
        %1208 = vmax.xlane.f32.xlu0 %v1207
        %v1209 = vpop.xlane.xlu0 %1208
        %v1210 = vsel %vm1127, %v1182, -inf
        %1211 = vmax.xlane.f32.xlu0 %v1210
        %v1212 = vpop.xlane.xlu0 %1211
        %v1213 = vsel %vm1127, %v1201, -inf
        %1214 = vmax.xlane.f32.xlu0 %v1213
        %v1215 = vpop.xlane.xlu0 %1214
        %v1216 = vsub.f32 %v1144, %v1206
        %v1217 = vsub.f32 %v1163, %v1209
        %v1218 = vsub.f32 %v1182, %v1212
        %v1219 = vsub.f32 %v1201, %v1215
        %v1220 = vmul.f32 %v1216, 1.442695
        %v1221 = vpow.pop %v1220
        %v1222 = vmul.f32 %v1217, 1.442695
        %v1223 = vpow.pop %v1222
        %v1224 = vmul.f32 %v1218, 1.442695
        %v1225 = vpow.pop %v1224
        %v1226 = vmul.f32 %v1219, 1.442695
        %v1227 = vpow.pop %v1226
        %v1228 = vsel %vm1127, %v1221, 0.0
        %1229 = vadd.xlane.f32.xlu0 %v1228
        %v1230 = vpop.xlane.xlu0 %1229
        %v1231 = vsel %vm1127, %v1223, 0.0
        %1232 = vadd.xlane.f32.xlu0 %v1231
        %v1233 = vpop.xlane.xlu0 %1232
        %v1234 = vsel %vm1127, %v1225, 0.0
        %1235 = vadd.xlane.f32.xlu0 %v1234
        %v1236 = vpop.xlane.xlu0 %1235
        %v1237 = vsel %vm1127, %v1227, 0.0
        %1238 = vadd.xlane.f32.xlu0 %v1237
        %v1239 = vpop.xlane.xlu0 %1238
        %v1240 = vrcp.pop %v1230
        %v1241 = vrcp.pop %v1233
        %v1242 = vrcp.pop %v1236
        %v1243 = vrcp.pop %v1239
        %v1244 = vmul.f32 %v1221, %v1240
        %v1245 = vmul.f32 %v1223, %v1241
        %v1246 = vmul.f32 %v1225, %v1242
        %v1247 = vmul.f32 %v1227, %v1243
        %v1248 = vpack.c.bf16 %v1244, %v1244
        %v1249 = vpack.c.bf16 %v1245, %v1245
        %v1250 = vpack.c.bf16 %v1246, %v1246
        %v1251 = vpack.c.bf16 %v1247, %v1247
        %v1253 = vsel %vm1127, %v1248, 0
        %vm1255 = vcmask 1043456
        %v1257 = vsel %vm1255, %v1123, 0
        %1259 = vmatpush.bf16.msra.mxu0 0
        %1260 = vmatpush.bf16.msra.mxu0 0
        %1261 = vmatpush.bf16.msra.mxu0 0
        %1262 = vmatpush.bf16.msra.mxu0 0
        %1263 = vmatpush.bf16.msra.mxu0 0
        %1264 = vmatpush.bf16.msra.mxu0 0
        %1265 = vmatpush.bf16.msra.mxu0 0
        %1266 = vmatpush.bf16.msra.mxu0 %v1257
        %1267 = vmatmul.bf16.gmra.mxu0 %v1253
        %v1268 = vpop.f32.mrf.mxu0
        %v1269 = vadd.f32 0.0, %v1268
        %v1270 = vpop.f32.mrf.mxu0
        %1271 = vdwg.mxu0
        %v1273 = vsel %vm1127, %v1249, 0
        %v1276 = vsel %vm1255, %v1124, 0
        %1278 = vmatpush.bf16.msra.mxu0 0
        %1279 = vmatpush.bf16.msra.mxu0 0
        %1280 = vmatpush.bf16.msra.mxu0 0
        %1281 = vmatpush.bf16.msra.mxu0 0
        %1282 = vmatpush.bf16.msra.mxu0 0
        %1283 = vmatpush.bf16.msra.mxu0 0
        %1284 = vmatpush.bf16.msra.mxu0 0
        %1285 = vmatpush.bf16.msra.mxu0 %v1276
        %1286 = vmatmul.bf16.gmra.mxu0 %v1273
        %v1287 = vpop.f32.mrf.mxu0
        %v1288 = vadd.f32 0.0, %v1287
        %v1289 = vpop.f32.mrf.mxu0
        %1290 = vdwg.mxu0
        %v1292 = vsel %vm1127, %v1250, 0
        %v1295 = vsel %vm1255, %v1125, 0
        %1297 = vmatpush.bf16.msra.mxu0 0
        %1298 = vmatpush.bf16.msra.mxu0 0
        %1299 = vmatpush.bf16.msra.mxu0 0
        %1300 = vmatpush.bf16.msra.mxu0 0
        %1301 = vmatpush.bf16.msra.mxu0 0
        %1302 = vmatpush.bf16.msra.mxu0 0
        %1303 = vmatpush.bf16.msra.mxu0 0
        %1304 = vmatpush.bf16.msra.mxu0 %v1295
        %1305 = vmatmul.bf16.gmra.mxu0 %v1292
        %v1306 = vpop.f32.mrf.mxu0
        %v1307 = vadd.f32 0.0, %v1306
        %v1308 = vpop.f32.mrf.mxu0
        %1309 = vdwg.mxu0
        %v1311 = vsel %vm1127, %v1251, 0
        %v1314 = vsel %vm1255, %v1126, 0
        %1316 = vmatpush.bf16.msra.mxu0 0
        %1317 = vmatpush.bf16.msra.mxu0 0
        %1318 = vmatpush.bf16.msra.mxu0 0
        %1319 = vmatpush.bf16.msra.mxu0 0
        %1320 = vmatpush.bf16.msra.mxu0 0
        %1321 = vmatpush.bf16.msra.mxu0 0
        %1322 = vmatpush.bf16.msra.mxu0 0
        %1323 = vmatpush.bf16.msra.mxu0 %v1314
        %1324 = vmatmul.bf16.gmra.mxu0 %v1311
        %v1325 = vpop.f32.mrf.mxu0
        %v1326 = vadd.f32 0.0, %v1325
        %v1327 = vpop.f32.mrf.mxu0
        %1328 = vdwg.mxu0
        %v1329 = vrot.slane %v1307, 4
        %v1330 = vsel %vm765, %v1329, %v1269
        %v1331 = vrot.slane %v1269, 4
        %v1332 = vsel %vm765, %v1307, %v1331
        %v1334 = vunpack.c.l.s4 1983009808
        %v1335 = vunpack.c.0.s8 %v1334
        %v1336 = vperm.slane %v1330, %v1335
        %v1338 = vunpack.c.l.s4 1983009808
        %v1339 = vunpack.c.0.s8 %v1338
        %v1340 = vperm.slane %v1332, %v1339
        %v1341 = vrot.slane %v1326, 4
        %v1342 = vsel %vm765, %v1341, %v1288
        %v1343 = vrot.slane %v1288, 4
        %v1344 = vsel %vm765, %v1326, %v1343
        %v1346 = vunpack.c.l.s4 1983009808
        %v1347 = vunpack.c.0.s8 %v1346
        %v1348 = vperm.slane %v1342, %v1347
        %v1350 = vunpack.c.l.s4 1983009808
        %v1351 = vunpack.c.0.s8 %v1350
        %v1352 = vperm.slane %v1344, %v1351
        %v1353 = vrot.slane %v1348, 4
        %v1354 = vsel %vm765, %v1353, %v1336
        %v1355 = vrot.slane %v1336, 4
        %v1356 = vsel %vm765, %v1348, %v1355
        %v1358 = vunpack.c.l.s4 1934713408
        %v1359 = vunpack.c.0.s8 %v1358
        %v1360 = vperm.slane %v1354, %v1359
        %v1362 = vunpack.c.l.s4 1934713408
        %v1363 = vunpack.c.0.s8 %v1362
        %v1364 = vperm.slane %v1356, %v1363
        %v1365 = vrot.slane %v1352, 4
        %v1366 = vsel %vm765, %v1365, %v1340
        %v1367 = vrot.slane %v1340, 4
        %v1368 = vsel %vm765, %v1352, %v1367
        %v1370 = vunpack.c.l.s4 1934713408
        %v1371 = vunpack.c.0.s8 %v1370
        %v1372 = vperm.slane %v1366, %v1371
        %v1374 = vunpack.c.l.s4 1934713408
        %v1375 = vunpack.c.0.s8 %v1374
        %v1376 = vperm.slane %v1368, %v1375
        %v1377 = vrot.slane %v1360, 4
        %v1378 = vsel %vm765, 0.0, %v1377
        %v1379 = vrot.slane %v1364, 4
        %v1380 = vsel %vm765, 0.0, %v1379
        %v1381 = vrot.slane %v1372, 4
        %v1382 = vsel %vm765, 0.0, %v1381
        %v1383 = vrot.slane %v1376, 4
        %v1384 = vsel %vm765, 0.0, %v1383
        %v1385 = vsel %vm765, %v1379, %v1360
        %v1387 = vunpack.c.l.s4 1983009808
        %v1388 = vunpack.c.0.s8 %v1387
        %v1389 = vperm.slane %v1385, %v1388
        %v1390 = vrot.slane %v1380, 4
        %v1391 = vsel %vm765, %v1390, %v1378
        %v1393 = vunpack.c.l.s4 1983009808
        %v1394 = vunpack.c.0.s8 %v1393
        %v1395 = vperm.slane %v1391, %v1394
        %v1396 = vsel %vm765, %v1383, %v1372
        %v1398 = vunpack.c.l.s4 1983009808
        %v1399 = vunpack.c.0.s8 %v1398
        %v1400 = vperm.slane %v1396, %v1399
        %v1401 = vrot.slane %v1384, 4
        %v1402 = vsel %vm765, %v1401, %v1382
        %v1404 = vunpack.c.l.s4 1983009808
        %v1405 = vunpack.c.0.s8 %v1404
        %v1406 = vperm.slane %v1402, %v1405
        %v1407 = vrot.slane %v1395, 4
        %v1408 = vsel %vm765, %v1407, %v1389
        %v1409 = vrot.slane %v1389, 4
        %v1410 = vsel %vm765, %v1395, %v1409
        %v1412 = vunpack.c.l.s4 1934713408
        %v1413 = vunpack.c.0.s8 %v1412
        %v1414 = vperm.slane %v1408, %v1413
        %v1416 = vunpack.c.l.s4 1934713408
        %v1417 = vunpack.c.0.s8 %v1416
        %v1418 = vperm.slane %v1410, %v1417
        %v1419 = vrot.slane %v1406, 4
        %v1420 = vsel %vm765, %v1419, %v1400
        %v1421 = vrot.slane %v1400, 4
        %v1422 = vsel %vm765, %v1406, %v1421
        %v1424 = vunpack.c.l.s4 1934713408
        %v1425 = vunpack.c.0.s8 %v1424
        %v1426 = vperm.slane %v1420, %v1425
        %v1428 = vunpack.c.l.s4 1934713408
        %v1429 = vunpack.c.0.s8 %v1428
        %v1430 = vperm.slane %v1422, %v1429
        %v1431 = vrot.slane %v1426, 4
        %v1432 = vsel %vm765, %v1431, %v1414
        %v1433 = vrot.slane %v1414, 4
        %v1434 = vsel %vm765, %v1426, %v1433
        %v1435 = vrot.slane %v1430, 4
        %v1436 = vsel %vm765, %v1435, %v1418
        %v1437 = vrot.slane %v1418, 4
        %v1438 = vsel %vm765, %v1430, %v1437
        %1440 = vrot.lane.b32.xlu0 %v1434, 8
        %v1441 = vpop.permute.xlu0 %1440
        %1444 = vrot.lane.b32.xlu0 %v1436, 16
        %v1445 = vpop.permute.xlu0 %1444
        %1448 = vrot.lane.b32.xlu0 %v1438, 24
        %v1449 = vpop.permute.xlu0 %1448
        %v1451 = vsel %vm1127, %v1432, %v1441
        %vm1452 = vcmask 130048
        %v1453 = vsel %vm1452, %v1451, %v1445
        %vm1454 = vcmask 195584
        %v1455 = vsel %vm1454, %v1453, %v1449
        %v1456 = vpack.c.bf16 %v1455, %v1455
        %v1457 = vld [vmem:[#allocation7] sm:$0xf]
        %v1458 = vld [vmem:[#allocation7 + $0x4] sm:$0xf]
        %v1459 = vld [vmem:[#allocation7 + $0x8] sm:$0xf]
        %v1460 = vld [vmem:[#allocation7 + $0xc] sm:$0xf]
        %v1461 = vld [vmem:[%s10] sm:$0x1]
        %v1463 = vperm.slane %v1461, 0
        %v1469 = vunpack.c.l.b16 %v1457
        %v1470 = vunpack.c.l.b16 %v1458
        %v1471 = vunpack.c.l.b16 %v1459
        %v1472 = vunpack.c.l.b16 %v1460
        %v1473 = vpack.c.b16 %v1470, %v1469
        %v1474 = vpack.c.b16 %v1472, %v1471
        %v1478 = vsel %vm613, %v1456, 0
        %1480 = vmatpush.bf16.msra.mxu0 0
        %1481 = vmatpush.bf16.msra.mxu0 0
        %1482 = vmatpush.bf16.msra.mxu0 0
        %1483 = vmatpush.bf16.msra.mxu0 0
        %1484 = vmatpush.bf16.msra.mxu0 0
        %1485 = vmatpush.bf16.msra.mxu0 0
        %1486 = vmatpush.bf16.msra.mxu0 %v1474
        %1487 = vmatpush.bf16.msra.mxu0 %v1473
        %1488 = vmatmul.bf16.gmra.mxu0 %v1478
        %v1489 = vpop.f32.mrf.mxu0
        %v1490 = vadd.f32 %v1463, %v1489
        %v1491 = vpop.f32.mrf.mxu0
        %1492 = vdwg.mxu0
        %v1493 = vadd.f32 %v610, %v1490
        %v1494 = vld [vmem:[%s11] sm:$0x1]
        %v1495 = vld [vmem:[%s12] sm:$0x1]
        %v1496 = vsel %vm613, %v1493, 0.0
        %1497 = vadd.xlane.f32.xlu0 %v1496
        %v1498 = vpop.xlane.xlu0 %1497
        %v1499 = vmul.f32 %v1498, %v623
        %v1500 = vsub.f32 %v1493, %v1499
        %v1501 = vmul.f32 %v1500, %v1500
        %v1502 = vsel %vm613, %v1501, 0.0
        %1503 = vadd.xlane.f32.xlu0 %v1502
        %v1504 = vpop.xlane.xlu0 %1503
        %v1505 = vmul.f32 %v1504, %v623
        %v1506 = vadd.f32 %v1505, 1e-05
        %v1507 = vrsqrt.pop %v1506
        %v1508 = vmul.f32 %v1507, %v1506
        %v1509 = vmul.f32 %v1508, %v1507
        %v1510 = vmul.f32 0.5, %v1509
        %v1511 = vsub.f32 1.5, %v1510
        %v1512 = vmul.f32 %v1507, %v1511
        %vm1513 = vweird.f32 %v1506
        %vm1514 = vweird.f32 %v1507
        %vm1515 = vmor %vm1513, %vm1514
        %v1516 = vsel %vm1515, %v1507, %v1512
        %v1517 = vmul.f32 %v1500, %v1516
        %v1519 = vperm.slane %v1494, 0
        %v1521 = vmul.f32 %v1517, %v1519
        %v1523 = vperm.slane %v1495, 0
        %v1525 = vadd.f32 %v1521, %v1523
        %v1526 = vpack.c.bf16 %v1525, %v1525
        %v1527 = vld [vmem:[#allocation8] sm:$0xf]
        %v1528 = vld [vmem:[#allocation8 + $0x4] sm:$0xf]
        %v1529 = vld [vmem:[#allocation8 + $0x8] sm:$0xf]
        %v1530 = vld [vmem:[#allocation8 + $0xc] sm:$0xf]
        %v1531 = vld [vmem:[%s14] sm:$0x1]
        %v1533 = vperm.slane %v1531, 0
        %v1539 = vunpack.c.l.b16 %v1527
        %v1540 = vunpack.c.l.b16 %v1528
        %v1541 = vunpack.c.l.b16 %v1529
        %v1542 = vunpack.c.l.b16 %v1530
        %v1543 = vpack.c.b16 %v1540, %v1539
        %v1544 = vpack.c.b16 %v1542, %v1541
        %v1548 = vsel %vm613, %v1526, 0
        %1550 = vmatpush.bf16.msra.mxu0 0
        %1551 = vmatpush.bf16.msra.mxu0 0
        %1552 = vmatpush.bf16.msra.mxu0 0
        %1553 = vmatpush.bf16.msra.mxu0 0
        %1554 = vmatpush.bf16.msra.mxu0 0
        %1555 = vmatpush.bf16.msra.mxu0 0
        %1556 = vmatpush.bf16.msra.mxu0 %v1544
        %1557 = vmatpush.bf16.msra.mxu0 %v1543
        %1558 = vmatmul.bf16.gmra.mxu0 %v1548
        %v1559 = vpop.f32.mrf.mxu0
        %v1560 = vadd.f32 %v1533, %v1559
        %v1561 = vpop.f32.mrf.mxu0
        %1562 = vdwg.mxu0
        %v1563 = vmax.f32 %v1560, 0.0
        %v1564 = vpack.c.bf16 %v1563, %v1563
        %v1565 = vld [vmem:[%s15] sm:$0xf]
        %v1566 = vld [vmem:[%s15 + $0x4] sm:$0xf]
        %v1567 = vld [vmem:[%s15 + $0x8] sm:$0xf]
        %v1568 = vld [vmem:[%s15 + $0xc] sm:$0xf]
        %v1569 = vld [vmem:[%s15 + $0x10] sm:$0xf]
        %v1570 = vld [vmem:[%s15 + $0x14] sm:$0xf]
        %v1571 = vld [vmem:[%s15 + $0x18] sm:$0xf]
        %v1572 = vld [vmem:[%s15 + $0x1c] sm:$0xf]
        %v1573 = vld [vmem:[%s16] sm:$0x1]
        %v1575 = vperm.slane %v1573, 0
        %v1585 = vunpack.c.l.b16 %v1565
        %v1586 = vunpack.c.l.b16 %v1566
        %v1587 = vunpack.c.l.b16 %v1567
        %v1588 = vunpack.c.l.b16 %v1568
        %v1589 = vunpack.c.l.b16 %v1569
        %v1590 = vunpack.c.l.b16 %v1570
        %v1591 = vunpack.c.l.b16 %v1571
        %v1592 = vunpack.c.l.b16 %v1572
        %v1593 = vpack.c.b16 %v1586, %v1585
        %v1594 = vpack.c.b16 %v1588, %v1587
        %v1595 = vpack.c.b16 %v1590, %v1589
        %v1596 = vpack.c.b16 %v1592, %v1591
        %vm1601 = vcmask 523264
        %v1603 = vsel %vm1601, %v1564, 0
        %1605 = vmatpush.bf16.msra.mxu0 0
        %1606 = vmatpush.bf16.msra.mxu0 0
        %1607 = vmatpush.bf16.msra.mxu0 0
        %1608 = vmatpush.bf16.msra.mxu0 0
        %1609 = vmatpush.bf16.msra.mxu0 %v1596
        %1610 = vmatpush.bf16.msra.mxu0 %v1595
        %1611 = vmatpush.bf16.msra.mxu0 %v1594
        %1612 = vmatpush.bf16.msra.mxu0 %v1593
        %1613 = vmatmul.bf16.gmra.mxu0 %v1603
        %v1614 = vpop.f32.mrf.mxu0
        %v1615 = vadd.f32 %v1575, %v1614
        %v1616 = vpop.f32.mrf.mxu0
        %1617 = vdwg.mxu0
        %v1618 = vadd.f32 %v1493, %v1615
        %1619 = vst.msk [vmem:[%s604] sm:$0xff] %vm613, %v1618
        %s1620 = sand.u32 %s404, 1
        %s1621 = scalar_lea.sflag [#allocation4], %s1620
        %s1622 = sand.u32 %s404, 1
        %s1623 = smul.addr %s1622, 8
        %s1624 = scalar_lea.vmem [#allocation10], %s1623
        // Predicated region
        $region105: #{tpu_custom_call.1} parent=87 // pred_check
          %p1625 = pneg %p414
        $region106: #{tpu_custom_call.1} parent=87 // pred_check_branch
          %1627 = sbr.rel (%p1625) target = $region108
        $region107: #{tpu_custom_call.1} parent=87 // pred_region
          %1629 = vsyncadd %s1621, 0
          %s1630 = smul.addr %s34, 8
          %s1631 = scalar_lea.hbm %s17, %s1630
          %s1633 = sshll.u32 %s1624, 4
          %s1634 = int_to_ptr.vmem [resolvable:$true] %s1633
          %s1635 = sshll.u32 %s1631, 4
          %s1636 = int_to_ptr.hbm [resolvable:$true] %s1635
          %1638 = dma.vmem_to_hbm [thread:$0]  %s1634, 128, %s1636, %s1621
        $region108: #{tpu_custom_call.1} parent=87 // pred_fallthru
          _
      $region88: #{tpu_custom_call.1} parent=5 // pred_fallthru
        _
      %p1639 = scmp.le.s32.totalorder 2, %s29
      // Predicated region
      $region109: #{tpu_custom_call.1} parent=5 // pred_check
        %p1640 = pneg %p1639
      $region110: #{tpu_custom_call.1} parent=5 // pred_check_branch
        %1642 = sbr.rel (%p1640) target = $region112
      $region111: #{tpu_custom_call.1} parent=5 // pred_region
        %s1643 = ssub.s32 %s29, 2
        // Predicated region
        $region113: #{tpu_custom_call.1} parent=111 // pred_check
          %p1644 = pneg %p420
        $region114: #{tpu_custom_call.1} parent=111 // pred_check_branch
          %1646 = sbr.rel (%p1644) target = $region116
        $region115: #{tpu_custom_call.1} parent=111 // pred_region
          %s1647 = sand.u32 %s405, 1
          %s1648 = scalar_lea.sflag [#allocation4], %s1647
          %s1649 = sand.u32 %s405, 1
          %s1650 = smul.addr %s1649, 8
          %s1651 = scalar_lea.vmem [#allocation10], %s1650
          %1653 = dma.done %s1648, 128
        $region116: #{tpu_custom_call.1} parent=111 // pred_fallthru
          _
      $region112: #{tpu_custom_call.1} parent=5 // pred_fallthru
        _
    $region6: #{tpu_custom_call.1} parent=1 // loop_footer
      %s33 = sadd.s32 1, %s29
    $region7: #{tpu_custom_call.1} parent=1 // loop_footer_branch
      %28 = sbr.rel target = $region3
    $region8: #{tpu_custom_call.1} parent=1 // loop_exit
      _
    %1654 = vsyncpa [#allocation3], 1
    %s1655 = scalar_lea.sflag [#allocation3], 1
    %1656 = vsyncpa %s1655, 1
    %1657 = vsyncpa [#allocation6], 1
    %1658 = vsyncpa [#allocation9], 1
    %1659 = vsyncpa [#allocation4], 1
    %s1660 = scalar_lea.sflag [#allocation4], 1
    %1661 = vsyncpa %s1660, 1

</llo_original>
